<compile_context>
chip_gen: v7x
topology: tpu7x:2x2x1
jax: 0.10.0
libtpu: 0.0.40
codegen_flags: <defaults>
</compile_context>

<pallas_src>
import functools

import jax
import jax.numpy as jnp
import numpy as np
from jax.experimental import pallas as pl
from jax.experimental.pallas import tpu as pltpu


def _attention_head_kernel(q_ref, k_ref, v_ref, x_ref, attn_ref, *, scale):
    # Blocks: q (BB, TQ, C), k/v (BB, W, C), x (BB, TQ, C), attn (BB, TQ, W).
    q = q_ref[...]                      # native dtype straight into the MXU
    k = k_ref[...]
    v = v_ref[...]

    # scores: (BB, TQ, W), accumulated in f32 on the MXU.
    s = jnp.einsum("bqd,bkd->bqk", q, k, preferred_element_type=jnp.float32)
    s = s * scale

    # Numerically-stable softmax in f32.
    s = s - jnp.max(s, axis=-1, keepdims=True)
    e = jnp.exp(s)
    denom = jnp.sum(e, axis=-1, keepdims=True)
    inv = pl.reciprocal(denom, approx=True)      # EUP slot (free-ish)
    inv = inv * (2.0 - denom * inv)              # one NR step -> ~f32 accuracy
    p = e * inv

    attn_ref[...] = p.astype(attn_ref.dtype)
    x = jnp.einsum("bqk,bkd->bqd", p.astype(v.dtype), v,
                   preferred_element_type=jnp.float32)
    x_ref[...] = x.astype(x_ref.dtype)


def _pick_block(n, cap, quantum=1):
    """Largest divisor of n that is <= cap (preferring multiples of `quantum`);
    falls back to n (full extent is always a legal block)."""
    if n <= cap:
        return n
    for d in range(cap, 0, -1):
        if n % d == 0 and d % quantum == 0:
            return d
    return n


def attention_head_pallas(q, k, v, *, attn_drop=0.0, block_b=None, block_q=None):
    """AttentionHead.forward: q/k/v (B, W, C) -> (x: (B, W, C), attn: (B, W, W))."""
    assert q.shape == k.shape == v.shape and q.ndim == 3
    B, W, C = q.shape
    scale = float(C) ** (-0.5)

    # TODO(synk): attn_drop > 0 (training-mode nn.Dropout on attn) is omitted;
    # the default attn_drop == 0.0 path (nn.Identity) is implemented exactly.
    del attn_drop

    if block_b is None:
        block_b = _pick_block(B, 8)
    if block_q is None:
        block_q = _pick_block(W, 256, quantum=8)
    assert B % block_b == 0 and W % block_q == 0

    grid = (B // block_b, W // block_q)
    kernel = functools.partial(_attention_head_kernel, scale=scale)

    x, attn = pl.pallas_call(
        kernel,
        out_shape=(
            jax.ShapeDtypeStruct((B, W, C), q.dtype),
            jax.ShapeDtypeStruct((B, W, W), q.dtype),
        ),
        grid=grid,
        in_specs=[
            pl.BlockSpec((block_b, block_q, C), lambda b, qi: (b, qi, 0)),  # q tile
            pl.BlockSpec((block_b, W, C), lambda b, qi: (b, 0, 0)),         # k (resident across qi)
            pl.BlockSpec((block_b, W, C), lambda b, qi: (b, 0, 0)),         # v (resident across qi)
        ],
        out_specs=(
            pl.BlockSpec((block_b, block_q, C), lambda b, qi: (b, qi, 0)),  # x (lane-dense C)
            pl.BlockSpec((block_b, block_q, W), lambda b, qi: (b, qi, 0)),  # attn (lane-dense W)
        ),
        compiler_params=pltpu.CompilerParams(
            dimension_semantics=("parallel", "parallel"),
        ),
    )(q, k, v)
    return x, attn


if __name__ == "__main__":
    # Small but (8,128)-aligned shapes: B=8 batch, W=128 sequence, C=128 head_dim,
    # so both output last dims (C for x, W for attn) are lane-dense.
    B, W, C = 8, 128, 128

    key = jax.random.PRNGKey(0)
    kq, kk, kv = jax.random.split(key, 3)
    q = jax.random.normal(kq, (B, W, C), jnp.float32)
    k = jax.random.normal(kk, (B, W, C), jnp.float32)
    v = jax.random.normal(kv, (B, W, C), jnp.float32)

    x, attn = attention_head_pallas(q, k, v)
    x, attn = jax.block_until_ready((x, attn))

    # Plain-JAX reference (same math as the PyTorch module).
    scale = float(C) ** (-0.5)
    s = jnp.einsum("bqd,bkd->bqk", q, k, preferred_element_type=jnp.float32) * scale
    attn_ref = jax.nn.softmax(s, axis=-1)
    x_ref = jnp.einsum("bqk,bkd->bqd", attn_ref, v, preferred_element_type=jnp.float32)

    assert x.shape == (B, W, C) and attn.shape == (B, W, W)
    # Tolerances cover the approximate-reciprocal (+NR) softmax normalization.
    np.testing.assert_allclose(np.asarray(attn), np.asarray(attn_ref), atol=1e-4, rtol=1e-3)
    np.testing.assert_allclose(np.asarray(x), np.asarray(x_ref), atol=1e-3, rtol=1e-3)
    print("KERNEL_OK")
</pallas_src>

<mosaic_0001>
module attributes {stable_mosaic.version = 11 : i64} {
  func.func @_attention_head_kernel(%arg0: i32, %arg1: i32, %arg2: memref<8x128x128xf32, #tpu.memory_space<vmem>>, %arg3: memref<8x128x128xf32, #tpu.memory_space<vmem>>, %arg4: memref<8x128x128xf32, #tpu.memory_space<vmem>>, %arg5: memref<8x128x128xf32, #tpu.memory_space<vmem>>, %arg6: memref<8x128x128xf32, #tpu.memory_space<vmem>>) attributes {dimension_semantics = [#tpu.dimension_semantics<parallel>, #tpu.dimension_semantics<parallel>], iteration_bounds = array<i64: 1, 1>, scalar_prefetch = 0 : i64, scratch_operands = 0 : i64, tpu.core_type = #tpu.core_type<tc>, window_params = [{transform_indices = @transform_0, window_bounds = array<i64: 8, 128, 128>}, {transform_indices = @transform_1, window_bounds = array<i64: 8, 128, 128>}, {transform_indices = @transform_2, window_bounds = array<i64: 8, 128, 128>}, {transform_indices = @transform_3, window_bounds = array<i64: 8, 128, 128>}, {transform_indices = @transform_4, window_bounds = array<i64: 8, 128, 128>}]} {
    %c0 = arith.constant 0 : index
    %c0_0 = arith.constant 0 : index
    %c0_1 = arith.constant 0 : index
    %0 = vector.load %arg2[%c0, %c0_0, %c0_1] : memref<8x128x128xf32, #tpu.memory_space<vmem>>, vector<8x128x128xf32>
    %c0_2 = arith.constant 0 : index
    %c0_3 = arith.constant 0 : index
    %c0_4 = arith.constant 0 : index
    %1 = vector.load %arg3[%c0_2, %c0_3, %c0_4] : memref<8x128x128xf32, #tpu.memory_space<vmem>>, vector<8x128x128xf32>
    %c0_5 = arith.constant 0 : index
    %c0_6 = arith.constant 0 : index
    %c0_7 = arith.constant 0 : index
    %2 = vector.load %arg4[%c0_5, %c0_6, %c0_7] : memref<8x128x128xf32, #tpu.memory_space<vmem>>, vector<8x128x128xf32>
    "tpu.trace_start"() <{level = 10 : i32, message = "bqd,bkd->bqk"}> : () -> ()
    %cst = arith.constant dense<0.000000e+00> : vector<8x128x128xf32>
    %3 = tpu.matmul %0, %1, %cst {dimension_numbers = #tpu.dot_dimension_numbers<[2], [2], [1], [1], [0, 0, 0, 1, 1, 1], [0], [0]>} : vector<8x128x128xf32>, vector<8x128x128xf32>, vector<8x128x128xf32> -> vector<8x128x128xf32>
    "tpu.trace_stop"() : () -> ()
    %cst_8 = arith.constant 0.0883883461 : f32
    %4 = vector.broadcast %cst_8 : f32 to vector<8x128x128xf32>
    %5 = arith.mulf %3, %4 : vector<8x128x128xf32>
    %cst_9 = arith.constant dense<0xFF800000> : vector<8x128xf32>
    %6 = vector.multi_reduction <maximumf>, %5, %cst_9 [2] : vector<8x128x128xf32> to vector<8x128xf32>
    %7 = vector.shape_cast %6 : vector<8x128xf32> to vector<8x128x1xf32>
    %8 = vector.broadcast %7 : vector<8x128x1xf32> to vector<8x128x128xf32>
    %9 = arith.subf %5, %8 : vector<8x128x128xf32>
    %10 = math.exp %9 : vector<8x128x128xf32>
    %cst_10 = arith.constant dense<0.000000e+00> : vector<8x128xf32>
    %11 = vector.multi_reduction <add>, %10, %cst_10 [2] : vector<8x128x128xf32> to vector<8x128xf32>
    %12 = vector.shape_cast %11 : vector<8x128xf32> to vector<8x128x1xf32>
    %13 = tpu.reciprocal %12 {approx = true} : vector<8x128x1xf32> -> vector<8x128x1xf32>
    %14 = arith.mulf %12, %13 : vector<8x128x1xf32>
    %cst_11 = arith.constant 2.000000e+00 : f32
    %15 = vector.broadcast %cst_11 : f32 to vector<8x128x1xf32>
    %16 = arith.subf %15, %14 : vector<8x128x1xf32>
    %17 = arith.mulf %13, %16 : vector<8x128x1xf32>
    %18 = vector.broadcast %17 : vector<8x128x1xf32> to vector<8x128x128xf32>
    %19 = arith.mulf %10, %18 : vector<8x128x128xf32>
    %c0_12 = arith.constant 0 : index
    %c0_13 = arith.constant 0 : index
    %c0_14 = arith.constant 0 : index
    %20 = vector.load %arg6[%c0_12, %c0_13, %c0_14] : memref<8x128x128xf32, #tpu.memory_space<vmem>>, vector<8x128x128xf32>
    tpu.vector_store %arg6[%c0_12, %c0_13, %c0_14], %19 {strides = array<i32>} : memref<8x128x128xf32, #tpu.memory_space<vmem>>, vector<8x128x128xf32>,
    "tpu.trace_start"() <{level = 10 : i32, message = "bqk,bkd->bqd"}> : () -> ()
    %cst_15 = arith.constant dense<0.000000e+00> : vector<8x128x128xf32>
    %21 = tpu.matmul %19, %2, %cst_15 {dimension_numbers = #tpu.dot_dimension_numbers<[2], [1], [1], [2], [0, 0, 0, 1, 1, 2], [0], [0]>} : vector<8x128x128xf32>, vector<8x128x128xf32>, vector<8x128x128xf32> -> vector<8x128x128xf32>
    "tpu.trace_stop"() : () -> ()
    %c0_16 = arith.constant 0 : index
    %c0_17 = arith.constant 0 : index
    %c0_18 = arith.constant 0 : index
    %22 = vector.load %arg5[%c0_16, %c0_17, %c0_18] : memref<8x128x128xf32, #tpu.memory_space<vmem>>, vector<8x128x128xf32>
    tpu.vector_store %arg5[%c0_16, %c0_17, %c0_18], %21 {strides = array<i32>} : memref<8x128x128xf32, #tpu.memory_space<vmem>>, vector<8x128x128xf32>,
    return
  }
  func.func @transform_0(%arg0: i32, %arg1: i32) -> (i32, i32, i32) {
    %c0_i32 = arith.constant 0 : i32
    %c0_i32_0 = arith.constant 0 : i32
    return %arg0, %arg1, %c0_i32 : i32, i32, i32
  }
  func.func @transform_1(%arg0: i32, %arg1: i32) -> (i32, i32, i32) {
    %c0_i32 = arith.constant 0 : i32
    %c0_i32_0 = arith.constant 0 : i32
    %c0_i32_1 = arith.constant 0 : i32
    return %arg0, %c0_i32, %c0_i32_0 : i32, i32, i32
  }
  func.func @transform_2(%arg0: i32, %arg1: i32) -> (i32, i32, i32) {
    %c0_i32 = arith.constant 0 : i32
    %c0_i32_0 = arith.constant 0 : i32
    %c0_i32_1 = arith.constant 0 : i32
    return %arg0, %c0_i32, %c0_i32_0 : i32, i32, i32
  }
  func.func @transform_3(%arg0: i32, %arg1: i32) -> (i32, i32, i32) {
    %c0_i32 = arith.constant 0 : i32
    %c0_i32_0 = arith.constant 0 : i32
    return %arg0, %arg1, %c0_i32 : i32, i32, i32
  }
  func.func @transform_4(%arg0: i32, %arg1: i32) -> (i32, i32, i32) {
    %c0_i32 = arith.constant 0 : i32
    %c0_i32_0 = arith.constant 0 : i32
    return %arg0, %arg1, %c0_i32 : i32, i32, i32
  }
}

</mosaic_0001>

<llo_original>
// kernel: tpu_custom_call.1
$region0: #{tpu_custom_call.1}
  #allocation0 [shape = 'u32[]', space=smem, size = 0x4, offset = 0x4, fixed_abs, tag = 'smem constant byte address 0x4 - core index']
  #allocation1 [shape = 'u32[144,128]{1,0:T(1,128)}', space=vmem, size = 0x12000, scoped, tag = 'internal scratch']
  %s0 = inlined_call_operand.hbm [shape: f32[8,128,128], index: 0, kind: input, shape index: {}]
  %s1 = inlined_call_operand.hbm [shape: f32[8,128,128], index: 1, kind: input, shape index: {}]
  %s2 = inlined_call_operand.hbm [shape: f32[8,128,128], index: 2, kind: input, shape index: {}]
  %s3 = inlined_call_operand.hbm [shape: f32[8,128,128], index: 3, kind: output, shape index: {0}]
  %s4 = inlined_call_operand.hbm [shape: f32[8,128,128], index: 4, kind: output, shape index: {1}]
  %5 = xla_tuple %s3, %s4
  %s6 = sld [smem:[#allocation0]]
  $region42: #{tpu_custom_call.1} parent=0
    _
  %s8 = ssub.s32 1, %s6
  %s9 = scalar_select 0, %s8, %s6
  $region1: #{tpu_custom_call.1} parent=0
    #allocation2 [shape = 'u8[524288]{0}', space=vmem, size = 0x80000, scoped, tag = 'input window, operand 0, single buffered']
    #allocation3 [shape = 's32[1]{0}', space=sflag, size = 0x4, scoped, tag = 'scoped memory for tpu_custom_call.1']
    #allocation4 [shape = 's32[1]{0}', space=sflag, size = 0x4, scoped, tag = 'scoped memory for tpu_custom_call.1']
    #allocation5 [shape = 'u8[524288]{0}', space=vmem, size = 0x80000, scoped, tag = 'input window, operand 1, single buffered']
    #allocation6 [shape = 's32[1]{0}', space=sflag, size = 0x4, scoped, tag = 'scoped memory for tpu_custom_call.1']
    #allocation7 [shape = 'u8[524288]{0}', space=vmem, size = 0x80000, scoped, tag = 'input window, operand 2, single buffered']
    #allocation8 [shape = 'u8[524288]{0}', space=vmem, size = 0x80000, scoped, tag = 'output window, operand 0, single buffered']
    #allocation9 [shape = 'u8[524288]{0}', space=vmem, size = 0x80000, scoped, tag = 'output window, operand 1, single buffered']
    #allocation10 [shape = 's32[1]{0}', space=sflag, size = 0x4, scoped, tag = 'scoped memory for tpu_custom_call.1']
    %10 = vsyncpa [#allocation3], 0
    %11 = vsyncpa [#allocation6], 0
    %12 = vsyncpa [#allocation4], 0
    %13 = vsyncpa [#allocation10], 0
    // Predicated region
    $region2: #{tpu_custom_call.1} parent=1 // pred_check
      _
    $region3: #{tpu_custom_call.1} parent=1 // pred_check_branch
      %15 = sbr.rel (0) target = $region5
    $region4: #{tpu_custom_call.1} parent=1 // pred_region
      %s17 = ssub.s32 16384, 16384
      %18 = vsyncadd [#allocation3], %s17
      %s19 = sshll.u32 [#allocation2], 4
      %s20 = int_to_ptr.vmem [resolvable:$true] %s19
      %25 = dma.hbm_to_vmem [thread:$0]  %s0, 16384, %s20, [#allocation3], 128, 128, 8
    $region5: #{tpu_custom_call.1} parent=1 // pred_fallthru
      _
    // Predicated region
    $region6: #{tpu_custom_call.1} parent=1 // pred_check
      _
    $region7: #{tpu_custom_call.1} parent=1 // pred_check_branch
      %27 = sbr.rel (0) target = $region9
    $region8: #{tpu_custom_call.1} parent=1 // pred_region
      %s29 = ssub.s32 16384, 16384
      %30 = vsyncadd [#allocation6], %s29
      %s31 = sshll.u32 [#allocation5], 4
      %s32 = int_to_ptr.vmem [resolvable:$true] %s31
      %37 = dma.hbm_to_vmem [thread:$0]  %s1, 16384, %s32, [#allocation6], 128, 128, 8
    $region9: #{tpu_custom_call.1} parent=1 // pred_fallthru
      _
    // Predicated region
    $region10: #{tpu_custom_call.1} parent=1 // pred_check
      _
    $region11: #{tpu_custom_call.1} parent=1 // pred_check_branch
      %39 = sbr.rel (0) target = $region13
    $region12: #{tpu_custom_call.1} parent=1 // pred_region
      %s41 = ssub.s32 16384, 16384
      %42 = vsyncadd [#allocation6], %s41
      %s43 = sshll.u32 [#allocation7], 4
      %s44 = int_to_ptr.vmem [resolvable:$true] %s43
      %49 = dma.hbm_to_vmem [thread:$0]  %s2, 16384, %s44, [#allocation6], 128, 128, 8
    $region13: #{tpu_custom_call.1} parent=1 // pred_fallthru
      _
    // Predicated region
    $region14: #{tpu_custom_call.1} parent=1 // pred_check
      _
    $region15: #{tpu_custom_call.1} parent=1 // pred_check_branch
      %51 = sbr.rel (0) target = $region17
    $region16: #{tpu_custom_call.1} parent=1 // pred_region
      %52 = dma.done [#allocation3], 16384
    $region17: #{tpu_custom_call.1} parent=1 // pred_fallthru
      _
    // Predicated region
    $region18: #{tpu_custom_call.1} parent=1 // pred_check
      _
    $region19: #{tpu_custom_call.1} parent=1 // pred_check_branch
      %54 = sbr.rel (0) target = $region21
    $region20: #{tpu_custom_call.1} parent=1 // pred_region
      %55 = dma.done [#allocation6], 16384
    $region21: #{tpu_custom_call.1} parent=1 // pred_fallthru
      _
    // Predicated region
    $region22: #{tpu_custom_call.1} parent=1 // pred_check
      _
    $region23: #{tpu_custom_call.1} parent=1 // pred_check_branch
      %57 = sbr.rel (0) target = $region25
    $region24: #{tpu_custom_call.1} parent=1 // pred_region
      %58 = dma.done [#allocation6], 16384
    $region25: #{tpu_custom_call.1} parent=1 // pred_fallthru
      _
    %v59 = vld [vmem:[#allocation2] sm:$0xff]
    %v60 = vld [vmem:[#allocation2 + $0x8] sm:$0xff]
    %v61 = vld [vmem:[#allocation2 + $0x10] sm:$0xff]
    %v62 = vld [vmem:[#allocation2 + $0x18] sm:$0xff]
    %v63 = vld [vmem:[#allocation2 + $0x20] sm:$0xff]
    %v64 = vld [vmem:[#allocation2 + $0x28] sm:$0xff]
    %v65 = vld [vmem:[#allocation2 + $0x30] sm:$0xff]
    %v66 = vld [vmem:[#allocation2 + $0x38] sm:$0xff]
    %v67 = vld [vmem:[#allocation2 + $0x40] sm:$0xff]
    %v68 = vld [vmem:[#allocation2 + $0x48] sm:$0xff]
    %v69 = vld [vmem:[#allocation2 + $0x50] sm:$0xff]
    %v70 = vld [vmem:[#allocation2 + $0x58] sm:$0xff]
    %v71 = vld [vmem:[#allocation2 + $0x60] sm:$0xff]
    %v72 = vld [vmem:[#allocation2 + $0x68] sm:$0xff]
    %v73 = vld [vmem:[#allocation2 + $0x70] sm:$0xff]
    %v74 = vld [vmem:[#allocation2 + $0x78] sm:$0xff]
    %v75 = vld [vmem:[#allocation2 + $0x80] sm:$0xff]
    %v76 = vld [vmem:[#allocation2 + $0x88] sm:$0xff]
    %v77 = vld [vmem:[#allocation2 + $0x90] sm:$0xff]
    %v78 = vld [vmem:[#allocation2 + $0x98] sm:$0xff]
    %v79 = vld [vmem:[#allocation2 + $0xa0] sm:$0xff]
    %v80 = vld [vmem:[#allocation2 + $0xa8] sm:$0xff]
    %v81 = vld [vmem:[#allocation2 + $0xb0] sm:$0xff]
    %v82 = vld [vmem:[#allocation2 + $0xb8] sm:$0xff]
    %v83 = vld [vmem:[#allocation2 + $0xc0] sm:$0xff]
    %v84 = vld [vmem:[#allocation2 + $0xc8] sm:$0xff]
    %v85 = vld [vmem:[#allocation2 + $0xd0] sm:$0xff]
    %v86 = vld [vmem:[#allocation2 + $0xd8] sm:$0xff]
    %v87 = vld [vmem:[#allocation2 + $0xe0] sm:$0xff]
    %v88 = vld [vmem:[#allocation2 + $0xe8] sm:$0xff]
    %v89 = vld [vmem:[#allocation2 + $0xf0] sm:$0xff]
    %v90 = vld [vmem:[#allocation2 + $0xf8] sm:$0xff]
    %v91 = vld [vmem:[#allocation2 + $0x100] sm:$0xff]
    %v92 = vld [vmem:[#allocation2 + $0x108] sm:$0xff]
    %v93 = vld [vmem:[#allocation2 + $0x110] sm:$0xff]
    %v94 = vld [vmem:[#allocation2 + $0x118] sm:$0xff]
    %v95 = vld [vmem:[#allocation2 + $0x120] sm:$0xff]
    %v96 = vld [vmem:[#allocation2 + $0x128] sm:$0xff]
    %v97 = vld [vmem:[#allocation2 + $0x130] sm:$0xff]
    %v98 = vld [vmem:[#allocation2 + $0x138] sm:$0xff]
    %v99 = vld [vmem:[#allocation2 + $0x140] sm:$0xff]
    %v100 = vld [vmem:[#allocation2 + $0x148] sm:$0xff]
    %v101 = vld [vmem:[#allocation2 + $0x150] sm:$0xff]
    %v102 = vld [vmem:[#allocation2 + $0x158] sm:$0xff]
    %v103 = vld [vmem:[#allocation2 + $0x160] sm:$0xff]
    %v104 = vld [vmem:[#allocation2 + $0x168] sm:$0xff]
    %v105 = vld [vmem:[#allocation2 + $0x170] sm:$0xff]
    %v106 = vld [vmem:[#allocation2 + $0x178] sm:$0xff]
    %v107 = vld [vmem:[#allocation2 + $0x180] sm:$0xff]
    %v108 = vld [vmem:[#allocation2 + $0x188] sm:$0xff]
    %v109 = vld [vmem:[#allocation2 + $0x190] sm:$0xff]
    %v110 = vld [vmem:[#allocation2 + $0x198] sm:$0xff]
    %v111 = vld [vmem:[#allocation2 + $0x1a0] sm:$0xff]
    %v112 = vld [vmem:[#allocation2 + $0x1a8] sm:$0xff]
    %v113 = vld [vmem:[#allocation2 + $0x1b0] sm:$0xff]
    %v114 = vld [vmem:[#allocation2 + $0x1b8] sm:$0xff]
    %v115 = vld [vmem:[#allocation2 + $0x1c0] sm:$0xff]
    %v116 = vld [vmem:[#allocation2 + $0x1c8] sm:$0xff]
    %v117 = vld [vmem:[#allocation2 + $0x1d0] sm:$0xff]
    %v118 = vld [vmem:[#allocation2 + $0x1d8] sm:$0xff]
    %v119 = vld [vmem:[#allocation2 + $0x1e0] sm:$0xff]
    %v120 = vld [vmem:[#allocation2 + $0x1e8] sm:$0xff]
    %v121 = vld [vmem:[#allocation2 + $0x1f0] sm:$0xff]
    %v122 = vld [vmem:[#allocation2 + $0x1f8] sm:$0xff]
    %v123 = vld [vmem:[#allocation2 + $0x200] sm:$0xff]
    %v124 = vld [vmem:[#allocation2 + $0x208] sm:$0xff]
    %v125 = vld [vmem:[#allocation2 + $0x210] sm:$0xff]
    %v126 = vld [vmem:[#allocation2 + $0x218] sm:$0xff]
    %v127 = vld [vmem:[#allocation2 + $0x220] sm:$0xff]
    %v128 = vld [vmem:[#allocation2 + $0x228] sm:$0xff]
    %v129 = vld [vmem:[#allocation2 + $0x230] sm:$0xff]
    %v130 = vld [vmem:[#allocation2 + $0x238] sm:$0xff]
    %v131 = vld [vmem:[#allocation2 + $0x240] sm:$0xff]
    %v132 = vld [vmem:[#allocation2 + $0x248] sm:$0xff]
    %v133 = vld [vmem:[#allocation2 + $0x250] sm:$0xff]
    %v134 = vld [vmem:[#allocation2 + $0x258] sm:$0xff]
    %v135 = vld [vmem:[#allocation2 + $0x260] sm:$0xff]
    %v136 = vld [vmem:[#allocation2 + $0x268] sm:$0xff]
    %v137 = vld [vmem:[#allocation2 + $0x270] sm:$0xff]
    %v138 = vld [vmem:[#allocation2 + $0x278] sm:$0xff]
    %v139 = vld [vmem:[#allocation2 + $0x280] sm:$0xff]
    %v140 = vld [vmem:[#allocation2 + $0x288] sm:$0xff]
    %v141 = vld [vmem:[#allocation2 + $0x290] sm:$0xff]
    %v142 = vld [vmem:[#allocation2 + $0x298] sm:$0xff]
    %v143 = vld [vmem:[#allocation2 + $0x2a0] sm:$0xff]
    %v144 = vld [vmem:[#allocation2 + $0x2a8] sm:$0xff]
    %v145 = vld [vmem:[#allocation2 + $0x2b0] sm:$0xff]
    %v146 = vld [vmem:[#allocation2 + $0x2b8] sm:$0xff]
    %v147 = vld [vmem:[#allocation2 + $0x2c0] sm:$0xff]
    %v148 = vld [vmem:[#allocation2 + $0x2c8] sm:$0xff]
    %v149 = vld [vmem:[#allocation2 + $0x2d0] sm:$0xff]
    %v150 = vld [vmem:[#allocation2 + $0x2d8] sm:$0xff]
    %v151 = vld [vmem:[#allocation2 + $0x2e0] sm:$0xff]
    %v152 = vld [vmem:[#allocation2 + $0x2e8] sm:$0xff]
    %v153 = vld [vmem:[#allocation2 + $0x2f0] sm:$0xff]
    %v154 = vld [vmem:[#allocation2 + $0x2f8] sm:$0xff]
    %v155 = vld [vmem:[#allocation2 + $0x300] sm:$0xff]
    %v156 = vld [vmem:[#allocation2 + $0x308] sm:$0xff]
    %v157 = vld [vmem:[#allocation2 + $0x310] sm:$0xff]
    %v158 = vld [vmem:[#allocation2 + $0x318] sm:$0xff]
    %v159 = vld [vmem:[#allocation2 + $0x320] sm:$0xff]
    %v160 = vld [vmem:[#allocation2 + $0x328] sm:$0xff]
    %v161 = vld [vmem:[#allocation2 + $0x330] sm:$0xff]
    %v162 = vld [vmem:[#allocation2 + $0x338] sm:$0xff]
    %v163 = vld [vmem:[#allocation2 + $0x340] sm:$0xff]
    %v164 = vld [vmem:[#allocation2 + $0x348] sm:$0xff]
    %v165 = vld [vmem:[#allocation2 + $0x350] sm:$0xff]
    %v166 = vld [vmem:[#allocation2 + $0x358] sm:$0xff]
    %v167 = vld [vmem:[#allocation2 + $0x360] sm:$0xff]
    %v168 = vld [vmem:[#allocation2 + $0x368] sm:$0xff]
    %v169 = vld [vmem:[#allocation2 + $0x370] sm:$0xff]
    %v170 = vld [vmem:[#allocation2 + $0x378] sm:$0xff]
    %v171 = vld [vmem:[#allocation2 + $0x380] sm:$0xff]
    %v172 = vld [vmem:[#allocation2 + $0x388] sm:$0xff]
    %v173 = vld [vmem:[#allocation2 + $0x390] sm:$0xff]
    %v174 = vld [vmem:[#allocation2 + $0x398] sm:$0xff]
    %v175 = vld [vmem:[#allocation2 + $0x3a0] sm:$0xff]
    %v176 = vld [vmem:[#allocation2 + $0x3a8] sm:$0xff]
    %v177 = vld [vmem:[#allocation2 + $0x3b0] sm:$0xff]
    %v178 = vld [vmem:[#allocation2 + $0x3b8] sm:$0xff]
    %v179 = vld [vmem:[#allocation2 + $0x3c0] sm:$0xff]
    %v180 = vld [vmem:[#allocation2 + $0x3c8] sm:$0xff]
    %v181 = vld [vmem:[#allocation2 + $0x3d0] sm:$0xff]
    %v182 = vld [vmem:[#allocation2 + $0x3d8] sm:$0xff]
    %v183 = vld [vmem:[#allocation2 + $0x3e0] sm:$0xff]
    %v184 = vld [vmem:[#allocation2 + $0x3e8] sm:$0xff]
    %v185 = vld [vmem:[#allocation2 + $0x3f0] sm:$0xff]
    %v186 = vld [vmem:[#allocation2 + $0x3f8] sm:$0xff]
    %v187 = vld [vmem:[#allocation5] sm:$0xff]
    %v188 = vld [vmem:[#allocation5 + $0x8] sm:$0xff]
    %v189 = vld [vmem:[#allocation5 + $0x10] sm:$0xff]
    %v190 = vld [vmem:[#allocation5 + $0x18] sm:$0xff]
    %v191 = vld [vmem:[#allocation5 + $0x20] sm:$0xff]
    %v192 = vld [vmem:[#allocation5 + $0x28] sm:$0xff]
    %v193 = vld [vmem:[#allocation5 + $0x30] sm:$0xff]
    %v194 = vld [vmem:[#allocation5 + $0x38] sm:$0xff]
    %v195 = vld [vmem:[#allocation5 + $0x40] sm:$0xff]
    %v196 = vld [vmem:[#allocation5 + $0x48] sm:$0xff]
    %v197 = vld [vmem:[#allocation5 + $0x50] sm:$0xff]
    %v198 = vld [vmem:[#allocation5 + $0x58] sm:$0xff]
    %v199 = vld [vmem:[#allocation5 + $0x60] sm:$0xff]
    %v200 = vld [vmem:[#allocation5 + $0x68] sm:$0xff]
    %v201 = vld [vmem:[#allocation5 + $0x70] sm:$0xff]
    %v202 = vld [vmem:[#allocation5 + $0x78] sm:$0xff]
    %v203 = vld [vmem:[#allocation5 + $0x80] sm:$0xff]
    %v204 = vld [vmem:[#allocation5 + $0x88] sm:$0xff]
    %v205 = vld [vmem:[#allocation5 + $0x90] sm:$0xff]
    %v206 = vld [vmem:[#allocation5 + $0x98] sm:$0xff]
    %v207 = vld [vmem:[#allocation5 + $0xa0] sm:$0xff]
    %v208 = vld [vmem:[#allocation5 + $0xa8] sm:$0xff]
    %v209 = vld [vmem:[#allocation5 + $0xb0] sm:$0xff]
    %v210 = vld [vmem:[#allocation5 + $0xb8] sm:$0xff]
    %v211 = vld [vmem:[#allocation5 + $0xc0] sm:$0xff]
    %v212 = vld [vmem:[#allocation5 + $0xc8] sm:$0xff]
    %v213 = vld [vmem:[#allocation5 + $0xd0] sm:$0xff]
    %v214 = vld [vmem:[#allocation5 + $0xd8] sm:$0xff]
    %v215 = vld [vmem:[#allocation5 + $0xe0] sm:$0xff]
    %v216 = vld [vmem:[#allocation5 + $0xe8] sm:$0xff]
    %v217 = vld [vmem:[#allocation5 + $0xf0] sm:$0xff]
    %v218 = vld [vmem:[#allocation5 + $0xf8] sm:$0xff]
    %v219 = vld [vmem:[#allocation5 + $0x100] sm:$0xff]
    %v220 = vld [vmem:[#allocation5 + $0x108] sm:$0xff]
    %v221 = vld [vmem:[#allocation5 + $0x110] sm:$0xff]
    %v222 = vld [vmem:[#allocation5 + $0x118] sm:$0xff]
    %v223 = vld [vmem:[#allocation5 + $0x120] sm:$0xff]
    %v224 = vld [vmem:[#allocation5 + $0x128] sm:$0xff]
    %v225 = vld [vmem:[#allocation5 + $0x130] sm:$0xff]
    %v226 = vld [vmem:[#allocation5 + $0x138] sm:$0xff]
    %v227 = vld [vmem:[#allocation5 + $0x140] sm:$0xff]
    %v228 = vld [vmem:[#allocation5 + $0x148] sm:$0xff]
    %v229 = vld [vmem:[#allocation5 + $0x150] sm:$0xff]
    %v230 = vld [vmem:[#allocation5 + $0x158] sm:$0xff]
    %v231 = vld [vmem:[#allocation5 + $0x160] sm:$0xff]
    %v232 = vld [vmem:[#allocation5 + $0x168] sm:$0xff]
    %v233 = vld [vmem:[#allocation5 + $0x170] sm:$0xff]
    %v234 = vld [vmem:[#allocation5 + $0x178] sm:$0xff]
    %v235 = vld [vmem:[#allocation5 + $0x180] sm:$0xff]
    %v236 = vld [vmem:[#allocation5 + $0x188] sm:$0xff]
    %v237 = vld [vmem:[#allocation5 + $0x190] sm:$0xff]
    %v238 = vld [vmem:[#allocation5 + $0x198] sm:$0xff]
    %v239 = vld [vmem:[#allocation5 + $0x1a0] sm:$0xff]
    %v240 = vld [vmem:[#allocation5 + $0x1a8] sm:$0xff]
    %v241 = vld [vmem:[#allocation5 + $0x1b0] sm:$0xff]
    %v242 = vld [vmem:[#allocation5 + $0x1b8] sm:$0xff]
    %v243 = vld [vmem:[#allocation5 + $0x1c0] sm:$0xff]
    %v244 = vld [vmem:[#allocation5 + $0x1c8] sm:$0xff]
    %v245 = vld [vmem:[#allocation5 + $0x1d0] sm:$0xff]
    %v246 = vld [vmem:[#allocation5 + $0x1d8] sm:$0xff]
    %v247 = vld [vmem:[#allocation5 + $0x1e0] sm:$0xff]
    %v248 = vld [vmem:[#allocation5 + $0x1e8] sm:$0xff]
    %v249 = vld [vmem:[#allocation5 + $0x1f0] sm:$0xff]
    %v250 = vld [vmem:[#allocation5 + $0x1f8] sm:$0xff]
    %v251 = vld [vmem:[#allocation5 + $0x200] sm:$0xff]
    %v252 = vld [vmem:[#allocation5 + $0x208] sm:$0xff]
    %v253 = vld [vmem:[#allocation5 + $0x210] sm:$0xff]
    %v254 = vld [vmem:[#allocation5 + $0x218] sm:$0xff]
    %v255 = vld [vmem:[#allocation5 + $0x220] sm:$0xff]
    %v256 = vld [vmem:[#allocation5 + $0x228] sm:$0xff]
    %v257 = vld [vmem:[#allocation5 + $0x230] sm:$0xff]
    %v258 = vld [vmem:[#allocation5 + $0x238] sm:$0xff]
    %v259 = vld [vmem:[#allocation5 + $0x240] sm:$0xff]
    %v260 = vld [vmem:[#allocation5 + $0x248] sm:$0xff]
    %v261 = vld [vmem:[#allocation5 + $0x250] sm:$0xff]
    %v262 = vld [vmem:[#allocation5 + $0x258] sm:$0xff]
    %v263 = vld [vmem:[#allocation5 + $0x260] sm:$0xff]
    %v264 = vld [vmem:[#allocation5 + $0x268] sm:$0xff]
    %v265 = vld [vmem:[#allocation5 + $0x270] sm:$0xff]
    %v266 = vld [vmem:[#allocation5 + $0x278] sm:$0xff]
    %v267 = vld [vmem:[#allocation5 + $0x280] sm:$0xff]
    %v268 = vld [vmem:[#allocation5 + $0x288] sm:$0xff]
    %v269 = vld [vmem:[#allocation5 + $0x290] sm:$0xff]
    %v270 = vld [vmem:[#allocation5 + $0x298] sm:$0xff]
    %v271 = vld [vmem:[#allocation5 + $0x2a0] sm:$0xff]
    %v272 = vld [vmem:[#allocation5 + $0x2a8] sm:$0xff]
    %v273 = vld [vmem:[#allocation5 + $0x2b0] sm:$0xff]
    %v274 = vld [vmem:[#allocation5 + $0x2b8] sm:$0xff]
    %v275 = vld [vmem:[#allocation5 + $0x2c0] sm:$0xff]
    %v276 = vld [vmem:[#allocation5 + $0x2c8] sm:$0xff]
    %v277 = vld [vmem:[#allocation5 + $0x2d0] sm:$0xff]
    %v278 = vld [vmem:[#allocation5 + $0x2d8] sm:$0xff]
    %v279 = vld [vmem:[#allocation5 + $0x2e0] sm:$0xff]
    %v280 = vld [vmem:[#allocation5 + $0x2e8] sm:$0xff]
    %v281 = vld [vmem:[#allocation5 + $0x2f0] sm:$0xff]
    %v282 = vld [vmem:[#allocation5 + $0x2f8] sm:$0xff]
    %v283 = vld [vmem:[#allocation5 + $0x300] sm:$0xff]
    %v284 = vld [vmem:[#allocation5 + $0x308] sm:$0xff]
    %v285 = vld [vmem:[#allocation5 + $0x310] sm:$0xff]
    %v286 = vld [vmem:[#allocation5 + $0x318] sm:$0xff]
    %v287 = vld [vmem:[#allocation5 + $0x320] sm:$0xff]
    %v288 = vld [vmem:[#allocation5 + $0x328] sm:$0xff]
    %v289 = vld [vmem:[#allocation5 + $0x330] sm:$0xff]
    %v290 = vld [vmem:[#allocation5 + $0x338] sm:$0xff]
    %v291 = vld [vmem:[#allocation5 + $0x340] sm:$0xff]
    %v292 = vld [vmem:[#allocation5 + $0x348] sm:$0xff]
    %v293 = vld [vmem:[#allocation5 + $0x350] sm:$0xff]
    %v294 = vld [vmem:[#allocation5 + $0x358] sm:$0xff]
    %v295 = vld [vmem:[#allocation5 + $0x360] sm:$0xff]
    %v296 = vld [vmem:[#allocation5 + $0x368] sm:$0xff]
    %v297 = vld [vmem:[#allocation5 + $0x370] sm:$0xff]
    %v298 = vld [vmem:[#allocation5 + $0x378] sm:$0xff]
    %v299 = vld [vmem:[#allocation5 + $0x380] sm:$0xff]
    %v300 = vld [vmem:[#allocation5 + $0x388] sm:$0xff]
    %v301 = vld [vmem:[#allocation5 + $0x390] sm:$0xff]
    %v302 = vld [vmem:[#allocation5 + $0x398] sm:$0xff]
    %v303 = vld [vmem:[#allocation5 + $0x3a0] sm:$0xff]
    %v304 = vld [vmem:[#allocation5 + $0x3a8] sm:$0xff]
    %v305 = vld [vmem:[#allocation5 + $0x3b0] sm:$0xff]
    %v306 = vld [vmem:[#allocation5 + $0x3b8] sm:$0xff]
    %v307 = vld [vmem:[#allocation5 + $0x3c0] sm:$0xff]
    %v308 = vld [vmem:[#allocation5 + $0x3c8] sm:$0xff]
    %v309 = vld [vmem:[#allocation5 + $0x3d0] sm:$0xff]
    %v310 = vld [vmem:[#allocation5 + $0x3d8] sm:$0xff]
    %v311 = vld [vmem:[#allocation5 + $0x3e0] sm:$0xff]
    %v312 = vld [vmem:[#allocation5 + $0x3e8] sm:$0xff]
    %v313 = vld [vmem:[#allocation5 + $0x3f0] sm:$0xff]
    %v314 = vld [vmem:[#allocation5 + $0x3f8] sm:$0xff]
    %v315 = vld [vmem:[#allocation7] sm:$0xff]
    %v316 = vld [vmem:[#allocation7 + $0x8] sm:$0xff]
    %v317 = vld [vmem:[#allocation7 + $0x10] sm:$0xff]
    %v318 = vld [vmem:[#allocation7 + $0x18] sm:$0xff]
    %v319 = vld [vmem:[#allocation7 + $0x20] sm:$0xff]
    %v320 = vld [vmem:[#allocation7 + $0x28] sm:$0xff]
    %v321 = vld [vmem:[#allocation7 + $0x30] sm:$0xff]
    %v322 = vld [vmem:[#allocation7 + $0x38] sm:$0xff]
    %v323 = vld [vmem:[#allocation7 + $0x40] sm:$0xff]
    %v324 = vld [vmem:[#allocation7 + $0x48] sm:$0xff]
    %v325 = vld [vmem:[#allocation7 + $0x50] sm:$0xff]
    %v326 = vld [vmem:[#allocation7 + $0x58] sm:$0xff]
    %v327 = vld [vmem:[#allocation7 + $0x60] sm:$0xff]
    %v328 = vld [vmem:[#allocation7 + $0x68] sm:$0xff]
    %v329 = vld [vmem:[#allocation7 + $0x70] sm:$0xff]
    %v330 = vld [vmem:[#allocation7 + $0x78] sm:$0xff]
    %v331 = vld [vmem:[#allocation7 + $0x80] sm:$0xff]
    %v332 = vld [vmem:[#allocation7 + $0x88] sm:$0xff]
    %v333 = vld [vmem:[#allocation7 + $0x90] sm:$0xff]
    %v334 = vld [vmem:[#allocation7 + $0x98] sm:$0xff]
    %v335 = vld [vmem:[#allocation7 + $0xa0] sm:$0xff]
    %v336 = vld [vmem:[#allocation7 + $0xa8] sm:$0xff]
    %v337 = vld [vmem:[#allocation7 + $0xb0] sm:$0xff]
    %v338 = vld [vmem:[#allocation7 + $0xb8] sm:$0xff]
    %v339 = vld [vmem:[#allocation7 + $0xc0] sm:$0xff]
    %v340 = vld [vmem:[#allocation7 + $0xc8] sm:$0xff]
    %v341 = vld [vmem:[#allocation7 + $0xd0] sm:$0xff]
    %v342 = vld [vmem:[#allocation7 + $0xd8] sm:$0xff]
    %v343 = vld [vmem:[#allocation7 + $0xe0] sm:$0xff]
    %v344 = vld [vmem:[#allocation7 + $0xe8] sm:$0xff]
    %v345 = vld [vmem:[#allocation7 + $0xf0] sm:$0xff]
    %v346 = vld [vmem:[#allocation7 + $0xf8] sm:$0xff]
    %v347 = vld [vmem:[#allocation7 + $0x100] sm:$0xff]
    %v348 = vld [vmem:[#allocation7 + $0x108] sm:$0xff]
    %v349 = vld [vmem:[#allocation7 + $0x110] sm:$0xff]
    %v350 = vld [vmem:[#allocation7 + $0x118] sm:$0xff]
    %v351 = vld [vmem:[#allocation7 + $0x120] sm:$0xff]
    %v352 = vld [vmem:[#allocation7 + $0x128] sm:$0xff]
    %v353 = vld [vmem:[#allocation7 + $0x130] sm:$0xff]
    %v354 = vld [vmem:[#allocation7 + $0x138] sm:$0xff]
    %v355 = vld [vmem:[#allocation7 + $0x140] sm:$0xff]
    %v356 = vld [vmem:[#allocation7 + $0x148] sm:$0xff]
    %v357 = vld [vmem:[#allocation7 + $0x150] sm:$0xff]
    %v358 = vld [vmem:[#allocation7 + $0x158] sm:$0xff]
    %v359 = vld [vmem:[#allocation7 + $0x160] sm:$0xff]
    %v360 = vld [vmem:[#allocation7 + $0x168] sm:$0xff]
    %v361 = vld [vmem:[#allocation7 + $0x170] sm:$0xff]
    %v362 = vld [vmem:[#allocation7 + $0x178] sm:$0xff]
    %v363 = vld [vmem:[#allocation7 + $0x180] sm:$0xff]
    %v364 = vld [vmem:[#allocation7 + $0x188] sm:$0xff]
    %v365 = vld [vmem:[#allocation7 + $0x190] sm:$0xff]
    %v366 = vld [vmem:[#allocation7 + $0x198] sm:$0xff]
    %v367 = vld [vmem:[#allocation7 + $0x1a0] sm:$0xff]
    %v368 = vld [vmem:[#allocation7 + $0x1a8] sm:$0xff]
    %v369 = vld [vmem:[#allocation7 + $0x1b0] sm:$0xff]
    %v370 = vld [vmem:[#allocation7 + $0x1b8] sm:$0xff]
    %v371 = vld [vmem:[#allocation7 + $0x1c0] sm:$0xff]
    %v372 = vld [vmem:[#allocation7 + $0x1c8] sm:$0xff]
    %v373 = vld [vmem:[#allocation7 + $0x1d0] sm:$0xff]
    %v374 = vld [vmem:[#allocation7 + $0x1d8] sm:$0xff]
    %v375 = vld [vmem:[#allocation7 + $0x1e0] sm:$0xff]
    %v376 = vld [vmem:[#allocation7 + $0x1e8] sm:$0xff]
    %v377 = vld [vmem:[#allocation7 + $0x1f0] sm:$0xff]
    %v378 = vld [vmem:[#allocation7 + $0x1f8] sm:$0xff]
    %v379 = vld [vmem:[#allocation7 + $0x200] sm:$0xff]
    %v380 = vld [vmem:[#allocation7 + $0x208] sm:$0xff]
    %v381 = vld [vmem:[#allocation7 + $0x210] sm:$0xff]
    %v382 = vld [vmem:[#allocation7 + $0x218] sm:$0xff]
    %v383 = vld [vmem:[#allocation7 + $0x220] sm:$0xff]
    %v384 = vld [vmem:[#allocation7 + $0x228] sm:$0xff]
    %v385 = vld [vmem:[#allocation7 + $0x230] sm:$0xff]
    %v386 = vld [vmem:[#allocation7 + $0x238] sm:$0xff]
    %v387 = vld [vmem:[#allocation7 + $0x240] sm:$0xff]
    %v388 = vld [vmem:[#allocation7 + $0x248] sm:$0xff]
    %v389 = vld [vmem:[#allocation7 + $0x250] sm:$0xff]
    %v390 = vld [vmem:[#allocation7 + $0x258] sm:$0xff]
    %v391 = vld [vmem:[#allocation7 + $0x260] sm:$0xff]
    %v392 = vld [vmem:[#allocation7 + $0x268] sm:$0xff]
    %v393 = vld [vmem:[#allocation7 + $0x270] sm:$0xff]
    %v394 = vld [vmem:[#allocation7 + $0x278] sm:$0xff]
    %v395 = vld [vmem:[#allocation7 + $0x280] sm:$0xff]
    %v396 = vld [vmem:[#allocation7 + $0x288] sm:$0xff]
    %v397 = vld [vmem:[#allocation7 + $0x290] sm:$0xff]
    %v398 = vld [vmem:[#allocation7 + $0x298] sm:$0xff]
    %v399 = vld [vmem:[#allocation7 + $0x2a0] sm:$0xff]
    %v400 = vld [vmem:[#allocation7 + $0x2a8] sm:$0xff]
    %v401 = vld [vmem:[#allocation7 + $0x2b0] sm:$0xff]
    %v402 = vld [vmem:[#allocation7 + $0x2b8] sm:$0xff]
    %v403 = vld [vmem:[#allocation7 + $0x2c0] sm:$0xff]
    %v404 = vld [vmem:[#allocation7 + $0x2c8] sm:$0xff]
    %v405 = vld [vmem:[#allocation7 + $0x2d0] sm:$0xff]
    %v406 = vld [vmem:[#allocation7 + $0x2d8] sm:$0xff]
    %v407 = vld [vmem:[#allocation7 + $0x2e0] sm:$0xff]
    %v408 = vld [vmem:[#allocation7 + $0x2e8] sm:$0xff]
    %v409 = vld [vmem:[#allocation7 + $0x2f0] sm:$0xff]
    %v410 = vld [vmem:[#allocation7 + $0x2f8] sm:$0xff]
    %v411 = vld [vmem:[#allocation7 + $0x300] sm:$0xff]
    %v412 = vld [vmem:[#allocation7 + $0x308] sm:$0xff]
    %v413 = vld [vmem:[#allocation7 + $0x310] sm:$0xff]
    %v414 = vld [vmem:[#allocation7 + $0x318] sm:$0xff]
    %v415 = vld [vmem:[#allocation7 + $0x320] sm:$0xff]
    %v416 = vld [vmem:[#allocation7 + $0x328] sm:$0xff]
    %v417 = vld [vmem:[#allocation7 + $0x330] sm:$0xff]
    %v418 = vld [vmem:[#allocation7 + $0x338] sm:$0xff]
    %v419 = vld [vmem:[#allocation7 + $0x340] sm:$0xff]
    %v420 = vld [vmem:[#allocation7 + $0x348] sm:$0xff]
    %v421 = vld [vmem:[#allocation7 + $0x350] sm:$0xff]
    %v422 = vld [vmem:[#allocation7 + $0x358] sm:$0xff]
    %v423 = vld [vmem:[#allocation7 + $0x360] sm:$0xff]
    %v424 = vld [vmem:[#allocation7 + $0x368] sm:$0xff]
    %v425 = vld [vmem:[#allocation7 + $0x370] sm:$0xff]
    %v426 = vld [vmem:[#allocation7 + $0x378] sm:$0xff]
    %v427 = vld [vmem:[#allocation7 + $0x380] sm:$0xff]
    %v428 = vld [vmem:[#allocation7 + $0x388] sm:$0xff]
    %v429 = vld [vmem:[#allocation7 + $0x390] sm:$0xff]
    %v430 = vld [vmem:[#allocation7 + $0x398] sm:$0xff]
    %v431 = vld [vmem:[#allocation7 + $0x3a0] sm:$0xff]
    %v432 = vld [vmem:[#allocation7 + $0x3a8] sm:$0xff]
    %v433 = vld [vmem:[#allocation7 + $0x3b0] sm:$0xff]
    %v434 = vld [vmem:[#allocation7 + $0x3b8] sm:$0xff]
    %v435 = vld [vmem:[#allocation7 + $0x3c0] sm:$0xff]
    %v436 = vld [vmem:[#allocation7 + $0x3c8] sm:$0xff]
    %v437 = vld [vmem:[#allocation7 + $0x3d0] sm:$0xff]
    %v438 = vld [vmem:[#allocation7 + $0x3d8] sm:$0xff]
    %v439 = vld [vmem:[#allocation7 + $0x3e0] sm:$0xff]
    %v440 = vld [vmem:[#allocation7 + $0x3e8] sm:$0xff]
    %v441 = vld [vmem:[#allocation7 + $0x3f0] sm:$0xff]
    %v442 = vld [vmem:[#allocation7 + $0x3f8] sm:$0xff]
    %443 = vmatprep.subr.mxu0 0.0
    %444 = vmatpush1.xpose.msra.mxu0 %v187
    %445 = vmatprep.subr.mxu0 0.0
    %446 = vmatpush1.xpose.msra.mxu0 %v188
    %447 = vmatprep.subr.mxu0 0.0
    %448 = vmatpush1.xpose.msra.mxu0 %v189
    %449 = vmatprep.subr.mxu0 0.0
    %450 = vmatpush1.xpose.msra.mxu0 %v190
    %451 = vmatprep.subr.mxu0 0.0
    %452 = vmatpush1.xpose.msra.mxu0 %v191
    %453 = vmatprep.subr.mxu0 0.0
    %454 = vmatpush1.xpose.msra.mxu0 %v192
    %455 = vmatprep.subr.mxu0 0.0
    %456 = vmatpush1.xpose.msra.mxu0 %v193
    %457 = vmatprep.subr.mxu0 0.0
    %458 = vmatpush1.xpose.msra.mxu0 %v194
    %459 = vmatprep.subr.mxu0 0.0
    %460 = vmatpush1.xpose.msra.mxu0 %v195
    %461 = vmatprep.subr.mxu0 0.0
    %462 = vmatpush1.xpose.msra.mxu0 %v196
    %463 = vmatprep.subr.mxu0 0.0
    %464 = vmatpush1.xpose.msra.mxu0 %v197
    %465 = vmatprep.subr.mxu0 0.0
    %466 = vmatpush1.xpose.msra.mxu0 %v198
    %467 = vmatprep.subr.mxu0 0.0
    %468 = vmatpush1.xpose.msra.mxu0 %v199
    %469 = vmatprep.subr.mxu0 0.0
    %470 = vmatpush1.xpose.msra.mxu0 %v200
    %471 = vmatprep.subr.mxu0 0.0
    %472 = vmatpush1.xpose.msra.mxu0 %v201
    %473 = vmatprep.subr.mxu0 0.0
    %474 = vmatpush1.xpose.msra.mxu0 %v202
    %475 = vmatprep.subr.mxu0 0.0
    %476 = vmatpush1.xpose.msra.mxu0 0.0
    %477 = vmatprep.subr.mxu0 0.0
    %478 = vmatpush1.xpose.msra.mxu0 0.0
    %479 = vmatprep.subr.mxu0 0.0
    %480 = vmatpush1.xpose.msra.mxu0 0.0
    %481 = vmatprep.subr.mxu0 0.0
    %482 = vmatpush1.xpose.msra.mxu0 0.0
    %483 = vmatprep.subr.mxu0 0.0
    %484 = vmatpush1.xpose.msra.mxu0 0.0
    %485 = vmatprep.subr.mxu0 0.0
    %486 = vmatpush1.xpose.msra.mxu0 0.0
    %487 = vmatprep.subr.mxu0 0.0
    %488 = vmatpush1.xpose.msra.mxu0 0.0
    %489 = vmatprep.subr.mxu0 0.0
    %490 = vmatpush1.xpose.msra.mxu0 0.0
    %491 = vmatprep.subr.mxu0 0.0
    %492 = vmatpush1.xpose.msra.mxu0 0.0
    %493 = vmatprep.subr.mxu0 0.0
    %494 = vmatpush1.xpose.msra.mxu0 0.0
    %495 = vmatprep.subr.mxu0 0.0
    %496 = vmatpush1.xpose.msra.mxu0 0.0
    %497 = vmatprep.subr.mxu0 0.0
    %498 = vmatpush1.xpose.msra.mxu0 0.0
    %499 = vmatprep.subr.mxu0 0.0
    %500 = vmatpush1.xpose.msra.mxu0 0.0
    %501 = vmatprep.subr.mxu0 0.0
    %502 = vmatpush1.xpose.msra.mxu0 0.0
    %503 = vmatprep.subr.mxu0 0.0
    %504 = vmatpush1.xpose.msra.mxu0 0.0
    %505 = vmatprep.subr.mxu0 0.0
    %506 = vmatpush1.xpose.msra.mxu0 0.0
    %507 = vmatprep.mubr.f32.mxu0 0.0
    %508 = vmatmul.mubr.f32.gmra.mrb[0].mxu0 %v59
    %v509 = vpop.f32.mrb[0].mxu0
    %v510 = vadd.f32 0.0, %v509
    %v511 = vpop.f32.mrb[0].mxu0
    %512 = vmatprep.mubr.f32.mxu0 0.0
    %513 = vmatmul.mubr.f32.gmra.mrb[0].mxu0 %v60
    %v514 = vpop.f32.mrb[0].mxu0
    %v515 = vadd.f32 0.0, %v514
    %v516 = vpop.f32.mrb[0].mxu0
    %517 = vmatprep.mubr.f32.mxu0 0.0
    %518 = vmatmul.mubr.f32.gmra.mrb[0].mxu0 %v61
    %v519 = vpop.f32.mrb[0].mxu0
    %v520 = vadd.f32 0.0, %v519
    %v521 = vpop.f32.mrb[0].mxu0
    %522 = vmatprep.mubr.f32.mxu0 0.0
    %523 = vmatmul.mubr.f32.gmra.mrb[0].mxu0 %v62
    %v524 = vpop.f32.mrb[0].mxu0
    %v525 = vadd.f32 0.0, %v524
    %v526 = vpop.f32.mrb[0].mxu0
    %527 = vmatprep.mubr.f32.mxu0 0.0
    %528 = vmatmul.mubr.f32.gmra.mrb[0].mxu0 %v63
    %v529 = vpop.f32.mrb[0].mxu0
    %v530 = vadd.f32 0.0, %v529
    %v531 = vpop.f32.mrb[0].mxu0
    %532 = vmatprep.mubr.f32.mxu0 0.0
    %533 = vmatmul.mubr.f32.gmra.mrb[0].mxu0 %v64
    %v534 = vpop.f32.mrb[0].mxu0
    %v535 = vadd.f32 0.0, %v534
    %v536 = vpop.f32.mrb[0].mxu0
    %537 = vmatprep.mubr.f32.mxu0 0.0
    %538 = vmatmul.mubr.f32.gmra.mrb[0].mxu0 %v65
    %v539 = vpop.f32.mrb[0].mxu0
    %v540 = vadd.f32 0.0, %v539
    %v541 = vpop.f32.mrb[0].mxu0
    %542 = vmatprep.mubr.f32.mxu0 0.0
    %543 = vmatmul.mubr.f32.gmra.mrb[0].mxu0 %v66
    %v544 = vpop.f32.mrb[0].mxu0
    %v545 = vadd.f32 0.0, %v544
    %v546 = vpop.f32.mrb[0].mxu0
    %547 = vmatprep.mubr.f32.mxu0 0.0
    %548 = vmatmul.mubr.f32.gmra.mrb[0].mxu0 %v67
    %v549 = vpop.f32.mrb[0].mxu0
    %v550 = vadd.f32 0.0, %v549
    %v551 = vpop.f32.mrb[0].mxu0
    %552 = vmatprep.mubr.f32.mxu0 0.0
    %553 = vmatmul.mubr.f32.gmra.mrb[0].mxu0 %v68
    %v554 = vpop.f32.mrb[0].mxu0
    %v555 = vadd.f32 0.0, %v554
    %v556 = vpop.f32.mrb[0].mxu0
    %557 = vmatprep.mubr.f32.mxu0 0.0
    %558 = vmatmul.mubr.f32.gmra.mrb[0].mxu0 %v69
    %v559 = vpop.f32.mrb[0].mxu0
    %v560 = vadd.f32 0.0, %v559
    %v561 = vpop.f32.mrb[0].mxu0
    %562 = vmatprep.mubr.f32.mxu0 0.0
    %563 = vmatmul.mubr.f32.gmra.mrb[0].mxu0 %v70
    %v564 = vpop.f32.mrb[0].mxu0
    %v565 = vadd.f32 0.0, %v564
    %v566 = vpop.f32.mrb[0].mxu0
    %567 = vmatprep.mubr.f32.mxu0 0.0
    %568 = vmatmul.mubr.f32.gmra.mrb[0].mxu0 %v71
    %v569 = vpop.f32.mrb[0].mxu0
    %v570 = vadd.f32 0.0, %v569
    %v571 = vpop.f32.mrb[0].mxu0
    %572 = vmatprep.mubr.f32.mxu0 0.0
    %573 = vmatmul.mubr.f32.gmra.mrb[0].mxu0 %v72
    %v574 = vpop.f32.mrb[0].mxu0
    %v575 = vadd.f32 0.0, %v574
    %v576 = vpop.f32.mrb[0].mxu0
    %577 = vmatprep.mubr.f32.mxu0 0.0
    %578 = vmatmul.mubr.f32.gmra.mrb[0].mxu0 %v73
    %v579 = vpop.f32.mrb[0].mxu0
    %v580 = vadd.f32 0.0, %v579
    %v581 = vpop.f32.mrb[0].mxu0
    %582 = vmatprep.mubr.f32.mxu0 0.0
    %583 = vmatmul.mubr.f32.gmra.mrb[0].mxu0 %v74
    %v584 = vpop.f32.mrb[0].mxu0
    %v585 = vadd.f32 0.0, %v584
    %v586 = vpop.f32.mrb[0].mxu0
    %587 = vdwg.mxu0
    %588 = vmatprep.subr.mxu0 0.0
    %589 = vmatpush1.xpose.msra.mxu0 %v203
    %590 = vmatprep.subr.mxu0 0.0
    %591 = vmatpush1.xpose.msra.mxu0 %v204
    %592 = vmatprep.subr.mxu0 0.0
    %593 = vmatpush1.xpose.msra.mxu0 %v205
    %594 = vmatprep.subr.mxu0 0.0
    %595 = vmatpush1.xpose.msra.mxu0 %v206
    %596 = vmatprep.subr.mxu0 0.0
    %597 = vmatpush1.xpose.msra.mxu0 %v207
    %598 = vmatprep.subr.mxu0 0.0
    %599 = vmatpush1.xpose.msra.mxu0 %v208
    %600 = vmatprep.subr.mxu0 0.0
    %601 = vmatpush1.xpose.msra.mxu0 %v209
    %602 = vmatprep.subr.mxu0 0.0
    %603 = vmatpush1.xpose.msra.mxu0 %v210
    %604 = vmatprep.subr.mxu0 0.0
    %605 = vmatpush1.xpose.msra.mxu0 %v211
    %606 = vmatprep.subr.mxu0 0.0
    %607 = vmatpush1.xpose.msra.mxu0 %v212
    %608 = vmatprep.subr.mxu0 0.0
    %609 = vmatpush1.xpose.msra.mxu0 %v213
    %610 = vmatprep.subr.mxu0 0.0
    %611 = vmatpush1.xpose.msra.mxu0 %v214
    %612 = vmatprep.subr.mxu0 0.0
    %613 = vmatpush1.xpose.msra.mxu0 %v215
    %614 = vmatprep.subr.mxu0 0.0
    %615 = vmatpush1.xpose.msra.mxu0 %v216
    %616 = vmatprep.subr.mxu0 0.0
    %617 = vmatpush1.xpose.msra.mxu0 %v217
    %618 = vmatprep.subr.mxu0 0.0
    %619 = vmatpush1.xpose.msra.mxu0 %v218
    %620 = vmatprep.subr.mxu0 0.0
    %621 = vmatpush1.xpose.msra.mxu0 0.0
    %622 = vmatprep.subr.mxu0 0.0
    %623 = vmatpush1.xpose.msra.mxu0 0.0
    %624 = vmatprep.subr.mxu0 0.0
    %625 = vmatpush1.xpose.msra.mxu0 0.0
    %626 = vmatprep.subr.mxu0 0.0
    %627 = vmatpush1.xpose.msra.mxu0 0.0
    %628 = vmatprep.subr.mxu0 0.0
    %629 = vmatpush1.xpose.msra.mxu0 0.0
    %630 = vmatprep.subr.mxu0 0.0
    %631 = vmatpush1.xpose.msra.mxu0 0.0
    %632 = vmatprep.subr.mxu0 0.0
    %633 = vmatpush1.xpose.msra.mxu0 0.0
    %634 = vmatprep.subr.mxu0 0.0
    %635 = vmatpush1.xpose.msra.mxu0 0.0
    %636 = vmatprep.subr.mxu0 0.0
    %637 = vmatpush1.xpose.msra.mxu0 0.0
    %638 = vmatprep.subr.mxu0 0.0
    %639 = vmatpush1.xpose.msra.mxu0 0.0
    %640 = vmatprep.subr.mxu0 0.0
    %641 = vmatpush1.xpose.msra.mxu0 0.0
    %642 = vmatprep.subr.mxu0 0.0
    %643 = vmatpush1.xpose.msra.mxu0 0.0
    %644 = vmatprep.subr.mxu0 0.0
    %645 = vmatpush1.xpose.msra.mxu0 0.0
    %646 = vmatprep.subr.mxu0 0.0
    %647 = vmatpush1.xpose.msra.mxu0 0.0
    %648 = vmatprep.subr.mxu0 0.0
    %649 = vmatpush1.xpose.msra.mxu0 0.0
    %650 = vmatprep.subr.mxu0 0.0
    %651 = vmatpush1.xpose.msra.mxu0 0.0
    %652 = vmatprep.mubr.f32.mxu0 0.0
    %653 = vmatmul.mubr.f32.gmra.mrb[0].mxu0 %v75
    %v654 = vpop.f32.mrb[0].mxu0
    %v655 = vadd.f32 0.0, %v654
    %v656 = vpop.f32.mrb[0].mxu0
    %657 = vmatprep.mubr.f32.mxu0 0.0
    %658 = vmatmul.mubr.f32.gmra.mrb[0].mxu0 %v76
    %v659 = vpop.f32.mrb[0].mxu0
    %v660 = vadd.f32 0.0, %v659
    %v661 = vpop.f32.mrb[0].mxu0
    %662 = vmatprep.mubr.f32.mxu0 0.0
    %663 = vmatmul.mubr.f32.gmra.mrb[0].mxu0 %v77
    %v664 = vpop.f32.mrb[0].mxu0
    %v665 = vadd.f32 0.0, %v664
    %v666 = vpop.f32.mrb[0].mxu0
    %667 = vmatprep.mubr.f32.mxu0 0.0
    %668 = vmatmul.mubr.f32.gmra.mrb[0].mxu0 %v78
    %v669 = vpop.f32.mrb[0].mxu0
    %v670 = vadd.f32 0.0, %v669
    %v671 = vpop.f32.mrb[0].mxu0
    %672 = vmatprep.mubr.f32.mxu0 0.0
    %673 = vmatmul.mubr.f32.gmra.mrb[0].mxu0 %v79
    %v674 = vpop.f32.mrb[0].mxu0
    %v675 = vadd.f32 0.0, %v674
    %v676 = vpop.f32.mrb[0].mxu0
    %677 = vmatprep.mubr.f32.mxu0 0.0
    %678 = vmatmul.mubr.f32.gmra.mrb[0].mxu0 %v80
    %v679 = vpop.f32.mrb[0].mxu0
    %v680 = vadd.f32 0.0, %v679
    %v681 = vpop.f32.mrb[0].mxu0
    %682 = vmatprep.mubr.f32.mxu0 0.0
    %683 = vmatmul.mubr.f32.gmra.mrb[0].mxu0 %v81
    %v684 = vpop.f32.mrb[0].mxu0
    %v685 = vadd.f32 0.0, %v684
    %v686 = vpop.f32.mrb[0].mxu0
    %687 = vmatprep.mubr.f32.mxu0 0.0
    %688 = vmatmul.mubr.f32.gmra.mrb[0].mxu0 %v82
    %v689 = vpop.f32.mrb[0].mxu0
    %v690 = vadd.f32 0.0, %v689
    %v691 = vpop.f32.mrb[0].mxu0
    %692 = vmatprep.mubr.f32.mxu0 0.0
    %693 = vmatmul.mubr.f32.gmra.mrb[0].mxu0 %v83
    %v694 = vpop.f32.mrb[0].mxu0
    %v695 = vadd.f32 0.0, %v694
    %v696 = vpop.f32.mrb[0].mxu0
    %697 = vmatprep.mubr.f32.mxu0 0.0
    %698 = vmatmul.mubr.f32.gmra.mrb[0].mxu0 %v84
    %v699 = vpop.f32.mrb[0].mxu0
    %v700 = vadd.f32 0.0, %v699
    %v701 = vpop.f32.mrb[0].mxu0
    %702 = vmatprep.mubr.f32.mxu0 0.0
    %703 = vmatmul.mubr.f32.gmra.mrb[0].mxu0 %v85
    %v704 = vpop.f32.mrb[0].mxu0
    %v705 = vadd.f32 0.0, %v704
    %v706 = vpop.f32.mrb[0].mxu0
    %707 = vmatprep.mubr.f32.mxu0 0.0
    %708 = vmatmul.mubr.f32.gmra.mrb[0].mxu0 %v86
    %v709 = vpop.f32.mrb[0].mxu0
    %v710 = vadd.f32 0.0, %v709
    %v711 = vpop.f32.mrb[0].mxu0
    %712 = vmatprep.mubr.f32.mxu0 0.0
    %713 = vmatmul.mubr.f32.gmra.mrb[0].mxu0 %v87
    %v714 = vpop.f32.mrb[0].mxu0
    %v715 = vadd.f32 0.0, %v714
    %v716 = vpop.f32.mrb[0].mxu0
    %717 = vmatprep.mubr.f32.mxu0 0.0
    %718 = vmatmul.mubr.f32.gmra.mrb[0].mxu0 %v88
    %v719 = vpop.f32.mrb[0].mxu0
    %v720 = vadd.f32 0.0, %v719
    %v721 = vpop.f32.mrb[0].mxu0
    %722 = vmatprep.mubr.f32.mxu0 0.0
    %723 = vmatmul.mubr.f32.gmra.mrb[0].mxu0 %v89
    %v724 = vpop.f32.mrb[0].mxu0
    %v725 = vadd.f32 0.0, %v724
    %v726 = vpop.f32.mrb[0].mxu0
    %727 = vmatprep.mubr.f32.mxu0 0.0
    %728 = vmatmul.mubr.f32.gmra.mrb[0].mxu0 %v90
    %v729 = vpop.f32.mrb[0].mxu0
    %v730 = vadd.f32 0.0, %v729
    %v731 = vpop.f32.mrb[0].mxu0
    %732 = vdwg.mxu0
    %733 = vmatprep.subr.mxu0 0.0
    %734 = vmatpush1.xpose.msra.mxu0 %v219
    %735 = vmatprep.subr.mxu0 0.0
    %736 = vmatpush1.xpose.msra.mxu0 %v220
    %737 = vmatprep.subr.mxu0 0.0
    %738 = vmatpush1.xpose.msra.mxu0 %v221
    %739 = vmatprep.subr.mxu0 0.0
    %740 = vmatpush1.xpose.msra.mxu0 %v222
    %741 = vmatprep.subr.mxu0 0.0
    %742 = vmatpush1.xpose.msra.mxu0 %v223
    %743 = vmatprep.subr.mxu0 0.0
    %744 = vmatpush1.xpose.msra.mxu0 %v224
    %745 = vmatprep.subr.mxu0 0.0
    %746 = vmatpush1.xpose.msra.mxu0 %v225
    %747 = vmatprep.subr.mxu0 0.0
    %748 = vmatpush1.xpose.msra.mxu0 %v226
    %749 = vmatprep.subr.mxu0 0.0
    %750 = vmatpush1.xpose.msra.mxu0 %v227
    %751 = vmatprep.subr.mxu0 0.0
    %752 = vmatpush1.xpose.msra.mxu0 %v228
    %753 = vmatprep.subr.mxu0 0.0
    %754 = vmatpush1.xpose.msra.mxu0 %v229
    %755 = vmatprep.subr.mxu0 0.0
    %756 = vmatpush1.xpose.msra.mxu0 %v230
    %757 = vmatprep.subr.mxu0 0.0
    %758 = vmatpush1.xpose.msra.mxu0 %v231
    %759 = vmatprep.subr.mxu0 0.0
    %760 = vmatpush1.xpose.msra.mxu0 %v232
    %761 = vmatprep.subr.mxu0 0.0
    %762 = vmatpush1.xpose.msra.mxu0 %v233
    %763 = vmatprep.subr.mxu0 0.0
    %764 = vmatpush1.xpose.msra.mxu0 %v234
    %765 = vmatprep.subr.mxu0 0.0
    %766 = vmatpush1.xpose.msra.mxu0 0.0
    %767 = vmatprep.subr.mxu0 0.0
    %768 = vmatpush1.xpose.msra.mxu0 0.0
    %769 = vmatprep.subr.mxu0 0.0
    %770 = vmatpush1.xpose.msra.mxu0 0.0
    %771 = vmatprep.subr.mxu0 0.0
    %772 = vmatpush1.xpose.msra.mxu0 0.0
    %773 = vmatprep.subr.mxu0 0.0
    %774 = vmatpush1.xpose.msra.mxu0 0.0
    %775 = vmatprep.subr.mxu0 0.0
    %776 = vmatpush1.xpose.msra.mxu0 0.0
    %777 = vmatprep.subr.mxu0 0.0
    %778 = vmatpush1.xpose.msra.mxu0 0.0
    %779 = vmatprep.subr.mxu0 0.0
    %780 = vmatpush1.xpose.msra.mxu0 0.0
    %781 = vmatprep.subr.mxu0 0.0
    %782 = vmatpush1.xpose.msra.mxu0 0.0
    %783 = vmatprep.subr.mxu0 0.0
    %784 = vmatpush1.xpose.msra.mxu0 0.0
    %785 = vmatprep.subr.mxu0 0.0
    %786 = vmatpush1.xpose.msra.mxu0 0.0
    %787 = vmatprep.subr.mxu0 0.0
    %788 = vmatpush1.xpose.msra.mxu0 0.0
    %789 = vmatprep.subr.mxu0 0.0
    %790 = vmatpush1.xpose.msra.mxu0 0.0
    %791 = vmatprep.subr.mxu0 0.0
    %792 = vmatpush1.xpose.msra.mxu0 0.0
    %793 = vmatprep.subr.mxu0 0.0
    %794 = vmatpush1.xpose.msra.mxu0 0.0
    %795 = vmatprep.subr.mxu0 0.0
    %796 = vmatpush1.xpose.msra.mxu0 0.0
    %797 = vmatprep.mubr.f32.mxu0 0.0
    %798 = vmatmul.mubr.f32.gmra.mrb[0].mxu0 %v91
    %v799 = vpop.f32.mrb[0].mxu0
    %v800 = vadd.f32 0.0, %v799
    %v801 = vpop.f32.mrb[0].mxu0
    %802 = vmatprep.mubr.f32.mxu0 0.0
    %803 = vmatmul.mubr.f32.gmra.mrb[0].mxu0 %v92
    %v804 = vpop.f32.mrb[0].mxu0
    %v805 = vadd.f32 0.0, %v804
    %v806 = vpop.f32.mrb[0].mxu0
    %807 = vmatprep.mubr.f32.mxu0 0.0
    %808 = vmatmul.mubr.f32.gmra.mrb[0].mxu0 %v93
    %v809 = vpop.f32.mrb[0].mxu0
    %v810 = vadd.f32 0.0, %v809
    %v811 = vpop.f32.mrb[0].mxu0
    %812 = vmatprep.mubr.f32.mxu0 0.0
    %813 = vmatmul.mubr.f32.gmra.mrb[0].mxu0 %v94
    %v814 = vpop.f32.mrb[0].mxu0
    %v815 = vadd.f32 0.0, %v814
    %v816 = vpop.f32.mrb[0].mxu0
    %817 = vmatprep.mubr.f32.mxu0 0.0
    %818 = vmatmul.mubr.f32.gmra.mrb[0].mxu0 %v95
    %v819 = vpop.f32.mrb[0].mxu0
    %v820 = vadd.f32 0.0, %v819
    %v821 = vpop.f32.mrb[0].mxu0
    %822 = vmatprep.mubr.f32.mxu0 0.0
    %823 = vmatmul.mubr.f32.gmra.mrb[0].mxu0 %v96
    %v824 = vpop.f32.mrb[0].mxu0
    %v825 = vadd.f32 0.0, %v824
    %v826 = vpop.f32.mrb[0].mxu0
    %827 = vmatprep.mubr.f32.mxu0 0.0
    %828 = vmatmul.mubr.f32.gmra.mrb[0].mxu0 %v97
    %v829 = vpop.f32.mrb[0].mxu0
    %v830 = vadd.f32 0.0, %v829
    %v831 = vpop.f32.mrb[0].mxu0
    %832 = vmatprep.mubr.f32.mxu0 0.0
    %833 = vmatmul.mubr.f32.gmra.mrb[0].mxu0 %v98
    %v834 = vpop.f32.mrb[0].mxu0
    %v835 = vadd.f32 0.0, %v834
    %v836 = vpop.f32.mrb[0].mxu0
    %837 = vmatprep.mubr.f32.mxu0 0.0
    %838 = vmatmul.mubr.f32.gmra.mrb[0].mxu0 %v99
    %v839 = vpop.f32.mrb[0].mxu0
    %v840 = vadd.f32 0.0, %v839
    %v841 = vpop.f32.mrb[0].mxu0
    %842 = vmatprep.mubr.f32.mxu0 0.0
    %843 = vmatmul.mubr.f32.gmra.mrb[0].mxu0 %v100
    %v844 = vpop.f32.mrb[0].mxu0
    %v845 = vadd.f32 0.0, %v844
    %v846 = vpop.f32.mrb[0].mxu0
    %847 = vmatprep.mubr.f32.mxu0 0.0
    %848 = vmatmul.mubr.f32.gmra.mrb[0].mxu0 %v101
    %v849 = vpop.f32.mrb[0].mxu0
    %v850 = vadd.f32 0.0, %v849
    %v851 = vpop.f32.mrb[0].mxu0
    %852 = vmatprep.mubr.f32.mxu0 0.0
    %853 = vmatmul.mubr.f32.gmra.mrb[0].mxu0 %v102
    %v854 = vpop.f32.mrb[0].mxu0
    %v855 = vadd.f32 0.0, %v854
    %v856 = vpop.f32.mrb[0].mxu0
    %857 = vmatprep.mubr.f32.mxu0 0.0
    %858 = vmatmul.mubr.f32.gmra.mrb[0].mxu0 %v103
    %v859 = vpop.f32.mrb[0].mxu0
    %v860 = vadd.f32 0.0, %v859
    %v861 = vpop.f32.mrb[0].mxu0
    %862 = vmatprep.mubr.f32.mxu0 0.0
    %863 = vmatmul.mubr.f32.gmra.mrb[0].mxu0 %v104
    %v864 = vpop.f32.mrb[0].mxu0
    %v865 = vadd.f32 0.0, %v864
    %v866 = vpop.f32.mrb[0].mxu0
    %867 = vmatprep.mubr.f32.mxu0 0.0
    %868 = vmatmul.mubr.f32.gmra.mrb[0].mxu0 %v105
    %v869 = vpop.f32.mrb[0].mxu0
    %v870 = vadd.f32 0.0, %v869
    %v871 = vpop.f32.mrb[0].mxu0
    %872 = vmatprep.mubr.f32.mxu0 0.0
    %873 = vmatmul.mubr.f32.gmra.mrb[0].mxu0 %v106
    %v874 = vpop.f32.mrb[0].mxu0
    %v875 = vadd.f32 0.0, %v874
    %v876 = vpop.f32.mrb[0].mxu0
    %877 = vdwg.mxu0
    %878 = vmatprep.subr.mxu0 0.0
    %879 = vmatpush1.xpose.msra.mxu0 %v235
    %880 = vmatprep.subr.mxu0 0.0
    %881 = vmatpush1.xpose.msra.mxu0 %v236
    %882 = vmatprep.subr.mxu0 0.0
    %883 = vmatpush1.xpose.msra.mxu0 %v237
    %884 = vmatprep.subr.mxu0 0.0
    %885 = vmatpush1.xpose.msra.mxu0 %v238
    %886 = vmatprep.subr.mxu0 0.0
    %887 = vmatpush1.xpose.msra.mxu0 %v239
    %888 = vmatprep.subr.mxu0 0.0
    %889 = vmatpush1.xpose.msra.mxu0 %v240
    %890 = vmatprep.subr.mxu0 0.0
    %891 = vmatpush1.xpose.msra.mxu0 %v241
    %892 = vmatprep.subr.mxu0 0.0
    %893 = vmatpush1.xpose.msra.mxu0 %v242
    %894 = vmatprep.subr.mxu0 0.0
    %895 = vmatpush1.xpose.msra.mxu0 %v243
    %896 = vmatprep.subr.mxu0 0.0
    %897 = vmatpush1.xpose.msra.mxu0 %v244
    %898 = vmatprep.subr.mxu0 0.0
    %899 = vmatpush1.xpose.msra.mxu0 %v245
    %900 = vmatprep.subr.mxu0 0.0
    %901 = vmatpush1.xpose.msra.mxu0 %v246
    %902 = vmatprep.subr.mxu0 0.0
    %903 = vmatpush1.xpose.msra.mxu0 %v247
    %904 = vmatprep.subr.mxu0 0.0
    %905 = vmatpush1.xpose.msra.mxu0 %v248
    %906 = vmatprep.subr.mxu0 0.0
    %907 = vmatpush1.xpose.msra.mxu0 %v249
    %908 = vmatprep.subr.mxu0 0.0
    %909 = vmatpush1.xpose.msra.mxu0 %v250
    %910 = vmatprep.subr.mxu0 0.0
    %911 = vmatpush1.xpose.msra.mxu0 0.0
    %912 = vmatprep.subr.mxu0 0.0
    %913 = vmatpush1.xpose.msra.mxu0 0.0
    %914 = vmatprep.subr.mxu0 0.0
    %915 = vmatpush1.xpose.msra.mxu0 0.0
    %916 = vmatprep.subr.mxu0 0.0
    %917 = vmatpush1.xpose.msra.mxu0 0.0
    %918 = vmatprep.subr.mxu0 0.0
    %919 = vmatpush1.xpose.msra.mxu0 0.0
    %920 = vmatprep.subr.mxu0 0.0
    %921 = vmatpush1.xpose.msra.mxu0 0.0
    %922 = vmatprep.subr.mxu0 0.0
    %923 = vmatpush1.xpose.msra.mxu0 0.0
    %924 = vmatprep.subr.mxu0 0.0
    %925 = vmatpush1.xpose.msra.mxu0 0.0
    %926 = vmatprep.subr.mxu0 0.0
    %927 = vmatpush1.xpose.msra.mxu0 0.0
    %928 = vmatprep.subr.mxu0 0.0
    %929 = vmatpush1.xpose.msra.mxu0 0.0
    %930 = vmatprep.subr.mxu0 0.0
    %931 = vmatpush1.xpose.msra.mxu0 0.0
    %932 = vmatprep.subr.mxu0 0.0
    %933 = vmatpush1.xpose.msra.mxu0 0.0
    %934 = vmatprep.subr.mxu0 0.0
    %935 = vmatpush1.xpose.msra.mxu0 0.0
    %936 = vmatprep.subr.mxu0 0.0
    %937 = vmatpush1.xpose.msra.mxu0 0.0
    %938 = vmatprep.subr.mxu0 0.0
    %939 = vmatpush1.xpose.msra.mxu0 0.0
    %940 = vmatprep.subr.mxu0 0.0
    %941 = vmatpush1.xpose.msra.mxu0 0.0
    %942 = vmatprep.mubr.f32.mxu0 0.0
    %943 = vmatmul.mubr.f32.gmra.mrb[0].mxu0 %v107
    %v944 = vpop.f32.mrb[0].mxu0
    %v945 = vadd.f32 0.0, %v944
    %v946 = vpop.f32.mrb[0].mxu0
    %947 = vmatprep.mubr.f32.mxu0 0.0
    %948 = vmatmul.mubr.f32.gmra.mrb[0].mxu0 %v108
    %v949 = vpop.f32.mrb[0].mxu0
    %v950 = vadd.f32 0.0, %v949
    %v951 = vpop.f32.mrb[0].mxu0
    %952 = vmatprep.mubr.f32.mxu0 0.0
    %953 = vmatmul.mubr.f32.gmra.mrb[0].mxu0 %v109
    %v954 = vpop.f32.mrb[0].mxu0
    %v955 = vadd.f32 0.0, %v954
    %v956 = vpop.f32.mrb[0].mxu0
    %957 = vmatprep.mubr.f32.mxu0 0.0
    %958 = vmatmul.mubr.f32.gmra.mrb[0].mxu0 %v110
    %v959 = vpop.f32.mrb[0].mxu0
    %v960 = vadd.f32 0.0, %v959
    %v961 = vpop.f32.mrb[0].mxu0
    %962 = vmatprep.mubr.f32.mxu0 0.0
    %963 = vmatmul.mubr.f32.gmra.mrb[0].mxu0 %v111
    %v964 = vpop.f32.mrb[0].mxu0
    %v965 = vadd.f32 0.0, %v964
    %v966 = vpop.f32.mrb[0].mxu0
    %967 = vmatprep.mubr.f32.mxu0 0.0
    %968 = vmatmul.mubr.f32.gmra.mrb[0].mxu0 %v112
    %v969 = vpop.f32.mrb[0].mxu0
    %v970 = vadd.f32 0.0, %v969
    %v971 = vpop.f32.mrb[0].mxu0
    %972 = vmatprep.mubr.f32.mxu0 0.0
    %973 = vmatmul.mubr.f32.gmra.mrb[0].mxu0 %v113
    %v974 = vpop.f32.mrb[0].mxu0
    %v975 = vadd.f32 0.0, %v974
    %v976 = vpop.f32.mrb[0].mxu0
    %977 = vmatprep.mubr.f32.mxu0 0.0
    %978 = vmatmul.mubr.f32.gmra.mrb[0].mxu0 %v114
    %v979 = vpop.f32.mrb[0].mxu0
    %v980 = vadd.f32 0.0, %v979
    %v981 = vpop.f32.mrb[0].mxu0
    %982 = vmatprep.mubr.f32.mxu0 0.0
    %983 = vmatmul.mubr.f32.gmra.mrb[0].mxu0 %v115
    %v984 = vpop.f32.mrb[0].mxu0
    %v985 = vadd.f32 0.0, %v984
    %v986 = vpop.f32.mrb[0].mxu0
    %987 = vmatprep.mubr.f32.mxu0 0.0
    %988 = vmatmul.mubr.f32.gmra.mrb[0].mxu0 %v116
    %v989 = vpop.f32.mrb[0].mxu0
    %v990 = vadd.f32 0.0, %v989
    %v991 = vpop.f32.mrb[0].mxu0
    %992 = vmatprep.mubr.f32.mxu0 0.0
    %993 = vmatmul.mubr.f32.gmra.mrb[0].mxu0 %v117
    %v994 = vpop.f32.mrb[0].mxu0
    %v995 = vadd.f32 0.0, %v994
    %v996 = vpop.f32.mrb[0].mxu0
    %997 = vmatprep.mubr.f32.mxu0 0.0
    %998 = vmatmul.mubr.f32.gmra.mrb[0].mxu0 %v118
    %v999 = vpop.f32.mrb[0].mxu0
    %v1000 = vadd.f32 0.0, %v999
    %v1001 = vpop.f32.mrb[0].mxu0
    %1002 = vmatprep.mubr.f32.mxu0 0.0
    %1003 = vmatmul.mubr.f32.gmra.mrb[0].mxu0 %v119
    %v1004 = vpop.f32.mrb[0].mxu0
    %v1005 = vadd.f32 0.0, %v1004
    %v1006 = vpop.f32.mrb[0].mxu0
    %1007 = vmatprep.mubr.f32.mxu0 0.0
    %1008 = vmatmul.mubr.f32.gmra.mrb[0].mxu0 %v120
    %v1009 = vpop.f32.mrb[0].mxu0
    %v1010 = vadd.f32 0.0, %v1009
    %v1011 = vpop.f32.mrb[0].mxu0
    %1012 = vmatprep.mubr.f32.mxu0 0.0
    %1013 = vmatmul.mubr.f32.gmra.mrb[0].mxu0 %v121
    %v1014 = vpop.f32.mrb[0].mxu0
    %v1015 = vadd.f32 0.0, %v1014
    %v1016 = vpop.f32.mrb[0].mxu0
    %1017 = vmatprep.mubr.f32.mxu0 0.0
    %1018 = vmatmul.mubr.f32.gmra.mrb[0].mxu0 %v122
    %v1019 = vpop.f32.mrb[0].mxu0
    %v1020 = vadd.f32 0.0, %v1019
    %v1021 = vpop.f32.mrb[0].mxu0
    %1022 = vdwg.mxu0
    %1023 = vmatprep.subr.mxu0 0.0
    %1024 = vmatpush1.xpose.msra.mxu0 %v251
    %1025 = vmatprep.subr.mxu0 0.0
    %1026 = vmatpush1.xpose.msra.mxu0 %v252
    %1027 = vmatprep.subr.mxu0 0.0
    %1028 = vmatpush1.xpose.msra.mxu0 %v253
    %1029 = vmatprep.subr.mxu0 0.0
    %1030 = vmatpush1.xpose.msra.mxu0 %v254
    %1031 = vmatprep.subr.mxu0 0.0
    %1032 = vmatpush1.xpose.msra.mxu0 %v255
    %1033 = vmatprep.subr.mxu0 0.0
    %1034 = vmatpush1.xpose.msra.mxu0 %v256
    %1035 = vmatprep.subr.mxu0 0.0
    %1036 = vmatpush1.xpose.msra.mxu0 %v257
    %1037 = vmatprep.subr.mxu0 0.0
    %1038 = vmatpush1.xpose.msra.mxu0 %v258
    %1039 = vmatprep.subr.mxu0 0.0
    %1040 = vmatpush1.xpose.msra.mxu0 %v259
    %1041 = vmatprep.subr.mxu0 0.0
    %1042 = vmatpush1.xpose.msra.mxu0 %v260
    %1043 = vmatprep.subr.mxu0 0.0
    %1044 = vmatpush1.xpose.msra.mxu0 %v261
    %1045 = vmatprep.subr.mxu0 0.0
    %1046 = vmatpush1.xpose.msra.mxu0 %v262
    %1047 = vmatprep.subr.mxu0 0.0
    %1048 = vmatpush1.xpose.msra.mxu0 %v263
    %1049 = vmatprep.subr.mxu0 0.0
    %1050 = vmatpush1.xpose.msra.mxu0 %v264
    %1051 = vmatprep.subr.mxu0 0.0
    %1052 = vmatpush1.xpose.msra.mxu0 %v265
    %1053 = vmatprep.subr.mxu0 0.0
    %1054 = vmatpush1.xpose.msra.mxu0 %v266
    %1055 = vmatprep.subr.mxu0 0.0
    %1056 = vmatpush1.xpose.msra.mxu0 0.0
    %1057 = vmatprep.subr.mxu0 0.0
    %1058 = vmatpush1.xpose.msra.mxu0 0.0
    %1059 = vmatprep.subr.mxu0 0.0
    %1060 = vmatpush1.xpose.msra.mxu0 0.0
    %1061 = vmatprep.subr.mxu0 0.0
    %1062 = vmatpush1.xpose.msra.mxu0 0.0
    %1063 = vmatprep.subr.mxu0 0.0
    %1064 = vmatpush1.xpose.msra.mxu0 0.0
    %1065 = vmatprep.subr.mxu0 0.0
    %1066 = vmatpush1.xpose.msra.mxu0 0.0
    %1067 = vmatprep.subr.mxu0 0.0
    %1068 = vmatpush1.xpose.msra.mxu0 0.0
    %1069 = vmatprep.subr.mxu0 0.0
    %1070 = vmatpush1.xpose.msra.mxu0 0.0
    %1071 = vmatprep.subr.mxu0 0.0
    %1072 = vmatpush1.xpose.msra.mxu0 0.0
    %1073 = vmatprep.subr.mxu0 0.0
    %1074 = vmatpush1.xpose.msra.mxu0 0.0
    %1075 = vmatprep.subr.mxu0 0.0
    %1076 = vmatpush1.xpose.msra.mxu0 0.0
    %1077 = vmatprep.subr.mxu0 0.0
    %1078 = vmatpush1.xpose.msra.mxu0 0.0
    %1079 = vmatprep.subr.mxu0 0.0
    %1080 = vmatpush1.xpose.msra.mxu0 0.0
    %1081 = vmatprep.subr.mxu0 0.0
    %1082 = vmatpush1.xpose.msra.mxu0 0.0
    %1083 = vmatprep.subr.mxu0 0.0
    %1084 = vmatpush1.xpose.msra.mxu0 0.0
    %1085 = vmatprep.subr.mxu0 0.0
    %1086 = vmatpush1.xpose.msra.mxu0 0.0
    %1087 = vmatprep.mubr.f32.mxu0 0.0
    %1088 = vmatmul.mubr.f32.gmra.mrb[0].mxu0 %v123
    %v1089 = vpop.f32.mrb[0].mxu0
    %v1090 = vadd.f32 0.0, %v1089
    %v1091 = vpop.f32.mrb[0].mxu0
    %1092 = vmatprep.mubr.f32.mxu0 0.0
    %1093 = vmatmul.mubr.f32.gmra.mrb[0].mxu0 %v124
    %v1094 = vpop.f32.mrb[0].mxu0
    %v1095 = vadd.f32 0.0, %v1094
    %v1096 = vpop.f32.mrb[0].mxu0
    %1097 = vmatprep.mubr.f32.mxu0 0.0
    %1098 = vmatmul.mubr.f32.gmra.mrb[0].mxu0 %v125
    %v1099 = vpop.f32.mrb[0].mxu0
    %v1100 = vadd.f32 0.0, %v1099
    %v1101 = vpop.f32.mrb[0].mxu0
    %1102 = vmatprep.mubr.f32.mxu0 0.0
    %1103 = vmatmul.mubr.f32.gmra.mrb[0].mxu0 %v126
    %v1104 = vpop.f32.mrb[0].mxu0
    %v1105 = vadd.f32 0.0, %v1104
    %v1106 = vpop.f32.mrb[0].mxu0
    %1107 = vmatprep.mubr.f32.mxu0 0.0
    %1108 = vmatmul.mubr.f32.gmra.mrb[0].mxu0 %v127
    %v1109 = vpop.f32.mrb[0].mxu0
    %v1110 = vadd.f32 0.0, %v1109
    %v1111 = vpop.f32.mrb[0].mxu0
    %1112 = vmatprep.mubr.f32.mxu0 0.0
    %1113 = vmatmul.mubr.f32.gmra.mrb[0].mxu0 %v128
    %v1114 = vpop.f32.mrb[0].mxu0
    %v1115 = vadd.f32 0.0, %v1114
    %v1116 = vpop.f32.mrb[0].mxu0
    %1117 = vmatprep.mubr.f32.mxu0 0.0
    %1118 = vmatmul.mubr.f32.gmra.mrb[0].mxu0 %v129
    %v1119 = vpop.f32.mrb[0].mxu0
    %v1120 = vadd.f32 0.0, %v1119
    %v1121 = vpop.f32.mrb[0].mxu0
    %1122 = vmatprep.mubr.f32.mxu0 0.0
    %1123 = vmatmul.mubr.f32.gmra.mrb[0].mxu0 %v130
    %v1124 = vpop.f32.mrb[0].mxu0
    %v1125 = vadd.f32 0.0, %v1124
    %v1126 = vpop.f32.mrb[0].mxu0
    %1127 = vmatprep.mubr.f32.mxu0 0.0
    %1128 = vmatmul.mubr.f32.gmra.mrb[0].mxu0 %v131
    %v1129 = vpop.f32.mrb[0].mxu0
    %v1130 = vadd.f32 0.0, %v1129
    %v1131 = vpop.f32.mrb[0].mxu0
    %1132 = vmatprep.mubr.f32.mxu0 0.0
    %1133 = vmatmul.mubr.f32.gmra.mrb[0].mxu0 %v132
    %v1134 = vpop.f32.mrb[0].mxu0
    %v1135 = vadd.f32 0.0, %v1134
    %v1136 = vpop.f32.mrb[0].mxu0
    %1137 = vmatprep.mubr.f32.mxu0 0.0
    %1138 = vmatmul.mubr.f32.gmra.mrb[0].mxu0 %v133
    %v1139 = vpop.f32.mrb[0].mxu0
    %v1140 = vadd.f32 0.0, %v1139
    %v1141 = vpop.f32.mrb[0].mxu0
    %1142 = vmatprep.mubr.f32.mxu0 0.0
    %1143 = vmatmul.mubr.f32.gmra.mrb[0].mxu0 %v134
    %v1144 = vpop.f32.mrb[0].mxu0
    %v1145 = vadd.f32 0.0, %v1144
    %v1146 = vpop.f32.mrb[0].mxu0
    %1147 = vmatprep.mubr.f32.mxu0 0.0
    %1148 = vmatmul.mubr.f32.gmra.mrb[0].mxu0 %v135
    %v1149 = vpop.f32.mrb[0].mxu0
    %v1150 = vadd.f32 0.0, %v1149
    %v1151 = vpop.f32.mrb[0].mxu0
    %1152 = vmatprep.mubr.f32.mxu0 0.0
    %1153 = vmatmul.mubr.f32.gmra.mrb[0].mxu0 %v136
    %v1154 = vpop.f32.mrb[0].mxu0
    %v1155 = vadd.f32 0.0, %v1154
    %v1156 = vpop.f32.mrb[0].mxu0
    %1157 = vmatprep.mubr.f32.mxu0 0.0
    %1158 = vmatmul.mubr.f32.gmra.mrb[0].mxu0 %v137
    %v1159 = vpop.f32.mrb[0].mxu0
    %v1160 = vadd.f32 0.0, %v1159
    %v1161 = vpop.f32.mrb[0].mxu0
    %1162 = vmatprep.mubr.f32.mxu0 0.0
    %1163 = vmatmul.mubr.f32.gmra.mrb[0].mxu0 %v138
    %v1164 = vpop.f32.mrb[0].mxu0
    %v1165 = vadd.f32 0.0, %v1164
    %v1166 = vpop.f32.mrb[0].mxu0
    %1167 = vdwg.mxu0
    %1168 = vmatprep.subr.mxu0 0.0
    %1169 = vmatpush1.xpose.msra.mxu0 %v267
    %1170 = vmatprep.subr.mxu0 0.0
    %1171 = vmatpush1.xpose.msra.mxu0 %v268
    %1172 = vmatprep.subr.mxu0 0.0
    %1173 = vmatpush1.xpose.msra.mxu0 %v269
    %1174 = vmatprep.subr.mxu0 0.0
    %1175 = vmatpush1.xpose.msra.mxu0 %v270
    %1176 = vmatprep.subr.mxu0 0.0
    %1177 = vmatpush1.xpose.msra.mxu0 %v271
    %1178 = vmatprep.subr.mxu0 0.0
    %1179 = vmatpush1.xpose.msra.mxu0 %v272
    %1180 = vmatprep.subr.mxu0 0.0
    %1181 = vmatpush1.xpose.msra.mxu0 %v273
    %1182 = vmatprep.subr.mxu0 0.0
    %1183 = vmatpush1.xpose.msra.mxu0 %v274
    %1184 = vmatprep.subr.mxu0 0.0
    %1185 = vmatpush1.xpose.msra.mxu0 %v275
    %1186 = vmatprep.subr.mxu0 0.0
    %1187 = vmatpush1.xpose.msra.mxu0 %v276
    %1188 = vmatprep.subr.mxu0 0.0
    %1189 = vmatpush1.xpose.msra.mxu0 %v277
    %1190 = vmatprep.subr.mxu0 0.0
    %1191 = vmatpush1.xpose.msra.mxu0 %v278
    %1192 = vmatprep.subr.mxu0 0.0
    %1193 = vmatpush1.xpose.msra.mxu0 %v279
    %1194 = vmatprep.subr.mxu0 0.0
    %1195 = vmatpush1.xpose.msra.mxu0 %v280
    %1196 = vmatprep.subr.mxu0 0.0
    %1197 = vmatpush1.xpose.msra.mxu0 %v281
    %1198 = vmatprep.subr.mxu0 0.0
    %1199 = vmatpush1.xpose.msra.mxu0 %v282
    %1200 = vmatprep.subr.mxu0 0.0
    %1201 = vmatpush1.xpose.msra.mxu0 0.0
    %1202 = vmatprep.subr.mxu0 0.0
    %1203 = vmatpush1.xpose.msra.mxu0 0.0
    %1204 = vmatprep.subr.mxu0 0.0
    %1205 = vmatpush1.xpose.msra.mxu0 0.0
    %1206 = vmatprep.subr.mxu0 0.0
    %1207 = vmatpush1.xpose.msra.mxu0 0.0
    %1208 = vmatprep.subr.mxu0 0.0
    %1209 = vmatpush1.xpose.msra.mxu0 0.0
    %1210 = vmatprep.subr.mxu0 0.0
    %1211 = vmatpush1.xpose.msra.mxu0 0.0
    %1212 = vmatprep.subr.mxu0 0.0
    %1213 = vmatpush1.xpose.msra.mxu0 0.0
    %1214 = vmatprep.subr.mxu0 0.0
    %1215 = vmatpush1.xpose.msra.mxu0 0.0
    %1216 = vmatprep.subr.mxu0 0.0
    %1217 = vmatpush1.xpose.msra.mxu0 0.0
    %1218 = vmatprep.subr.mxu0 0.0
    %1219 = vmatpush1.xpose.msra.mxu0 0.0
    %1220 = vmatprep.subr.mxu0 0.0
    %1221 = vmatpush1.xpose.msra.mxu0 0.0
    %1222 = vmatprep.subr.mxu0 0.0
    %1223 = vmatpush1.xpose.msra.mxu0 0.0
    %1224 = vmatprep.subr.mxu0 0.0
    %1225 = vmatpush1.xpose.msra.mxu0 0.0
    %1226 = vmatprep.subr.mxu0 0.0
    %1227 = vmatpush1.xpose.msra.mxu0 0.0
    %1228 = vmatprep.subr.mxu0 0.0
    %1229 = vmatpush1.xpose.msra.mxu0 0.0
    %1230 = vmatprep.subr.mxu0 0.0
    %1231 = vmatpush1.xpose.msra.mxu0 0.0
    %1232 = vmatprep.mubr.f32.mxu0 0.0
    %1233 = vmatmul.mubr.f32.gmra.mrb[0].mxu0 %v139
    %v1234 = vpop.f32.mrb[0].mxu0
    %v1235 = vadd.f32 0.0, %v1234
    %v1236 = vpop.f32.mrb[0].mxu0
    %1237 = vmatprep.mubr.f32.mxu0 0.0
    %1238 = vmatmul.mubr.f32.gmra.mrb[0].mxu0 %v140
    %v1239 = vpop.f32.mrb[0].mxu0
    %v1240 = vadd.f32 0.0, %v1239
    %v1241 = vpop.f32.mrb[0].mxu0
    %1242 = vmatprep.mubr.f32.mxu0 0.0
    %1243 = vmatmul.mubr.f32.gmra.mrb[0].mxu0 %v141
    %v1244 = vpop.f32.mrb[0].mxu0
    %v1245 = vadd.f32 0.0, %v1244
    %v1246 = vpop.f32.mrb[0].mxu0
    %1247 = vmatprep.mubr.f32.mxu0 0.0
    %1248 = vmatmul.mubr.f32.gmra.mrb[0].mxu0 %v142
    %v1249 = vpop.f32.mrb[0].mxu0
    %v1250 = vadd.f32 0.0, %v1249
    %v1251 = vpop.f32.mrb[0].mxu0
    %1252 = vmatprep.mubr.f32.mxu0 0.0
    %1253 = vmatmul.mubr.f32.gmra.mrb[0].mxu0 %v143
    %v1254 = vpop.f32.mrb[0].mxu0
    %v1255 = vadd.f32 0.0, %v1254
    %v1256 = vpop.f32.mrb[0].mxu0
    %1257 = vmatprep.mubr.f32.mxu0 0.0
    %1258 = vmatmul.mubr.f32.gmra.mrb[0].mxu0 %v144
    %v1259 = vpop.f32.mrb[0].mxu0
    %v1260 = vadd.f32 0.0, %v1259
    %v1261 = vpop.f32.mrb[0].mxu0
    %1262 = vmatprep.mubr.f32.mxu0 0.0
    %1263 = vmatmul.mubr.f32.gmra.mrb[0].mxu0 %v145
    %v1264 = vpop.f32.mrb[0].mxu0
    %v1265 = vadd.f32 0.0, %v1264
    %v1266 = vpop.f32.mrb[0].mxu0
    %1267 = vmatprep.mubr.f32.mxu0 0.0
    %1268 = vmatmul.mubr.f32.gmra.mrb[0].mxu0 %v146
    %v1269 = vpop.f32.mrb[0].mxu0
    %v1270 = vadd.f32 0.0, %v1269
    %v1271 = vpop.f32.mrb[0].mxu0
    %1272 = vmatprep.mubr.f32.mxu0 0.0
    %1273 = vmatmul.mubr.f32.gmra.mrb[0].mxu0 %v147
    %v1274 = vpop.f32.mrb[0].mxu0
    %v1275 = vadd.f32 0.0, %v1274
    %v1276 = vpop.f32.mrb[0].mxu0
    %1277 = vmatprep.mubr.f32.mxu0 0.0
    %1278 = vmatmul.mubr.f32.gmra.mrb[0].mxu0 %v148
    %v1279 = vpop.f32.mrb[0].mxu0
    %v1280 = vadd.f32 0.0, %v1279
    %v1281 = vpop.f32.mrb[0].mxu0
    %1282 = vmatprep.mubr.f32.mxu0 0.0
    %1283 = vmatmul.mubr.f32.gmra.mrb[0].mxu0 %v149
    %v1284 = vpop.f32.mrb[0].mxu0
    %v1285 = vadd.f32 0.0, %v1284
    %v1286 = vpop.f32.mrb[0].mxu0
    %1287 = vmatprep.mubr.f32.mxu0 0.0
    %1288 = vmatmul.mubr.f32.gmra.mrb[0].mxu0 %v150
    %v1289 = vpop.f32.mrb[0].mxu0
    %v1290 = vadd.f32 0.0, %v1289
    %v1291 = vpop.f32.mrb[0].mxu0
    %1292 = vmatprep.mubr.f32.mxu0 0.0
    %1293 = vmatmul.mubr.f32.gmra.mrb[0].mxu0 %v151
    %v1294 = vpop.f32.mrb[0].mxu0
    %v1295 = vadd.f32 0.0, %v1294
    %v1296 = vpop.f32.mrb[0].mxu0
    %1297 = vmatprep.mubr.f32.mxu0 0.0
    %1298 = vmatmul.mubr.f32.gmra.mrb[0].mxu0 %v152
    %v1299 = vpop.f32.mrb[0].mxu0
    %v1300 = vadd.f32 0.0, %v1299
    %v1301 = vpop.f32.mrb[0].mxu0
    %1302 = vmatprep.mubr.f32.mxu0 0.0
    %1303 = vmatmul.mubr.f32.gmra.mrb[0].mxu0 %v153
    %v1304 = vpop.f32.mrb[0].mxu0
    %v1305 = vadd.f32 0.0, %v1304
    %v1306 = vpop.f32.mrb[0].mxu0
    %1307 = vmatprep.mubr.f32.mxu0 0.0
    %1308 = vmatmul.mubr.f32.gmra.mrb[0].mxu0 %v154
    %v1309 = vpop.f32.mrb[0].mxu0
    %v1310 = vadd.f32 0.0, %v1309
    %v1311 = vpop.f32.mrb[0].mxu0
    %1312 = vdwg.mxu0
    %1313 = vmatprep.subr.mxu0 0.0
    %1314 = vmatpush1.xpose.msra.mxu0 %v283
    %1315 = vmatprep.subr.mxu0 0.0
    %1316 = vmatpush1.xpose.msra.mxu0 %v284
    %1317 = vmatprep.subr.mxu0 0.0
    %1318 = vmatpush1.xpose.msra.mxu0 %v285
    %1319 = vmatprep.subr.mxu0 0.0
    %1320 = vmatpush1.xpose.msra.mxu0 %v286
    %1321 = vmatprep.subr.mxu0 0.0
    %1322 = vmatpush1.xpose.msra.mxu0 %v287
    %1323 = vmatprep.subr.mxu0 0.0
    %1324 = vmatpush1.xpose.msra.mxu0 %v288
    %1325 = vmatprep.subr.mxu0 0.0
    %1326 = vmatpush1.xpose.msra.mxu0 %v289
    %1327 = vmatprep.subr.mxu0 0.0
    %1328 = vmatpush1.xpose.msra.mxu0 %v290
    %1329 = vmatprep.subr.mxu0 0.0
    %1330 = vmatpush1.xpose.msra.mxu0 %v291
    %1331 = vmatprep.subr.mxu0 0.0
    %1332 = vmatpush1.xpose.msra.mxu0 %v292
    %1333 = vmatprep.subr.mxu0 0.0
    %1334 = vmatpush1.xpose.msra.mxu0 %v293
    %1335 = vmatprep.subr.mxu0 0.0
    %1336 = vmatpush1.xpose.msra.mxu0 %v294
    %1337 = vmatprep.subr.mxu0 0.0
    %1338 = vmatpush1.xpose.msra.mxu0 %v295
    %1339 = vmatprep.subr.mxu0 0.0
    %1340 = vmatpush1.xpose.msra.mxu0 %v296
    %1341 = vmatprep.subr.mxu0 0.0
    %1342 = vmatpush1.xpose.msra.mxu0 %v297
    %1343 = vmatprep.subr.mxu0 0.0
    %1344 = vmatpush1.xpose.msra.mxu0 %v298
    %1345 = vmatprep.subr.mxu0 0.0
    %1346 = vmatpush1.xpose.msra.mxu0 0.0
    %1347 = vmatprep.subr.mxu0 0.0
    %1348 = vmatpush1.xpose.msra.mxu0 0.0
    %1349 = vmatprep.subr.mxu0 0.0
    %1350 = vmatpush1.xpose.msra.mxu0 0.0
    %1351 = vmatprep.subr.mxu0 0.0
    %1352 = vmatpush1.xpose.msra.mxu0 0.0
    %1353 = vmatprep.subr.mxu0 0.0
    %1354 = vmatpush1.xpose.msra.mxu0 0.0
    %1355 = vmatprep.subr.mxu0 0.0
    %1356 = vmatpush1.xpose.msra.mxu0 0.0
    %1357 = vmatprep.subr.mxu0 0.0
    %1358 = vmatpush1.xpose.msra.mxu0 0.0
    %1359 = vmatprep.subr.mxu0 0.0
    %1360 = vmatpush1.xpose.msra.mxu0 0.0
    %1361 = vmatprep.subr.mxu0 0.0
    %1362 = vmatpush1.xpose.msra.mxu0 0.0
    %1363 = vmatprep.subr.mxu0 0.0
    %1364 = vmatpush1.xpose.msra.mxu0 0.0
    %1365 = vmatprep.subr.mxu0 0.0
    %1366 = vmatpush1.xpose.msra.mxu0 0.0
    %1367 = vmatprep.subr.mxu0 0.0
    %1368 = vmatpush1.xpose.msra.mxu0 0.0
    %1369 = vmatprep.subr.mxu0 0.0
    %1370 = vmatpush1.xpose.msra.mxu0 0.0
    %1371 = vmatprep.subr.mxu0 0.0
    %1372 = vmatpush1.xpose.msra.mxu0 0.0
    %1373 = vmatprep.subr.mxu0 0.0
    %1374 = vmatpush1.xpose.msra.mxu0 0.0
    %1375 = vmatprep.subr.mxu0 0.0
    %1376 = vmatpush1.xpose.msra.mxu0 0.0
    %1377 = vmatprep.mubr.f32.mxu0 0.0
    %1378 = vmatmul.mubr.f32.gmra.mrb[0].mxu0 %v155
    %v1379 = vpop.f32.mrb[0].mxu0
    %v1380 = vadd.f32 0.0, %v1379
    %v1381 = vpop.f32.mrb[0].mxu0
    %1382 = vmatprep.mubr.f32.mxu0 0.0
    %1383 = vmatmul.mubr.f32.gmra.mrb[0].mxu0 %v156
    %v1384 = vpop.f32.mrb[0].mxu0
    %v1385 = vadd.f32 0.0, %v1384
    %v1386 = vpop.f32.mrb[0].mxu0
    %1387 = vmatprep.mubr.f32.mxu0 0.0
    %1388 = vmatmul.mubr.f32.gmra.mrb[0].mxu0 %v157
    %v1389 = vpop.f32.mrb[0].mxu0
    %v1390 = vadd.f32 0.0, %v1389
    %v1391 = vpop.f32.mrb[0].mxu0
    %1392 = vmatprep.mubr.f32.mxu0 0.0
    %1393 = vmatmul.mubr.f32.gmra.mrb[0].mxu0 %v158
    %v1394 = vpop.f32.mrb[0].mxu0
    %v1395 = vadd.f32 0.0, %v1394
    %v1396 = vpop.f32.mrb[0].mxu0
    %1397 = vmatprep.mubr.f32.mxu0 0.0
    %1398 = vmatmul.mubr.f32.gmra.mrb[0].mxu0 %v159
    %v1399 = vpop.f32.mrb[0].mxu0
    %v1400 = vadd.f32 0.0, %v1399
    %v1401 = vpop.f32.mrb[0].mxu0
    %1402 = vmatprep.mubr.f32.mxu0 0.0
    %1403 = vmatmul.mubr.f32.gmra.mrb[0].mxu0 %v160
    %v1404 = vpop.f32.mrb[0].mxu0
    %v1405 = vadd.f32 0.0, %v1404
    %v1406 = vpop.f32.mrb[0].mxu0
    %1407 = vmatprep.mubr.f32.mxu0 0.0
    %1408 = vmatmul.mubr.f32.gmra.mrb[0].mxu0 %v161
    %v1409 = vpop.f32.mrb[0].mxu0
    %v1410 = vadd.f32 0.0, %v1409
    %v1411 = vpop.f32.mrb[0].mxu0
    %1412 = vmatprep.mubr.f32.mxu0 0.0
    %1413 = vmatmul.mubr.f32.gmra.mrb[0].mxu0 %v162
    %v1414 = vpop.f32.mrb[0].mxu0
    %v1415 = vadd.f32 0.0, %v1414
    %v1416 = vpop.f32.mrb[0].mxu0
    %1417 = vmatprep.mubr.f32.mxu0 0.0
    %1418 = vmatmul.mubr.f32.gmra.mrb[0].mxu0 %v163
    %v1419 = vpop.f32.mrb[0].mxu0
    %v1420 = vadd.f32 0.0, %v1419
    %v1421 = vpop.f32.mrb[0].mxu0
    %1422 = vmatprep.mubr.f32.mxu0 0.0
    %1423 = vmatmul.mubr.f32.gmra.mrb[0].mxu0 %v164
    %v1424 = vpop.f32.mrb[0].mxu0
    %v1425 = vadd.f32 0.0, %v1424
    %v1426 = vpop.f32.mrb[0].mxu0
    %1427 = vmatprep.mubr.f32.mxu0 0.0
    %1428 = vmatmul.mubr.f32.gmra.mrb[0].mxu0 %v165
    %v1429 = vpop.f32.mrb[0].mxu0
    %v1430 = vadd.f32 0.0, %v1429
    %v1431 = vpop.f32.mrb[0].mxu0
    %1432 = vmatprep.mubr.f32.mxu0 0.0
    %1433 = vmatmul.mubr.f32.gmra.mrb[0].mxu0 %v166
    %v1434 = vpop.f32.mrb[0].mxu0
    %v1435 = vadd.f32 0.0, %v1434
    %v1436 = vpop.f32.mrb[0].mxu0
    %1437 = vmatprep.mubr.f32.mxu0 0.0
    %1438 = vmatmul.mubr.f32.gmra.mrb[0].mxu0 %v167
    %v1439 = vpop.f32.mrb[0].mxu0
    %v1440 = vadd.f32 0.0, %v1439
    %v1441 = vpop.f32.mrb[0].mxu0
    %1442 = vmatprep.mubr.f32.mxu0 0.0
    %1443 = vmatmul.mubr.f32.gmra.mrb[0].mxu0 %v168
    %v1444 = vpop.f32.mrb[0].mxu0
    %v1445 = vadd.f32 0.0, %v1444
    %v1446 = vpop.f32.mrb[0].mxu0
    %1447 = vmatprep.mubr.f32.mxu0 0.0
    %1448 = vmatmul.mubr.f32.gmra.mrb[0].mxu0 %v169
    %v1449 = vpop.f32.mrb[0].mxu0
    %v1450 = vadd.f32 0.0, %v1449
    %v1451 = vpop.f32.mrb[0].mxu0
    %1452 = vmatprep.mubr.f32.mxu0 0.0
    %1453 = vmatmul.mubr.f32.gmra.mrb[0].mxu0 %v170
    %v1454 = vpop.f32.mrb[0].mxu0
    %v1455 = vadd.f32 0.0, %v1454
    %v1456 = vpop.f32.mrb[0].mxu0
    %1457 = vdwg.mxu0
    %1458 = vmatprep.subr.mxu0 0.0
    %1459 = vmatpush1.xpose.msra.mxu0 %v299
    %1460 = vmatprep.subr.mxu0 0.0
    %1461 = vmatpush1.xpose.msra.mxu0 %v300
    %1462 = vmatprep.subr.mxu0 0.0
    %1463 = vmatpush1.xpose.msra.mxu0 %v301
    %1464 = vmatprep.subr.mxu0 0.0
    %1465 = vmatpush1.xpose.msra.mxu0 %v302
    %1466 = vmatprep.subr.mxu0 0.0
    %1467 = vmatpush1.xpose.msra.mxu0 %v303
    %1468 = vmatprep.subr.mxu0 0.0
    %1469 = vmatpush1.xpose.msra.mxu0 %v304
    %1470 = vmatprep.subr.mxu0 0.0
    %1471 = vmatpush1.xpose.msra.mxu0 %v305
    %1472 = vmatprep.subr.mxu0 0.0
    %1473 = vmatpush1.xpose.msra.mxu0 %v306
    %1474 = vmatprep.subr.mxu0 0.0
    %1475 = vmatpush1.xpose.msra.mxu0 %v307
    %1476 = vmatprep.subr.mxu0 0.0
    %1477 = vmatpush1.xpose.msra.mxu0 %v308
    %1478 = vmatprep.subr.mxu0 0.0
    %1479 = vmatpush1.xpose.msra.mxu0 %v309
    %1480 = vmatprep.subr.mxu0 0.0
    %1481 = vmatpush1.xpose.msra.mxu0 %v310
    %1482 = vmatprep.subr.mxu0 0.0
    %1483 = vmatpush1.xpose.msra.mxu0 %v311
    %1484 = vmatprep.subr.mxu0 0.0
    %1485 = vmatpush1.xpose.msra.mxu0 %v312
    %1486 = vmatprep.subr.mxu0 0.0
    %1487 = vmatpush1.xpose.msra.mxu0 %v313
    %1488 = vmatprep.subr.mxu0 0.0
    %1489 = vmatpush1.xpose.msra.mxu0 %v314
    %1490 = vmatprep.subr.mxu0 0.0
    %1491 = vmatpush1.xpose.msra.mxu0 0.0
    %1492 = vmatprep.subr.mxu0 0.0
    %1493 = vmatpush1.xpose.msra.mxu0 0.0
    %1494 = vmatprep.subr.mxu0 0.0
    %1495 = vmatpush1.xpose.msra.mxu0 0.0
    %1496 = vmatprep.subr.mxu0 0.0
    %1497 = vmatpush1.xpose.msra.mxu0 0.0
    %1498 = vmatprep.subr.mxu0 0.0
    %1499 = vmatpush1.xpose.msra.mxu0 0.0
    %1500 = vmatprep.subr.mxu0 0.0
    %1501 = vmatpush1.xpose.msra.mxu0 0.0
    %1502 = vmatprep.subr.mxu0 0.0
    %1503 = vmatpush1.xpose.msra.mxu0 0.0
    %1504 = vmatprep.subr.mxu0 0.0
    %1505 = vmatpush1.xpose.msra.mxu0 0.0
    %1506 = vmatprep.subr.mxu0 0.0
    %1507 = vmatpush1.xpose.msra.mxu0 0.0
    %1508 = vmatprep.subr.mxu0 0.0
    %1509 = vmatpush1.xpose.msra.mxu0 0.0
    %1510 = vmatprep.subr.mxu0 0.0
    %1511 = vmatpush1.xpose.msra.mxu0 0.0
    %1512 = vmatprep.subr.mxu0 0.0
    %1513 = vmatpush1.xpose.msra.mxu0 0.0
    %1514 = vmatprep.subr.mxu0 0.0
    %1515 = vmatpush1.xpose.msra.mxu0 0.0
    %1516 = vmatprep.subr.mxu0 0.0
    %1517 = vmatpush1.xpose.msra.mxu0 0.0
    %1518 = vmatprep.subr.mxu0 0.0
    %1519 = vmatpush1.xpose.msra.mxu0 0.0
    %1520 = vmatprep.subr.mxu0 0.0
    %1521 = vmatpush1.xpose.msra.mxu0 0.0
    %1522 = vmatprep.mubr.f32.mxu0 0.0
    %1523 = vmatmul.mubr.f32.gmra.mrb[0].mxu0 %v171
    %v1524 = vpop.f32.mrb[0].mxu0
    %v1525 = vadd.f32 0.0, %v1524
    %v1526 = vpop.f32.mrb[0].mxu0
    %1527 = vmatprep.mubr.f32.mxu0 0.0
    %1528 = vmatmul.mubr.f32.gmra.mrb[0].mxu0 %v172
    %v1529 = vpop.f32.mrb[0].mxu0
    %v1530 = vadd.f32 0.0, %v1529
    %v1531 = vpop.f32.mrb[0].mxu0
    %1532 = vmatprep.mubr.f32.mxu0 0.0
    %1533 = vmatmul.mubr.f32.gmra.mrb[0].mxu0 %v173
    %v1534 = vpop.f32.mrb[0].mxu0
    %v1535 = vadd.f32 0.0, %v1534
    %v1536 = vpop.f32.mrb[0].mxu0
    %1537 = vmatprep.mubr.f32.mxu0 0.0
    %1538 = vmatmul.mubr.f32.gmra.mrb[0].mxu0 %v174
    %v1539 = vpop.f32.mrb[0].mxu0
    %v1540 = vadd.f32 0.0, %v1539
    %v1541 = vpop.f32.mrb[0].mxu0
    %1542 = vmatprep.mubr.f32.mxu0 0.0
    %1543 = vmatmul.mubr.f32.gmra.mrb[0].mxu0 %v175
    %v1544 = vpop.f32.mrb[0].mxu0
    %v1545 = vadd.f32 0.0, %v1544
    %v1546 = vpop.f32.mrb[0].mxu0
    %1547 = vmatprep.mubr.f32.mxu0 0.0
    %1548 = vmatmul.mubr.f32.gmra.mrb[0].mxu0 %v176
    %v1549 = vpop.f32.mrb[0].mxu0
    %v1550 = vadd.f32 0.0, %v1549
    %v1551 = vpop.f32.mrb[0].mxu0
    %1552 = vmatprep.mubr.f32.mxu0 0.0
    %1553 = vmatmul.mubr.f32.gmra.mrb[0].mxu0 %v177
    %v1554 = vpop.f32.mrb[0].mxu0
    %v1555 = vadd.f32 0.0, %v1554
    %v1556 = vpop.f32.mrb[0].mxu0
    %1557 = vmatprep.mubr.f32.mxu0 0.0
    %1558 = vmatmul.mubr.f32.gmra.mrb[0].mxu0 %v178
    %v1559 = vpop.f32.mrb[0].mxu0
    %v1560 = vadd.f32 0.0, %v1559
    %v1561 = vpop.f32.mrb[0].mxu0
    %1562 = vmatprep.mubr.f32.mxu0 0.0
    %1563 = vmatmul.mubr.f32.gmra.mrb[0].mxu0 %v179
    %v1564 = vpop.f32.mrb[0].mxu0
    %v1565 = vadd.f32 0.0, %v1564
    %v1566 = vpop.f32.mrb[0].mxu0
    %1567 = vmatprep.mubr.f32.mxu0 0.0
    %1568 = vmatmul.mubr.f32.gmra.mrb[0].mxu0 %v180
    %v1569 = vpop.f32.mrb[0].mxu0
    %v1570 = vadd.f32 0.0, %v1569
    %v1571 = vpop.f32.mrb[0].mxu0
    %1572 = vmatprep.mubr.f32.mxu0 0.0
    %1573 = vmatmul.mubr.f32.gmra.mrb[0].mxu0 %v181
    %v1574 = vpop.f32.mrb[0].mxu0
    %v1575 = vadd.f32 0.0, %v1574
    %v1576 = vpop.f32.mrb[0].mxu0
    %1577 = vmatprep.mubr.f32.mxu0 0.0
    %1578 = vmatmul.mubr.f32.gmra.mrb[0].mxu0 %v182
    %v1579 = vpop.f32.mrb[0].mxu0
    %v1580 = vadd.f32 0.0, %v1579
    %v1581 = vpop.f32.mrb[0].mxu0
    %1582 = vmatprep.mubr.f32.mxu0 0.0
    %1583 = vmatmul.mubr.f32.gmra.mrb[0].mxu0 %v183
    %v1584 = vpop.f32.mrb[0].mxu0
    %v1585 = vadd.f32 0.0, %v1584
    %v1586 = vpop.f32.mrb[0].mxu0
    %1587 = vmatprep.mubr.f32.mxu0 0.0
    %1588 = vmatmul.mubr.f32.gmra.mrb[0].mxu0 %v184
    %v1589 = vpop.f32.mrb[0].mxu0
    %v1590 = vadd.f32 0.0, %v1589
    %v1591 = vpop.f32.mrb[0].mxu0
    %1592 = vmatprep.mubr.f32.mxu0 0.0
    %1593 = vmatmul.mubr.f32.gmra.mrb[0].mxu0 %v185
    %v1594 = vpop.f32.mrb[0].mxu0
    %v1595 = vadd.f32 0.0, %v1594
    %v1596 = vpop.f32.mrb[0].mxu0
    %1597 = vmatprep.mubr.f32.mxu0 0.0
    %1598 = vmatmul.mubr.f32.gmra.mrb[0].mxu0 %v186
    %v1599 = vpop.f32.mrb[0].mxu0
    %v1600 = vadd.f32 0.0, %v1599
    %v1601 = vpop.f32.mrb[0].mxu0
    %1602 = vdwg.mxu0
    %v1603 = vmul.f32 %v510, 0.088388346
    %v1604 = vmul.f32 %v515, 0.088388346
    %v1605 = vmul.f32 %v520, 0.088388346
    %v1606 = vmul.f32 %v525, 0.088388346
    %v1607 = vmul.f32 %v530, 0.088388346
    %v1608 = vmul.f32 %v535, 0.088388346
    %v1609 = vmul.f32 %v540, 0.088388346
    %v1610 = vmul.f32 %v545, 0.088388346
    %v1611 = vmul.f32 %v550, 0.088388346
    %v1612 = vmul.f32 %v555, 0.088388346
    %v1613 = vmul.f32 %v560, 0.088388346
    %v1614 = vmul.f32 %v565, 0.088388346
    %v1615 = vmul.f32 %v570, 0.088388346
    %v1616 = vmul.f32 %v575, 0.088388346
    %v1617 = vmul.f32 %v580, 0.088388346
    %v1618 = vmul.f32 %v585, 0.088388346
    %v1619 = vmul.f32 %v655, 0.088388346
    %v1620 = vmul.f32 %v660, 0.088388346
    %v1621 = vmul.f32 %v665, 0.088388346
    %v1622 = vmul.f32 %v670, 0.088388346
    %v1623 = vmul.f32 %v675, 0.088388346
    %v1624 = vmul.f32 %v680, 0.088388346
    %v1625 = vmul.f32 %v685, 0.088388346
    %v1626 = vmul.f32 %v690, 0.088388346
    %v1627 = vmul.f32 %v695, 0.088388346
    %v1628 = vmul.f32 %v700, 0.088388346
    %v1629 = vmul.f32 %v705, 0.088388346
    %v1630 = vmul.f32 %v710, 0.088388346
    %v1631 = vmul.f32 %v715, 0.088388346
    %v1632 = vmul.f32 %v720, 0.088388346
    %v1633 = vmul.f32 %v725, 0.088388346
    %v1634 = vmul.f32 %v730, 0.088388346
    %v1635 = vmul.f32 %v800, 0.088388346
    %v1636 = vmul.f32 %v805, 0.088388346
    %v1637 = vmul.f32 %v810, 0.088388346
    %v1638 = vmul.f32 %v815, 0.088388346
    %v1639 = vmul.f32 %v820, 0.088388346
    %v1640 = vmul.f32 %v825, 0.088388346
    %v1641 = vmul.f32 %v830, 0.088388346
    %v1642 = vmul.f32 %v835, 0.088388346
    %v1643 = vmul.f32 %v840, 0.088388346
    %v1644 = vmul.f32 %v845, 0.088388346
    %v1645 = vmul.f32 %v850, 0.088388346
    %v1646 = vmul.f32 %v855, 0.088388346
    %v1647 = vmul.f32 %v860, 0.088388346
    %v1648 = vmul.f32 %v865, 0.088388346
    %v1649 = vmul.f32 %v870, 0.088388346
    %v1650 = vmul.f32 %v875, 0.088388346
    %v1651 = vmul.f32 %v945, 0.088388346
    %v1652 = vmul.f32 %v950, 0.088388346
    %v1653 = vmul.f32 %v955, 0.088388346
    %v1654 = vmul.f32 %v960, 0.088388346
    %v1655 = vmul.f32 %v965, 0.088388346
    %v1656 = vmul.f32 %v970, 0.088388346
    %v1657 = vmul.f32 %v975, 0.088388346
    %v1658 = vmul.f32 %v980, 0.088388346
    %v1659 = vmul.f32 %v985, 0.088388346
    %v1660 = vmul.f32 %v990, 0.088388346
    %v1661 = vmul.f32 %v995, 0.088388346
    %v1662 = vmul.f32 %v1000, 0.088388346
    %v1663 = vmul.f32 %v1005, 0.088388346
    %v1664 = vmul.f32 %v1010, 0.088388346
    %v1665 = vmul.f32 %v1015, 0.088388346
    %v1666 = vmul.f32 %v1020, 0.088388346
    %v1667 = vmul.f32 %v1090, 0.088388346
    %v1668 = vmul.f32 %v1095, 0.088388346
    %v1669 = vmul.f32 %v1100, 0.088388346
    %v1670 = vmul.f32 %v1105, 0.088388346
    %v1671 = vmul.f32 %v1110, 0.088388346
    %v1672 = vmul.f32 %v1115, 0.088388346
    %v1673 = vmul.f32 %v1120, 0.088388346
    %v1674 = vmul.f32 %v1125, 0.088388346
    %v1675 = vmul.f32 %v1130, 0.088388346
    %v1676 = vmul.f32 %v1135, 0.088388346
    %v1677 = vmul.f32 %v1140, 0.088388346
    %v1678 = vmul.f32 %v1145, 0.088388346
    %v1679 = vmul.f32 %v1150, 0.088388346
    %v1680 = vmul.f32 %v1155, 0.088388346
    %v1681 = vmul.f32 %v1160, 0.088388346
    %v1682 = vmul.f32 %v1165, 0.088388346
    %v1683 = vmul.f32 %v1235, 0.088388346
    %v1684 = vmul.f32 %v1240, 0.088388346
    %v1685 = vmul.f32 %v1245, 0.088388346
    %v1686 = vmul.f32 %v1250, 0.088388346
    %v1687 = vmul.f32 %v1255, 0.088388346
    %v1688 = vmul.f32 %v1260, 0.088388346
    %v1689 = vmul.f32 %v1265, 0.088388346
    %v1690 = vmul.f32 %v1270, 0.088388346
    %v1691 = vmul.f32 %v1275, 0.088388346
    %v1692 = vmul.f32 %v1280, 0.088388346
    %v1693 = vmul.f32 %v1285, 0.088388346
    %v1694 = vmul.f32 %v1290, 0.088388346
    %v1695 = vmul.f32 %v1295, 0.088388346
    %v1696 = vmul.f32 %v1300, 0.088388346
    %v1697 = vmul.f32 %v1305, 0.088388346
    %v1698 = vmul.f32 %v1310, 0.088388346
    %v1699 = vmul.f32 %v1380, 0.088388346
    %v1700 = vmul.f32 %v1385, 0.088388346
    %v1701 = vmul.f32 %v1390, 0.088388346
    %v1702 = vmul.f32 %v1395, 0.088388346
    %v1703 = vmul.f32 %v1400, 0.088388346
    %v1704 = vmul.f32 %v1405, 0.088388346
    %v1705 = vmul.f32 %v1410, 0.088388346
    %v1706 = vmul.f32 %v1415, 0.088388346
    %v1707 = vmul.f32 %v1420, 0.088388346
    %v1708 = vmul.f32 %v1425, 0.088388346
    %v1709 = vmul.f32 %v1430, 0.088388346
    %v1710 = vmul.f32 %v1435, 0.088388346
    %v1711 = vmul.f32 %v1440, 0.088388346
    %v1712 = vmul.f32 %v1445, 0.088388346
    %v1713 = vmul.f32 %v1450, 0.088388346
    %v1714 = vmul.f32 %v1455, 0.088388346
    %v1715 = vmul.f32 %v1525, 0.088388346
    %v1716 = vmul.f32 %v1530, 0.088388346
    %v1717 = vmul.f32 %v1535, 0.088388346
    %v1718 = vmul.f32 %v1540, 0.088388346
    %v1719 = vmul.f32 %v1545, 0.088388346
    %v1720 = vmul.f32 %v1550, 0.088388346
    %v1721 = vmul.f32 %v1555, 0.088388346
    %v1722 = vmul.f32 %v1560, 0.088388346
    %v1723 = vmul.f32 %v1565, 0.088388346
    %v1724 = vmul.f32 %v1570, 0.088388346
    %v1725 = vmul.f32 %v1575, 0.088388346
    %v1726 = vmul.f32 %v1580, 0.088388346
    %v1727 = vmul.f32 %v1585, 0.088388346
    %v1728 = vmul.f32 %v1590, 0.088388346
    %v1729 = vmul.f32 %v1595, 0.088388346
    %v1730 = vmul.f32 %v1600, 0.088388346
    %1731 = vmax.xlane.f32.xlu0 %v1603
    %v1732 = vpop.xlane.xlu0 %1731
    %1733 = vmax.xlane.f32.xlu0 %v1604
    %v1734 = vpop.xlane.xlu0 %1733
    %1735 = vmax.xlane.f32.xlu0 %v1605
    %v1736 = vpop.xlane.xlu0 %1735
    %1737 = vmax.xlane.f32.xlu0 %v1606
    %v1738 = vpop.xlane.xlu0 %1737
    %1739 = vmax.xlane.f32.xlu0 %v1607
    %v1740 = vpop.xlane.xlu0 %1739
    %1741 = vmax.xlane.f32.xlu0 %v1608
    %v1742 = vpop.xlane.xlu0 %1741
    %1743 = vmax.xlane.f32.xlu0 %v1609
    %v1744 = vpop.xlane.xlu0 %1743
    %1745 = vmax.xlane.f32.xlu0 %v1610
    %v1746 = vpop.xlane.xlu0 %1745
    %1747 = vmax.xlane.f32.xlu0 %v1611
    %v1748 = vpop.xlane.xlu0 %1747
    %1749 = vmax.xlane.f32.xlu0 %v1612
    %v1750 = vpop.xlane.xlu0 %1749
    %1751 = vmax.xlane.f32.xlu0 %v1613
    %v1752 = vpop.xlane.xlu0 %1751
    %1753 = vmax.xlane.f32.xlu0 %v1614
    %v1754 = vpop.xlane.xlu0 %1753
    %1755 = vmax.xlane.f32.xlu0 %v1615
    %v1756 = vpop.xlane.xlu0 %1755
    %1757 = vmax.xlane.f32.xlu0 %v1616
    %v1758 = vpop.xlane.xlu0 %1757
    %1759 = vmax.xlane.f32.xlu0 %v1617
    %v1760 = vpop.xlane.xlu0 %1759
    %1761 = vmax.xlane.f32.xlu0 %v1618
    %v1762 = vpop.xlane.xlu0 %1761
    %1763 = vmax.xlane.f32.xlu0 %v1619
    %v1764 = vpop.xlane.xlu0 %1763
    %1765 = vmax.xlane.f32.xlu0 %v1620
    %v1766 = vpop.xlane.xlu0 %1765
    %1767 = vmax.xlane.f32.xlu0 %v1621
    %v1768 = vpop.xlane.xlu0 %1767
    %1769 = vmax.xlane.f32.xlu0 %v1622
    %v1770 = vpop.xlane.xlu0 %1769
    %1771 = vmax.xlane.f32.xlu0 %v1623
    %v1772 = vpop.xlane.xlu0 %1771
    %1773 = vmax.xlane.f32.xlu0 %v1624
    %v1774 = vpop.xlane.xlu0 %1773
    %1775 = vmax.xlane.f32.xlu0 %v1625
    %v1776 = vpop.xlane.xlu0 %1775
    %1777 = vmax.xlane.f32.xlu0 %v1626
    %v1778 = vpop.xlane.xlu0 %1777
    %1779 = vmax.xlane.f32.xlu0 %v1627
    %v1780 = vpop.xlane.xlu0 %1779
    %1781 = vmax.xlane.f32.xlu0 %v1628
    %v1782 = vpop.xlane.xlu0 %1781
    %1783 = vmax.xlane.f32.xlu0 %v1629
    %v1784 = vpop.xlane.xlu0 %1783
    %1785 = vmax.xlane.f32.xlu0 %v1630
    %v1786 = vpop.xlane.xlu0 %1785
    %1787 = vmax.xlane.f32.xlu0 %v1631
    %v1788 = vpop.xlane.xlu0 %1787
    %1789 = vmax.xlane.f32.xlu0 %v1632
    %v1790 = vpop.xlane.xlu0 %1789
    %1791 = vmax.xlane.f32.xlu0 %v1633
    %v1792 = vpop.xlane.xlu0 %1791
    %1793 = vmax.xlane.f32.xlu0 %v1634
    %v1794 = vpop.xlane.xlu0 %1793
    %1795 = vmax.xlane.f32.xlu0 %v1635
    %v1796 = vpop.xlane.xlu0 %1795
    %1797 = vmax.xlane.f32.xlu0 %v1636
    %v1798 = vpop.xlane.xlu0 %1797
    %1799 = vmax.xlane.f32.xlu0 %v1637
    %v1800 = vpop.xlane.xlu0 %1799
    %1801 = vmax.xlane.f32.xlu0 %v1638
    %v1802 = vpop.xlane.xlu0 %1801
    %1803 = vmax.xlane.f32.xlu0 %v1639
    %v1804 = vpop.xlane.xlu0 %1803
    %1805 = vmax.xlane.f32.xlu0 %v1640
    %v1806 = vpop.xlane.xlu0 %1805
    %1807 = vmax.xlane.f32.xlu0 %v1641
    %v1808 = vpop.xlane.xlu0 %1807
    %1809 = vmax.xlane.f32.xlu0 %v1642
    %v1810 = vpop.xlane.xlu0 %1809
    %1811 = vmax.xlane.f32.xlu0 %v1643
    %v1812 = vpop.xlane.xlu0 %1811
    %1813 = vmax.xlane.f32.xlu0 %v1644
    %v1814 = vpop.xlane.xlu0 %1813
    %1815 = vmax.xlane.f32.xlu0 %v1645
    %v1816 = vpop.xlane.xlu0 %1815
    %1817 = vmax.xlane.f32.xlu0 %v1646
    %v1818 = vpop.xlane.xlu0 %1817
    %1819 = vmax.xlane.f32.xlu0 %v1647
    %v1820 = vpop.xlane.xlu0 %1819
    %1821 = vmax.xlane.f32.xlu0 %v1648
    %v1822 = vpop.xlane.xlu0 %1821
    %1823 = vmax.xlane.f32.xlu0 %v1649
    %v1824 = vpop.xlane.xlu0 %1823
    %1825 = vmax.xlane.f32.xlu0 %v1650
    %v1826 = vpop.xlane.xlu0 %1825
    %1827 = vmax.xlane.f32.xlu0 %v1651
    %v1828 = vpop.xlane.xlu0 %1827
    %1829 = vmax.xlane.f32.xlu0 %v1652
    %v1830 = vpop.xlane.xlu0 %1829
    %1831 = vmax.xlane.f32.xlu0 %v1653
    %v1832 = vpop.xlane.xlu0 %1831
    %1833 = vmax.xlane.f32.xlu0 %v1654
    %v1834 = vpop.xlane.xlu0 %1833
    %1835 = vmax.xlane.f32.xlu0 %v1655
    %v1836 = vpop.xlane.xlu0 %1835
    %1837 = vmax.xlane.f32.xlu0 %v1656
    %v1838 = vpop.xlane.xlu0 %1837
    %1839 = vmax.xlane.f32.xlu0 %v1657
    %v1840 = vpop.xlane.xlu0 %1839
    %1841 = vmax.xlane.f32.xlu0 %v1658
    %v1842 = vpop.xlane.xlu0 %1841
    %1843 = vmax.xlane.f32.xlu0 %v1659
    %v1844 = vpop.xlane.xlu0 %1843
    %1845 = vmax.xlane.f32.xlu0 %v1660
    %v1846 = vpop.xlane.xlu0 %1845
    %1847 = vmax.xlane.f32.xlu0 %v1661
    %v1848 = vpop.xlane.xlu0 %1847
    %1849 = vmax.xlane.f32.xlu0 %v1662
    %v1850 = vpop.xlane.xlu0 %1849
    %1851 = vmax.xlane.f32.xlu0 %v1663
    %v1852 = vpop.xlane.xlu0 %1851
    %1853 = vmax.xlane.f32.xlu0 %v1664
    %v1854 = vpop.xlane.xlu0 %1853
    %1855 = vmax.xlane.f32.xlu0 %v1665
    %v1856 = vpop.xlane.xlu0 %1855
    %1857 = vmax.xlane.f32.xlu0 %v1666
    %v1858 = vpop.xlane.xlu0 %1857
    %1859 = vmax.xlane.f32.xlu0 %v1667
    %v1860 = vpop.xlane.xlu0 %1859
    %1861 = vmax.xlane.f32.xlu0 %v1668
    %v1862 = vpop.xlane.xlu0 %1861
    %1863 = vmax.xlane.f32.xlu0 %v1669
    %v1864 = vpop.xlane.xlu0 %1863
    %1865 = vmax.xlane.f32.xlu0 %v1670
    %v1866 = vpop.xlane.xlu0 %1865
    %1867 = vmax.xlane.f32.xlu0 %v1671
    %v1868 = vpop.xlane.xlu0 %1867
    %1869 = vmax.xlane.f32.xlu0 %v1672
    %v1870 = vpop.xlane.xlu0 %1869
    %1871 = vmax.xlane.f32.xlu0 %v1673
    %v1872 = vpop.xlane.xlu0 %1871
    %1873 = vmax.xlane.f32.xlu0 %v1674
    %v1874 = vpop.xlane.xlu0 %1873
    %1875 = vmax.xlane.f32.xlu0 %v1675
    %v1876 = vpop.xlane.xlu0 %1875
    %1877 = vmax.xlane.f32.xlu0 %v1676
    %v1878 = vpop.xlane.xlu0 %1877
    %1879 = vmax.xlane.f32.xlu0 %v1677
    %v1880 = vpop.xlane.xlu0 %1879
    %1881 = vmax.xlane.f32.xlu0 %v1678
    %v1882 = vpop.xlane.xlu0 %1881
    %1883 = vmax.xlane.f32.xlu0 %v1679
    %v1884 = vpop.xlane.xlu0 %1883
    %1885 = vmax.xlane.f32.xlu0 %v1680
    %v1886 = vpop.xlane.xlu0 %1885
    %1887 = vmax.xlane.f32.xlu0 %v1681
    %v1888 = vpop.xlane.xlu0 %1887
    %1889 = vmax.xlane.f32.xlu0 %v1682
    %v1890 = vpop.xlane.xlu0 %1889
    %1891 = vmax.xlane.f32.xlu0 %v1683
    %v1892 = vpop.xlane.xlu0 %1891
    %1893 = vmax.xlane.f32.xlu0 %v1684
    %v1894 = vpop.xlane.xlu0 %1893
    %1895 = vmax.xlane.f32.xlu0 %v1685
    %v1896 = vpop.xlane.xlu0 %1895
    %1897 = vmax.xlane.f32.xlu0 %v1686
    %v1898 = vpop.xlane.xlu0 %1897
    %1899 = vmax.xlane.f32.xlu0 %v1687
    %v1900 = vpop.xlane.xlu0 %1899
    %1901 = vmax.xlane.f32.xlu0 %v1688
    %v1902 = vpop.xlane.xlu0 %1901
    %1903 = vmax.xlane.f32.xlu0 %v1689
    %v1904 = vpop.xlane.xlu0 %1903
    %1905 = vmax.xlane.f32.xlu0 %v1690
    %v1906 = vpop.xlane.xlu0 %1905
    %1907 = vmax.xlane.f32.xlu0 %v1691
    %v1908 = vpop.xlane.xlu0 %1907
    %1909 = vmax.xlane.f32.xlu0 %v1692
    %v1910 = vpop.xlane.xlu0 %1909
    %1911 = vmax.xlane.f32.xlu0 %v1693
    %v1912 = vpop.xlane.xlu0 %1911
    %1913 = vmax.xlane.f32.xlu0 %v1694
    %v1914 = vpop.xlane.xlu0 %1913
    %1915 = vmax.xlane.f32.xlu0 %v1695
    %v1916 = vpop.xlane.xlu0 %1915
    %1917 = vmax.xlane.f32.xlu0 %v1696
    %v1918 = vpop.xlane.xlu0 %1917
    %1919 = vmax.xlane.f32.xlu0 %v1697
    %v1920 = vpop.xlane.xlu0 %1919
    %1921 = vmax.xlane.f32.xlu0 %v1698
    %v1922 = vpop.xlane.xlu0 %1921
    %1923 = vmax.xlane.f32.xlu0 %v1699
    %v1924 = vpop.xlane.xlu0 %1923
    %1925 = vmax.xlane.f32.xlu0 %v1700
    %v1926 = vpop.xlane.xlu0 %1925
    %1927 = vmax.xlane.f32.xlu0 %v1701
    %v1928 = vpop.xlane.xlu0 %1927
    %1929 = vmax.xlane.f32.xlu0 %v1702
    %v1930 = vpop.xlane.xlu0 %1929
    %1931 = vmax.xlane.f32.xlu0 %v1703
    %v1932 = vpop.xlane.xlu0 %1931
    %1933 = vmax.xlane.f32.xlu0 %v1704
    %v1934 = vpop.xlane.xlu0 %1933
    %1935 = vmax.xlane.f32.xlu0 %v1705
    %v1936 = vpop.xlane.xlu0 %1935
    %1937 = vmax.xlane.f32.xlu0 %v1706
    %v1938 = vpop.xlane.xlu0 %1937
    %1939 = vmax.xlane.f32.xlu0 %v1707
    %v1940 = vpop.xlane.xlu0 %1939
    %1941 = vmax.xlane.f32.xlu0 %v1708
    %v1942 = vpop.xlane.xlu0 %1941
    %1943 = vmax.xlane.f32.xlu0 %v1709
    %v1944 = vpop.xlane.xlu0 %1943
    %1945 = vmax.xlane.f32.xlu0 %v1710
    %v1946 = vpop.xlane.xlu0 %1945
    %1947 = vmax.xlane.f32.xlu0 %v1711
    %v1948 = vpop.xlane.xlu0 %1947
    %1949 = vmax.xlane.f32.xlu0 %v1712
    %v1950 = vpop.xlane.xlu0 %1949
    %1951 = vmax.xlane.f32.xlu0 %v1713
    %v1952 = vpop.xlane.xlu0 %1951
    %1953 = vmax.xlane.f32.xlu0 %v1714
    %v1954 = vpop.xlane.xlu0 %1953
    %1955 = vmax.xlane.f32.xlu0 %v1715
    %v1956 = vpop.xlane.xlu0 %1955
    %1957 = vmax.xlane.f32.xlu0 %v1716
    %v1958 = vpop.xlane.xlu0 %1957
    %1959 = vmax.xlane.f32.xlu0 %v1717
    %v1960 = vpop.xlane.xlu0 %1959
    %1961 = vmax.xlane.f32.xlu0 %v1718
    %v1962 = vpop.xlane.xlu0 %1961
    %1963 = vmax.xlane.f32.xlu0 %v1719
    %v1964 = vpop.xlane.xlu0 %1963
    %1965 = vmax.xlane.f32.xlu0 %v1720
    %v1966 = vpop.xlane.xlu0 %1965
    %1967 = vmax.xlane.f32.xlu0 %v1721
    %v1968 = vpop.xlane.xlu0 %1967
    %1969 = vmax.xlane.f32.xlu0 %v1722
    %v1970 = vpop.xlane.xlu0 %1969
    %1971 = vmax.xlane.f32.xlu0 %v1723
    %v1972 = vpop.xlane.xlu0 %1971
    %1973 = vmax.xlane.f32.xlu0 %v1724
    %v1974 = vpop.xlane.xlu0 %1973
    %1975 = vmax.xlane.f32.xlu0 %v1725
    %v1976 = vpop.xlane.xlu0 %1975
    %1977 = vmax.xlane.f32.xlu0 %v1726
    %v1978 = vpop.xlane.xlu0 %1977
    %1979 = vmax.xlane.f32.xlu0 %v1727
    %v1980 = vpop.xlane.xlu0 %1979
    %1981 = vmax.xlane.f32.xlu0 %v1728
    %v1982 = vpop.xlane.xlu0 %1981
    %1983 = vmax.xlane.f32.xlu0 %v1729
    %v1984 = vpop.xlane.xlu0 %1983
    %1985 = vmax.xlane.f32.xlu0 %v1730
    %v1986 = vpop.xlane.xlu0 %1985
    %v1987 = vsub.f32 %v1603, %v1732
    %v1988 = vsub.f32 %v1604, %v1734
    %v1989 = vsub.f32 %v1605, %v1736
    %v1990 = vsub.f32 %v1606, %v1738
    %v1991 = vsub.f32 %v1607, %v1740
    %v1992 = vsub.f32 %v1608, %v1742
    %v1993 = vsub.f32 %v1609, %v1744
    %v1994 = vsub.f32 %v1610, %v1746
    %v1995 = vsub.f32 %v1611, %v1748
    %v1996 = vsub.f32 %v1612, %v1750
    %v1997 = vsub.f32 %v1613, %v1752
    %v1998 = vsub.f32 %v1614, %v1754
    %v1999 = vsub.f32 %v1615, %v1756
    %v2000 = vsub.f32 %v1616, %v1758
    %v2001 = vsub.f32 %v1617, %v1760
    %v2002 = vsub.f32 %v1618, %v1762
    %v2003 = vsub.f32 %v1619, %v1764
    %v2004 = vsub.f32 %v1620, %v1766
    %v2005 = vsub.f32 %v1621, %v1768
    %v2006 = vsub.f32 %v1622, %v1770
    %v2007 = vsub.f32 %v1623, %v1772
    %v2008 = vsub.f32 %v1624, %v1774
    %v2009 = vsub.f32 %v1625, %v1776
    %v2010 = vsub.f32 %v1626, %v1778
    %v2011 = vsub.f32 %v1627, %v1780
    %v2012 = vsub.f32 %v1628, %v1782
    %v2013 = vsub.f32 %v1629, %v1784
    %v2014 = vsub.f32 %v1630, %v1786
    %v2015 = vsub.f32 %v1631, %v1788
    %v2016 = vsub.f32 %v1632, %v1790
    %v2017 = vsub.f32 %v1633, %v1792
    %v2018 = vsub.f32 %v1634, %v1794
    %v2019 = vsub.f32 %v1635, %v1796
    %v2020 = vsub.f32 %v1636, %v1798
    %v2021 = vsub.f32 %v1637, %v1800
    %v2022 = vsub.f32 %v1638, %v1802
    %v2023 = vsub.f32 %v1639, %v1804
    %v2024 = vsub.f32 %v1640, %v1806
    %v2025 = vsub.f32 %v1641, %v1808
    %v2026 = vsub.f32 %v1642, %v1810
    %v2027 = vsub.f32 %v1643, %v1812
    %v2028 = vsub.f32 %v1644, %v1814
    %v2029 = vsub.f32 %v1645, %v1816
    %v2030 = vsub.f32 %v1646, %v1818
    %v2031 = vsub.f32 %v1647, %v1820
    %v2032 = vsub.f32 %v1648, %v1822
    %v2033 = vsub.f32 %v1649, %v1824
    %v2034 = vsub.f32 %v1650, %v1826
    %v2035 = vsub.f32 %v1651, %v1828
    %v2036 = vsub.f32 %v1652, %v1830
    %v2037 = vsub.f32 %v1653, %v1832
    %v2038 = vsub.f32 %v1654, %v1834
    %v2039 = vsub.f32 %v1655, %v1836
    %v2040 = vsub.f32 %v1656, %v1838
    %v2041 = vsub.f32 %v1657, %v1840
    %v2042 = vsub.f32 %v1658, %v1842
    %v2043 = vsub.f32 %v1659, %v1844
    %v2044 = vsub.f32 %v1660, %v1846
    %v2045 = vsub.f32 %v1661, %v1848
    %v2046 = vsub.f32 %v1662, %v1850
    %v2047 = vsub.f32 %v1663, %v1852
    %v2048 = vsub.f32 %v1664, %v1854
    %v2049 = vsub.f32 %v1665, %v1856
    %v2050 = vsub.f32 %v1666, %v1858
    %v2051 = vsub.f32 %v1667, %v1860
    %v2052 = vsub.f32 %v1668, %v1862
    %v2053 = vsub.f32 %v1669, %v1864
    %v2054 = vsub.f32 %v1670, %v1866
    %v2055 = vsub.f32 %v1671, %v1868
    %v2056 = vsub.f32 %v1672, %v1870
    %v2057 = vsub.f32 %v1673, %v1872
    %v2058 = vsub.f32 %v1674, %v1874
    %v2059 = vsub.f32 %v1675, %v1876
    %v2060 = vsub.f32 %v1676, %v1878
    %v2061 = vsub.f32 %v1677, %v1880
    %v2062 = vsub.f32 %v1678, %v1882
    %v2063 = vsub.f32 %v1679, %v1884
    %v2064 = vsub.f32 %v1680, %v1886
    %v2065 = vsub.f32 %v1681, %v1888
    %v2066 = vsub.f32 %v1682, %v1890
    %v2067 = vsub.f32 %v1683, %v1892
    %v2068 = vsub.f32 %v1684, %v1894
    %v2069 = vsub.f32 %v1685, %v1896
    %v2070 = vsub.f32 %v1686, %v1898
    %v2071 = vsub.f32 %v1687, %v1900
    %v2072 = vsub.f32 %v1688, %v1902
    %v2073 = vsub.f32 %v1689, %v1904
    %v2074 = vsub.f32 %v1690, %v1906
    %v2075 = vsub.f32 %v1691, %v1908
    %v2076 = vsub.f32 %v1692, %v1910
    %v2077 = vsub.f32 %v1693, %v1912
    %v2078 = vsub.f32 %v1694, %v1914
    %v2079 = vsub.f32 %v1695, %v1916
    %v2080 = vsub.f32 %v1696, %v1918
    %v2081 = vsub.f32 %v1697, %v1920
    %v2082 = vsub.f32 %v1698, %v1922
    %v2083 = vsub.f32 %v1699, %v1924
    %v2084 = vsub.f32 %v1700, %v1926
    %v2085 = vsub.f32 %v1701, %v1928
    %v2086 = vsub.f32 %v1702, %v1930
    %v2087 = vsub.f32 %v1703, %v1932
    %v2088 = vsub.f32 %v1704, %v1934
    %v2089 = vsub.f32 %v1705, %v1936
    %v2090 = vsub.f32 %v1706, %v1938
    %v2091 = vsub.f32 %v1707, %v1940
    %v2092 = vsub.f32 %v1708, %v1942
    %v2093 = vsub.f32 %v1709, %v1944
    %v2094 = vsub.f32 %v1710, %v1946
    %v2095 = vsub.f32 %v1711, %v1948
    %v2096 = vsub.f32 %v1712, %v1950
    %v2097 = vsub.f32 %v1713, %v1952
    %v2098 = vsub.f32 %v1714, %v1954
    %v2099 = vsub.f32 %v1715, %v1956
    %v2100 = vsub.f32 %v1716, %v1958
    %v2101 = vsub.f32 %v1717, %v1960
    %v2102 = vsub.f32 %v1718, %v1962
    %v2103 = vsub.f32 %v1719, %v1964
    %v2104 = vsub.f32 %v1720, %v1966
    %v2105 = vsub.f32 %v1721, %v1968
    %v2106 = vsub.f32 %v1722, %v1970
    %v2107 = vsub.f32 %v1723, %v1972
    %v2108 = vsub.f32 %v1724, %v1974
    %v2109 = vsub.f32 %v1725, %v1976
    %v2110 = vsub.f32 %v1726, %v1978
    %v2111 = vsub.f32 %v1727, %v1980
    %v2112 = vsub.f32 %v1728, %v1982
    %v2113 = vsub.f32 %v1729, %v1984
    %v2114 = vsub.f32 %v1730, %v1986
    %v2115 = vmul.f32 %v1987, 1.442695
    %v2116 = vpow.pop %v2115
    %v2117 = vmul.f32 %v1988, 1.442695
    %v2118 = vpow.pop %v2117
    %v2119 = vmul.f32 %v1989, 1.442695
    %v2120 = vpow.pop %v2119
    %v2121 = vmul.f32 %v1990, 1.442695
    %v2122 = vpow.pop %v2121
    %v2123 = vmul.f32 %v1991, 1.442695
    %v2124 = vpow.pop %v2123
    %v2125 = vmul.f32 %v1992, 1.442695
    %v2126 = vpow.pop %v2125
    %v2127 = vmul.f32 %v1993, 1.442695
    %v2128 = vpow.pop %v2127
    %v2129 = vmul.f32 %v1994, 1.442695
    %v2130 = vpow.pop %v2129
    %v2131 = vmul.f32 %v1995, 1.442695
    %v2132 = vpow.pop %v2131
    %v2133 = vmul.f32 %v1996, 1.442695
    %v2134 = vpow.pop %v2133
    %v2135 = vmul.f32 %v1997, 1.442695
    %v2136 = vpow.pop %v2135
    %v2137 = vmul.f32 %v1998, 1.442695
    %v2138 = vpow.pop %v2137
    %v2139 = vmul.f32 %v1999, 1.442695
    %v2140 = vpow.pop %v2139
    %v2141 = vmul.f32 %v2000, 1.442695
    %v2142 = vpow.pop %v2141
    %v2143 = vmul.f32 %v2001, 1.442695
    %v2144 = vpow.pop %v2143
    %v2145 = vmul.f32 %v2002, 1.442695
    %v2146 = vpow.pop %v2145
    %v2147 = vmul.f32 %v2003, 1.442695
    %v2148 = vpow.pop %v2147
    %v2149 = vmul.f32 %v2004, 1.442695
    %v2150 = vpow.pop %v2149
    %v2151 = vmul.f32 %v2005, 1.442695
    %v2152 = vpow.pop %v2151
    %v2153 = vmul.f32 %v2006, 1.442695
    %v2154 = vpow.pop %v2153
    %v2155 = vmul.f32 %v2007, 1.442695
    %v2156 = vpow.pop %v2155
    %v2157 = vmul.f32 %v2008, 1.442695
    %v2158 = vpow.pop %v2157
    %v2159 = vmul.f32 %v2009, 1.442695
    %v2160 = vpow.pop %v2159
    %v2161 = vmul.f32 %v2010, 1.442695
    %v2162 = vpow.pop %v2161
    %v2163 = vmul.f32 %v2011, 1.442695
    %v2164 = vpow.pop %v2163
    %v2165 = vmul.f32 %v2012, 1.442695
    %v2166 = vpow.pop %v2165
    %v2167 = vmul.f32 %v2013, 1.442695
    %v2168 = vpow.pop %v2167
    %v2169 = vmul.f32 %v2014, 1.442695
    %v2170 = vpow.pop %v2169
    %v2171 = vmul.f32 %v2015, 1.442695
    %v2172 = vpow.pop %v2171
    %v2173 = vmul.f32 %v2016, 1.442695
    %v2174 = vpow.pop %v2173
    %v2175 = vmul.f32 %v2017, 1.442695
    %v2176 = vpow.pop %v2175
    %v2177 = vmul.f32 %v2018, 1.442695
    %v2178 = vpow.pop %v2177
    %v2179 = vmul.f32 %v2019, 1.442695
    %v2180 = vpow.pop %v2179
    %v2181 = vmul.f32 %v2020, 1.442695
    %v2182 = vpow.pop %v2181
    %v2183 = vmul.f32 %v2021, 1.442695
    %v2184 = vpow.pop %v2183
    %v2185 = vmul.f32 %v2022, 1.442695
    %v2186 = vpow.pop %v2185
    %v2187 = vmul.f32 %v2023, 1.442695
    %v2188 = vpow.pop %v2187
    %v2189 = vmul.f32 %v2024, 1.442695
    %v2190 = vpow.pop %v2189
    %v2191 = vmul.f32 %v2025, 1.442695
    %v2192 = vpow.pop %v2191
    %v2193 = vmul.f32 %v2026, 1.442695
    %v2194 = vpow.pop %v2193
    %v2195 = vmul.f32 %v2027, 1.442695
    %v2196 = vpow.pop %v2195
    %v2197 = vmul.f32 %v2028, 1.442695
    %v2198 = vpow.pop %v2197
    %v2199 = vmul.f32 %v2029, 1.442695
    %v2200 = vpow.pop %v2199
    %v2201 = vmul.f32 %v2030, 1.442695
    %v2202 = vpow.pop %v2201
    %v2203 = vmul.f32 %v2031, 1.442695
    %v2204 = vpow.pop %v2203
    %v2205 = vmul.f32 %v2032, 1.442695
    %v2206 = vpow.pop %v2205
    %v2207 = vmul.f32 %v2033, 1.442695
    %v2208 = vpow.pop %v2207
    %v2209 = vmul.f32 %v2034, 1.442695
    %v2210 = vpow.pop %v2209
    %v2211 = vmul.f32 %v2035, 1.442695
    %v2212 = vpow.pop %v2211
    %v2213 = vmul.f32 %v2036, 1.442695
    %v2214 = vpow.pop %v2213
    %v2215 = vmul.f32 %v2037, 1.442695
    %v2216 = vpow.pop %v2215
    %v2217 = vmul.f32 %v2038, 1.442695
    %v2218 = vpow.pop %v2217
    %v2219 = vmul.f32 %v2039, 1.442695
    %v2220 = vpow.pop %v2219
    %v2221 = vmul.f32 %v2040, 1.442695
    %v2222 = vpow.pop %v2221
    %v2223 = vmul.f32 %v2041, 1.442695
    %v2224 = vpow.pop %v2223
    %v2225 = vmul.f32 %v2042, 1.442695
    %v2226 = vpow.pop %v2225
    %v2227 = vmul.f32 %v2043, 1.442695
    %v2228 = vpow.pop %v2227
    %v2229 = vmul.f32 %v2044, 1.442695
    %v2230 = vpow.pop %v2229
    %v2231 = vmul.f32 %v2045, 1.442695
    %v2232 = vpow.pop %v2231
    %v2233 = vmul.f32 %v2046, 1.442695
    %v2234 = vpow.pop %v2233
    %v2235 = vmul.f32 %v2047, 1.442695
    %v2236 = vpow.pop %v2235
    %v2237 = vmul.f32 %v2048, 1.442695
    %v2238 = vpow.pop %v2237
    %v2239 = vmul.f32 %v2049, 1.442695
    %v2240 = vpow.pop %v2239
    %v2241 = vmul.f32 %v2050, 1.442695
    %v2242 = vpow.pop %v2241
    %v2243 = vmul.f32 %v2051, 1.442695
    %v2244 = vpow.pop %v2243
    %v2245 = vmul.f32 %v2052, 1.442695
    %v2246 = vpow.pop %v2245
    %v2247 = vmul.f32 %v2053, 1.442695
    %v2248 = vpow.pop %v2247
    %v2249 = vmul.f32 %v2054, 1.442695
    %v2250 = vpow.pop %v2249
    %v2251 = vmul.f32 %v2055, 1.442695
    %v2252 = vpow.pop %v2251
    %v2253 = vmul.f32 %v2056, 1.442695
    %v2254 = vpow.pop %v2253
    %v2255 = vmul.f32 %v2057, 1.442695
    %v2256 = vpow.pop %v2255
    %v2257 = vmul.f32 %v2058, 1.442695
    %v2258 = vpow.pop %v2257
    %v2259 = vmul.f32 %v2059, 1.442695
    %v2260 = vpow.pop %v2259
    %v2261 = vmul.f32 %v2060, 1.442695
    %v2262 = vpow.pop %v2261
    %v2263 = vmul.f32 %v2061, 1.442695
    %v2264 = vpow.pop %v2263
    %v2265 = vmul.f32 %v2062, 1.442695
    %v2266 = vpow.pop %v2265
    %v2267 = vmul.f32 %v2063, 1.442695
    %v2268 = vpow.pop %v2267
    %v2269 = vmul.f32 %v2064, 1.442695
    %v2270 = vpow.pop %v2269
    %v2271 = vmul.f32 %v2065, 1.442695
    %v2272 = vpow.pop %v2271
    %v2273 = vmul.f32 %v2066, 1.442695
    %v2274 = vpow.pop %v2273
    %v2275 = vmul.f32 %v2067, 1.442695
    %v2276 = vpow.pop %v2275
    %v2277 = vmul.f32 %v2068, 1.442695
    %v2278 = vpow.pop %v2277
    %v2279 = vmul.f32 %v2069, 1.442695
    %v2280 = vpow.pop %v2279
    %v2281 = vmul.f32 %v2070, 1.442695
    %v2282 = vpow.pop %v2281
    %v2283 = vmul.f32 %v2071, 1.442695
    %v2284 = vpow.pop %v2283
    %v2285 = vmul.f32 %v2072, 1.442695
    %v2286 = vpow.pop %v2285
    %v2287 = vmul.f32 %v2073, 1.442695
    %v2288 = vpow.pop %v2287
    %v2289 = vmul.f32 %v2074, 1.442695
    %v2290 = vpow.pop %v2289
    %v2291 = vmul.f32 %v2075, 1.442695
    %v2292 = vpow.pop %v2291
    %v2293 = vmul.f32 %v2076, 1.442695
    %v2294 = vpow.pop %v2293
    %v2295 = vmul.f32 %v2077, 1.442695
    %v2296 = vpow.pop %v2295
    %v2297 = vmul.f32 %v2078, 1.442695
    %v2298 = vpow.pop %v2297
    %v2299 = vmul.f32 %v2079, 1.442695
    %v2300 = vpow.pop %v2299
    %v2301 = vmul.f32 %v2080, 1.442695
    %v2302 = vpow.pop %v2301
    %v2303 = vmul.f32 %v2081, 1.442695
    %v2304 = vpow.pop %v2303
    %v2305 = vmul.f32 %v2082, 1.442695
    %v2306 = vpow.pop %v2305
    %v2307 = vmul.f32 %v2083, 1.442695
    %v2308 = vpow.pop %v2307
    %v2309 = vmul.f32 %v2084, 1.442695
    %v2310 = vpow.pop %v2309
    %v2311 = vmul.f32 %v2085, 1.442695
    %v2312 = vpow.pop %v2311
    %v2313 = vmul.f32 %v2086, 1.442695
    %v2314 = vpow.pop %v2313
    %v2315 = vmul.f32 %v2087, 1.442695
    %v2316 = vpow.pop %v2315
    %v2317 = vmul.f32 %v2088, 1.442695
    %v2318 = vpow.pop %v2317
    %v2319 = vmul.f32 %v2089, 1.442695
    %v2320 = vpow.pop %v2319
    %v2321 = vmul.f32 %v2090, 1.442695
    %v2322 = vpow.pop %v2321
    %v2323 = vmul.f32 %v2091, 1.442695
    %v2324 = vpow.pop %v2323
    %v2325 = vmul.f32 %v2092, 1.442695
    %v2326 = vpow.pop %v2325
    %v2327 = vmul.f32 %v2093, 1.442695
    %v2328 = vpow.pop %v2327
    %v2329 = vmul.f32 %v2094, 1.442695
    %v2330 = vpow.pop %v2329
    %v2331 = vmul.f32 %v2095, 1.442695
    %v2332 = vpow.pop %v2331
    %v2333 = vmul.f32 %v2096, 1.442695
    %v2334 = vpow.pop %v2333
    %v2335 = vmul.f32 %v2097, 1.442695
    %v2336 = vpow.pop %v2335
    %v2337 = vmul.f32 %v2098, 1.442695
    %v2338 = vpow.pop %v2337
    %v2339 = vmul.f32 %v2099, 1.442695
    %v2340 = vpow.pop %v2339
    %v2341 = vmul.f32 %v2100, 1.442695
    %v2342 = vpow.pop %v2341
    %v2343 = vmul.f32 %v2101, 1.442695
    %v2344 = vpow.pop %v2343
    %v2345 = vmul.f32 %v2102, 1.442695
    %v2346 = vpow.pop %v2345
    %v2347 = vmul.f32 %v2103, 1.442695
    %v2348 = vpow.pop %v2347
    %v2349 = vmul.f32 %v2104, 1.442695
    %v2350 = vpow.pop %v2349
    %v2351 = vmul.f32 %v2105, 1.442695
    %v2352 = vpow.pop %v2351
    %v2353 = vmul.f32 %v2106, 1.442695
    %v2354 = vpow.pop %v2353
    %v2355 = vmul.f32 %v2107, 1.442695
    %v2356 = vpow.pop %v2355
    %v2357 = vmul.f32 %v2108, 1.442695
    %v2358 = vpow.pop %v2357
    %v2359 = vmul.f32 %v2109, 1.442695
    %v2360 = vpow.pop %v2359
    %v2361 = vmul.f32 %v2110, 1.442695
    %v2362 = vpow.pop %v2361
    %v2363 = vmul.f32 %v2111, 1.442695
    %v2364 = vpow.pop %v2363
    %v2365 = vmul.f32 %v2112, 1.442695
    %v2366 = vpow.pop %v2365
    %v2367 = vmul.f32 %v2113, 1.442695
    %v2368 = vpow.pop %v2367
    %v2369 = vmul.f32 %v2114, 1.442695
    %v2370 = vpow.pop %v2369
    %2371 = vadd.xlane.f32.xlu0 %v2116
    %v2372 = vpop.xlane.xlu0 %2371
    %2373 = vadd.xlane.f32.xlu0 %v2118
    %v2374 = vpop.xlane.xlu0 %2373
    %2375 = vadd.xlane.f32.xlu0 %v2120
    %v2376 = vpop.xlane.xlu0 %2375
    %2377 = vadd.xlane.f32.xlu0 %v2122
    %v2378 = vpop.xlane.xlu0 %2377
    %2379 = vadd.xlane.f32.xlu0 %v2124
    %v2380 = vpop.xlane.xlu0 %2379
    %2381 = vadd.xlane.f32.xlu0 %v2126
    %v2382 = vpop.xlane.xlu0 %2381
    %2383 = vadd.xlane.f32.xlu0 %v2128
    %v2384 = vpop.xlane.xlu0 %2383
    %2385 = vadd.xlane.f32.xlu0 %v2130
    %v2386 = vpop.xlane.xlu0 %2385
    %2387 = vadd.xlane.f32.xlu0 %v2132
    %v2388 = vpop.xlane.xlu0 %2387
    %2389 = vadd.xlane.f32.xlu0 %v2134
    %v2390 = vpop.xlane.xlu0 %2389
    %2391 = vadd.xlane.f32.xlu0 %v2136
    %v2392 = vpop.xlane.xlu0 %2391
    %2393 = vadd.xlane.f32.xlu0 %v2138
    %v2394 = vpop.xlane.xlu0 %2393
    %2395 = vadd.xlane.f32.xlu0 %v2140
    %v2396 = vpop.xlane.xlu0 %2395
    %2397 = vadd.xlane.f32.xlu0 %v2142
    %v2398 = vpop.xlane.xlu0 %2397
    %2399 = vadd.xlane.f32.xlu0 %v2144
    %v2400 = vpop.xlane.xlu0 %2399
    %2401 = vadd.xlane.f32.xlu0 %v2146
    %v2402 = vpop.xlane.xlu0 %2401
    %2403 = vadd.xlane.f32.xlu0 %v2148
    %v2404 = vpop.xlane.xlu0 %2403
    %2405 = vadd.xlane.f32.xlu0 %v2150
    %v2406 = vpop.xlane.xlu0 %2405
    %2407 = vadd.xlane.f32.xlu0 %v2152
    %v2408 = vpop.xlane.xlu0 %2407
    %2409 = vadd.xlane.f32.xlu0 %v2154
    %v2410 = vpop.xlane.xlu0 %2409
    %2411 = vadd.xlane.f32.xlu0 %v2156
    %v2412 = vpop.xlane.xlu0 %2411
    %2413 = vadd.xlane.f32.xlu0 %v2158
    %v2414 = vpop.xlane.xlu0 %2413
    %2415 = vadd.xlane.f32.xlu0 %v2160
    %v2416 = vpop.xlane.xlu0 %2415
    %2417 = vadd.xlane.f32.xlu0 %v2162
    %v2418 = vpop.xlane.xlu0 %2417
    %2419 = vadd.xlane.f32.xlu0 %v2164
    %v2420 = vpop.xlane.xlu0 %2419
    %2421 = vadd.xlane.f32.xlu0 %v2166
    %v2422 = vpop.xlane.xlu0 %2421
    %2423 = vadd.xlane.f32.xlu0 %v2168
    %v2424 = vpop.xlane.xlu0 %2423
    %2425 = vadd.xlane.f32.xlu0 %v2170
    %v2426 = vpop.xlane.xlu0 %2425
    %2427 = vadd.xlane.f32.xlu0 %v2172
    %v2428 = vpop.xlane.xlu0 %2427
    %2429 = vadd.xlane.f32.xlu0 %v2174
    %v2430 = vpop.xlane.xlu0 %2429
    %2431 = vadd.xlane.f32.xlu0 %v2176
    %v2432 = vpop.xlane.xlu0 %2431
    %2433 = vadd.xlane.f32.xlu0 %v2178
    %v2434 = vpop.xlane.xlu0 %2433
    %2435 = vadd.xlane.f32.xlu0 %v2180
    %v2436 = vpop.xlane.xlu0 %2435
    %2437 = vadd.xlane.f32.xlu0 %v2182
    %v2438 = vpop.xlane.xlu0 %2437
    %2439 = vadd.xlane.f32.xlu0 %v2184
    %v2440 = vpop.xlane.xlu0 %2439
    %2441 = vadd.xlane.f32.xlu0 %v2186
    %v2442 = vpop.xlane.xlu0 %2441
    %2443 = vadd.xlane.f32.xlu0 %v2188
    %v2444 = vpop.xlane.xlu0 %2443
    %2445 = vadd.xlane.f32.xlu0 %v2190
    %v2446 = vpop.xlane.xlu0 %2445
    %2447 = vadd.xlane.f32.xlu0 %v2192
    %v2448 = vpop.xlane.xlu0 %2447
    %2449 = vadd.xlane.f32.xlu0 %v2194
    %v2450 = vpop.xlane.xlu0 %2449
    %2451 = vadd.xlane.f32.xlu0 %v2196
    %v2452 = vpop.xlane.xlu0 %2451
    %2453 = vadd.xlane.f32.xlu0 %v2198
    %v2454 = vpop.xlane.xlu0 %2453
    %2455 = vadd.xlane.f32.xlu0 %v2200
    %v2456 = vpop.xlane.xlu0 %2455
    %2457 = vadd.xlane.f32.xlu0 %v2202
    %v2458 = vpop.xlane.xlu0 %2457
    %2459 = vadd.xlane.f32.xlu0 %v2204
    %v2460 = vpop.xlane.xlu0 %2459
    %2461 = vadd.xlane.f32.xlu0 %v2206
    %v2462 = vpop.xlane.xlu0 %2461
    %2463 = vadd.xlane.f32.xlu0 %v2208
    %v2464 = vpop.xlane.xlu0 %2463
    %2465 = vadd.xlane.f32.xlu0 %v2210
    %v2466 = vpop.xlane.xlu0 %2465
    %2467 = vadd.xlane.f32.xlu0 %v2212
    %v2468 = vpop.xlane.xlu0 %2467
    %2469 = vadd.xlane.f32.xlu0 %v2214
    %v2470 = vpop.xlane.xlu0 %2469
    %2471 = vadd.xlane.f32.xlu0 %v2216
    %v2472 = vpop.xlane.xlu0 %2471
    %2473 = vadd.xlane.f32.xlu0 %v2218
    %v2474 = vpop.xlane.xlu0 %2473
    %2475 = vadd.xlane.f32.xlu0 %v2220
    %v2476 = vpop.xlane.xlu0 %2475
    %2477 = vadd.xlane.f32.xlu0 %v2222
    %v2478 = vpop.xlane.xlu0 %2477
    %2479 = vadd.xlane.f32.xlu0 %v2224
    %v2480 = vpop.xlane.xlu0 %2479
    %2481 = vadd.xlane.f32.xlu0 %v2226
    %v2482 = vpop.xlane.xlu0 %2481
    %2483 = vadd.xlane.f32.xlu0 %v2228
    %v2484 = vpop.xlane.xlu0 %2483
    %2485 = vadd.xlane.f32.xlu0 %v2230
    %v2486 = vpop.xlane.xlu0 %2485
    %2487 = vadd.xlane.f32.xlu0 %v2232
    %v2488 = vpop.xlane.xlu0 %2487
    %2489 = vadd.xlane.f32.xlu0 %v2234
    %v2490 = vpop.xlane.xlu0 %2489
    %2491 = vadd.xlane.f32.xlu0 %v2236
    %v2492 = vpop.xlane.xlu0 %2491
    %2493 = vadd.xlane.f32.xlu0 %v2238
    %v2494 = vpop.xlane.xlu0 %2493
    %2495 = vadd.xlane.f32.xlu0 %v2240
    %v2496 = vpop.xlane.xlu0 %2495
    %2497 = vadd.xlane.f32.xlu0 %v2242
    %v2498 = vpop.xlane.xlu0 %2497
    %2499 = vadd.xlane.f32.xlu0 %v2244
    %v2500 = vpop.xlane.xlu0 %2499
    %2501 = vadd.xlane.f32.xlu0 %v2246
    %v2502 = vpop.xlane.xlu0 %2501
    %2503 = vadd.xlane.f32.xlu0 %v2248
    %v2504 = vpop.xlane.xlu0 %2503
    %2505 = vadd.xlane.f32.xlu0 %v2250
    %v2506 = vpop.xlane.xlu0 %2505
    %2507 = vadd.xlane.f32.xlu0 %v2252
    %v2508 = vpop.xlane.xlu0 %2507
    %2509 = vadd.xlane.f32.xlu0 %v2254
    %v2510 = vpop.xlane.xlu0 %2509
    %2511 = vadd.xlane.f32.xlu0 %v2256
    %v2512 = vpop.xlane.xlu0 %2511
    %2513 = vadd.xlane.f32.xlu0 %v2258
    %v2514 = vpop.xlane.xlu0 %2513
    %2515 = vadd.xlane.f32.xlu0 %v2260
    %v2516 = vpop.xlane.xlu0 %2515
    %2517 = vadd.xlane.f32.xlu0 %v2262
    %v2518 = vpop.xlane.xlu0 %2517
    %2519 = vadd.xlane.f32.xlu0 %v2264
    %v2520 = vpop.xlane.xlu0 %2519
    %2521 = vadd.xlane.f32.xlu0 %v2266
    %v2522 = vpop.xlane.xlu0 %2521
    %2523 = vadd.xlane.f32.xlu0 %v2268
    %v2524 = vpop.xlane.xlu0 %2523
    %2525 = vadd.xlane.f32.xlu0 %v2270
    %v2526 = vpop.xlane.xlu0 %2525
    %2527 = vadd.xlane.f32.xlu0 %v2272
    %v2528 = vpop.xlane.xlu0 %2527
    %2529 = vadd.xlane.f32.xlu0 %v2274
    %v2530 = vpop.xlane.xlu0 %2529
    %2531 = vadd.xlane.f32.xlu0 %v2276
    %v2532 = vpop.xlane.xlu0 %2531
    %2533 = vadd.xlane.f32.xlu0 %v2278
    %v2534 = vpop.xlane.xlu0 %2533
    %2535 = vadd.xlane.f32.xlu0 %v2280
    %v2536 = vpop.xlane.xlu0 %2535
    %2537 = vadd.xlane.f32.xlu0 %v2282
    %v2538 = vpop.xlane.xlu0 %2537
    %2539 = vadd.xlane.f32.xlu0 %v2284
    %v2540 = vpop.xlane.xlu0 %2539
    %2541 = vadd.xlane.f32.xlu0 %v2286
    %v2542 = vpop.xlane.xlu0 %2541
    %2543 = vadd.xlane.f32.xlu0 %v2288
    %v2544 = vpop.xlane.xlu0 %2543
    %2545 = vadd.xlane.f32.xlu0 %v2290
    %v2546 = vpop.xlane.xlu0 %2545
    %2547 = vadd.xlane.f32.xlu0 %v2292
    %v2548 = vpop.xlane.xlu0 %2547
    %2549 = vadd.xlane.f32.xlu0 %v2294
    %v2550 = vpop.xlane.xlu0 %2549
    %2551 = vadd.xlane.f32.xlu0 %v2296
    %v2552 = vpop.xlane.xlu0 %2551
    %2553 = vadd.xlane.f32.xlu0 %v2298
    %v2554 = vpop.xlane.xlu0 %2553
    %2555 = vadd.xlane.f32.xlu0 %v2300
    %v2556 = vpop.xlane.xlu0 %2555
    %2557 = vadd.xlane.f32.xlu0 %v2302
    %v2558 = vpop.xlane.xlu0 %2557
    %2559 = vadd.xlane.f32.xlu0 %v2304
    %v2560 = vpop.xlane.xlu0 %2559
    %2561 = vadd.xlane.f32.xlu0 %v2306
    %v2562 = vpop.xlane.xlu0 %2561
    %2563 = vadd.xlane.f32.xlu0 %v2308
    %v2564 = vpop.xlane.xlu0 %2563
    %2565 = vadd.xlane.f32.xlu0 %v2310
    %v2566 = vpop.xlane.xlu0 %2565
    %2567 = vadd.xlane.f32.xlu0 %v2312
    %v2568 = vpop.xlane.xlu0 %2567
    %2569 = vadd.xlane.f32.xlu0 %v2314
    %v2570 = vpop.xlane.xlu0 %2569
    %2571 = vadd.xlane.f32.xlu0 %v2316
    %v2572 = vpop.xlane.xlu0 %2571
    %2573 = vadd.xlane.f32.xlu0 %v2318
    %v2574 = vpop.xlane.xlu0 %2573
    %2575 = vadd.xlane.f32.xlu0 %v2320
    %v2576 = vpop.xlane.xlu0 %2575
    %2577 = vadd.xlane.f32.xlu0 %v2322
    %v2578 = vpop.xlane.xlu0 %2577
    %2579 = vadd.xlane.f32.xlu0 %v2324
    %v2580 = vpop.xlane.xlu0 %2579
    %2581 = vadd.xlane.f32.xlu0 %v2326
    %v2582 = vpop.xlane.xlu0 %2581
    %2583 = vadd.xlane.f32.xlu0 %v2328
    %v2584 = vpop.xlane.xlu0 %2583
    %2585 = vadd.xlane.f32.xlu0 %v2330
    %v2586 = vpop.xlane.xlu0 %2585
    %2587 = vadd.xlane.f32.xlu0 %v2332
    %v2588 = vpop.xlane.xlu0 %2587
    %2589 = vadd.xlane.f32.xlu0 %v2334
    %v2590 = vpop.xlane.xlu0 %2589
    %2591 = vadd.xlane.f32.xlu0 %v2336
    %v2592 = vpop.xlane.xlu0 %2591
    %2593 = vadd.xlane.f32.xlu0 %v2338
    %v2594 = vpop.xlane.xlu0 %2593
    %2595 = vadd.xlane.f32.xlu0 %v2340
    %v2596 = vpop.xlane.xlu0 %2595
    %2597 = vadd.xlane.f32.xlu0 %v2342
    %v2598 = vpop.xlane.xlu0 %2597
    %2599 = vadd.xlane.f32.xlu0 %v2344
    %v2600 = vpop.xlane.xlu0 %2599
    %2601 = vadd.xlane.f32.xlu0 %v2346
    %v2602 = vpop.xlane.xlu0 %2601
    %2603 = vadd.xlane.f32.xlu0 %v2348
    %v2604 = vpop.xlane.xlu0 %2603
    %2605 = vadd.xlane.f32.xlu0 %v2350
    %v2606 = vpop.xlane.xlu0 %2605
    %2607 = vadd.xlane.f32.xlu0 %v2352
    %v2608 = vpop.xlane.xlu0 %2607
    %2609 = vadd.xlane.f32.xlu0 %v2354
    %v2610 = vpop.xlane.xlu0 %2609
    %2611 = vadd.xlane.f32.xlu0 %v2356
    %v2612 = vpop.xlane.xlu0 %2611
    %2613 = vadd.xlane.f32.xlu0 %v2358
    %v2614 = vpop.xlane.xlu0 %2613
    %2615 = vadd.xlane.f32.xlu0 %v2360
    %v2616 = vpop.xlane.xlu0 %2615
    %2617 = vadd.xlane.f32.xlu0 %v2362
    %v2618 = vpop.xlane.xlu0 %2617
    %2619 = vadd.xlane.f32.xlu0 %v2364
    %v2620 = vpop.xlane.xlu0 %2619
    %2621 = vadd.xlane.f32.xlu0 %v2366
    %v2622 = vpop.xlane.xlu0 %2621
    %2623 = vadd.xlane.f32.xlu0 %v2368
    %v2624 = vpop.xlane.xlu0 %2623
    %2625 = vadd.xlane.f32.xlu0 %v2370
    %v2626 = vpop.xlane.xlu0 %2625
    %v2627 = vrcp.pop %v2372
    %v2628 = vrcp.pop %v2374
    %v2629 = vrcp.pop %v2376
    %v2630 = vrcp.pop %v2378
    %v2631 = vrcp.pop %v2380
    %v2632 = vrcp.pop %v2382
    %v2633 = vrcp.pop %v2384
    %v2634 = vrcp.pop %v2386
    %v2635 = vrcp.pop %v2388
    %v2636 = vrcp.pop %v2390
    %v2637 = vrcp.pop %v2392
    %v2638 = vrcp.pop %v2394
    %v2639 = vrcp.pop %v2396
    %v2640 = vrcp.pop %v2398
    %v2641 = vrcp.pop %v2400
    %v2642 = vrcp.pop %v2402
    %v2643 = vrcp.pop %v2404
    %v2644 = vrcp.pop %v2406
    %v2645 = vrcp.pop %v2408
    %v2646 = vrcp.pop %v2410
    %v2647 = vrcp.pop %v2412
    %v2648 = vrcp.pop %v2414
    %v2649 = vrcp.pop %v2416
    %v2650 = vrcp.pop %v2418
    %v2651 = vrcp.pop %v2420
    %v2652 = vrcp.pop %v2422
    %v2653 = vrcp.pop %v2424
    %v2654 = vrcp.pop %v2426
    %v2655 = vrcp.pop %v2428
    %v2656 = vrcp.pop %v2430
    %v2657 = vrcp.pop %v2432
    %v2658 = vrcp.pop %v2434
    %v2659 = vrcp.pop %v2436
    %v2660 = vrcp.pop %v2438
    %v2661 = vrcp.pop %v2440
    %v2662 = vrcp.pop %v2442
    %v2663 = vrcp.pop %v2444
    %v2664 = vrcp.pop %v2446
    %v2665 = vrcp.pop %v2448
    %v2666 = vrcp.pop %v2450
    %v2667 = vrcp.pop %v2452
    %v2668 = vrcp.pop %v2454
    %v2669 = vrcp.pop %v2456
    %v2670 = vrcp.pop %v2458
    %v2671 = vrcp.pop %v2460
    %v2672 = vrcp.pop %v2462
    %v2673 = vrcp.pop %v2464
    %v2674 = vrcp.pop %v2466
    %v2675 = vrcp.pop %v2468
    %v2676 = vrcp.pop %v2470
    %v2677 = vrcp.pop %v2472
    %v2678 = vrcp.pop %v2474
    %v2679 = vrcp.pop %v2476
    %v2680 = vrcp.pop %v2478
    %v2681 = vrcp.pop %v2480
    %v2682 = vrcp.pop %v2482
    %v2683 = vrcp.pop %v2484
    %v2684 = vrcp.pop %v2486
    %v2685 = vrcp.pop %v2488
    %v2686 = vrcp.pop %v2490
    %v2687 = vrcp.pop %v2492
    %v2688 = vrcp.pop %v2494
    %v2689 = vrcp.pop %v2496
    %v2690 = vrcp.pop %v2498
    %v2691 = vrcp.pop %v2500
    %v2692 = vrcp.pop %v2502
    %v2693 = vrcp.pop %v2504
    %v2694 = vrcp.pop %v2506
    %v2695 = vrcp.pop %v2508
    %v2696 = vrcp.pop %v2510
    %v2697 = vrcp.pop %v2512
    %v2698 = vrcp.pop %v2514
    %v2699 = vrcp.pop %v2516
    %v2700 = vrcp.pop %v2518
    %v2701 = vrcp.pop %v2520
    %v2702 = vrcp.pop %v2522
    %v2703 = vrcp.pop %v2524
    %v2704 = vrcp.pop %v2526
    %v2705 = vrcp.pop %v2528
    %v2706 = vrcp.pop %v2530
    %v2707 = vrcp.pop %v2532
    %v2708 = vrcp.pop %v2534
    %v2709 = vrcp.pop %v2536
    %v2710 = vrcp.pop %v2538
    %v2711 = vrcp.pop %v2540
    %v2712 = vrcp.pop %v2542
    %v2713 = vrcp.pop %v2544
    %v2714 = vrcp.pop %v2546
    %v2715 = vrcp.pop %v2548
    %v2716 = vrcp.pop %v2550
    %v2717 = vrcp.pop %v2552
    %v2718 = vrcp.pop %v2554
    %v2719 = vrcp.pop %v2556
    %v2720 = vrcp.pop %v2558
    %v2721 = vrcp.pop %v2560
    %v2722 = vrcp.pop %v2562
    %v2723 = vrcp.pop %v2564
    %v2724 = vrcp.pop %v2566
    %v2725 = vrcp.pop %v2568
    %v2726 = vrcp.pop %v2570
    %v2727 = vrcp.pop %v2572
    %v2728 = vrcp.pop %v2574
    %v2729 = vrcp.pop %v2576
    %v2730 = vrcp.pop %v2578
    %v2731 = vrcp.pop %v2580
    %v2732 = vrcp.pop %v2582
    %v2733 = vrcp.pop %v2584
    %v2734 = vrcp.pop %v2586
    %v2735 = vrcp.pop %v2588
    %v2736 = vrcp.pop %v2590
    %v2737 = vrcp.pop %v2592
    %v2738 = vrcp.pop %v2594
    %v2739 = vrcp.pop %v2596
    %v2740 = vrcp.pop %v2598
    %v2741 = vrcp.pop %v2600
    %v2742 = vrcp.pop %v2602
    %v2743 = vrcp.pop %v2604
    %v2744 = vrcp.pop %v2606
    %v2745 = vrcp.pop %v2608
    %v2746 = vrcp.pop %v2610
    %v2747 = vrcp.pop %v2612
    %v2748 = vrcp.pop %v2614
    %v2749 = vrcp.pop %v2616
    %v2750 = vrcp.pop %v2618
    %v2751 = vrcp.pop %v2620
    %v2752 = vrcp.pop %v2622
    %v2753 = vrcp.pop %v2624
    %v2754 = vrcp.pop %v2626
    %v2755 = vmul.f32 %v2372, %v2627
    %v2756 = vmul.f32 %v2374, %v2628
    %v2757 = vmul.f32 %v2376, %v2629
    %v2758 = vmul.f32 %v2378, %v2630
    %v2759 = vmul.f32 %v2380, %v2631
    %v2760 = vmul.f32 %v2382, %v2632
    %v2761 = vmul.f32 %v2384, %v2633
    %v2762 = vmul.f32 %v2386, %v2634
    %v2763 = vmul.f32 %v2388, %v2635
    %v2764 = vmul.f32 %v2390, %v2636
    %v2765 = vmul.f32 %v2392, %v2637
    %v2766 = vmul.f32 %v2394, %v2638
    %v2767 = vmul.f32 %v2396, %v2639
    %v2768 = vmul.f32 %v2398, %v2640
    %v2769 = vmul.f32 %v2400, %v2641
    %v2770 = vmul.f32 %v2402, %v2642
    %v2771 = vmul.f32 %v2404, %v2643
    %v2772 = vmul.f32 %v2406, %v2644
    %v2773 = vmul.f32 %v2408, %v2645
    %v2774 = vmul.f32 %v2410, %v2646
    %v2775 = vmul.f32 %v2412, %v2647
    %v2776 = vmul.f32 %v2414, %v2648
    %v2777 = vmul.f32 %v2416, %v2649
    %v2778 = vmul.f32 %v2418, %v2650
    %v2779 = vmul.f32 %v2420, %v2651
    %v2780 = vmul.f32 %v2422, %v2652
    %v2781 = vmul.f32 %v2424, %v2653
    %v2782 = vmul.f32 %v2426, %v2654
    %v2783 = vmul.f32 %v2428, %v2655
    %v2784 = vmul.f32 %v2430, %v2656
    %v2785 = vmul.f32 %v2432, %v2657
    %v2786 = vmul.f32 %v2434, %v2658
    %v2787 = vmul.f32 %v2436, %v2659
    %v2788 = vmul.f32 %v2438, %v2660
    %v2789 = vmul.f32 %v2440, %v2661
    %v2790 = vmul.f32 %v2442, %v2662
    %v2791 = vmul.f32 %v2444, %v2663
    %v2792 = vmul.f32 %v2446, %v2664
    %v2793 = vmul.f32 %v2448, %v2665
    %v2794 = vmul.f32 %v2450, %v2666
    %v2795 = vmul.f32 %v2452, %v2667
    %v2796 = vmul.f32 %v2454, %v2668
    %v2797 = vmul.f32 %v2456, %v2669
    %v2798 = vmul.f32 %v2458, %v2670
    %v2799 = vmul.f32 %v2460, %v2671
    %v2800 = vmul.f32 %v2462, %v2672
    %v2801 = vmul.f32 %v2464, %v2673
    %v2802 = vmul.f32 %v2466, %v2674
    %v2803 = vmul.f32 %v2468, %v2675
    %v2804 = vmul.f32 %v2470, %v2676
    %v2805 = vmul.f32 %v2472, %v2677
    %v2806 = vmul.f32 %v2474, %v2678
    %v2807 = vmul.f32 %v2476, %v2679
    %v2808 = vmul.f32 %v2478, %v2680
    %v2809 = vmul.f32 %v2480, %v2681
    %v2810 = vmul.f32 %v2482, %v2682
    %v2811 = vmul.f32 %v2484, %v2683
    %v2812 = vmul.f32 %v2486, %v2684
    %v2813 = vmul.f32 %v2488, %v2685
    %v2814 = vmul.f32 %v2490, %v2686
    %v2815 = vmul.f32 %v2492, %v2687
    %v2816 = vmul.f32 %v2494, %v2688
    %v2817 = vmul.f32 %v2496, %v2689
    %v2818 = vmul.f32 %v2498, %v2690
    %v2819 = vmul.f32 %v2500, %v2691
    %v2820 = vmul.f32 %v2502, %v2692
    %v2821 = vmul.f32 %v2504, %v2693
    %v2822 = vmul.f32 %v2506, %v2694
    %v2823 = vmul.f32 %v2508, %v2695
    %v2824 = vmul.f32 %v2510, %v2696
    %v2825 = vmul.f32 %v2512, %v2697
    %v2826 = vmul.f32 %v2514, %v2698
    %v2827 = vmul.f32 %v2516, %v2699
    %v2828 = vmul.f32 %v2518, %v2700
    %v2829 = vmul.f32 %v2520, %v2701
    %v2830 = vmul.f32 %v2522, %v2702
    %v2831 = vmul.f32 %v2524, %v2703
    %v2832 = vmul.f32 %v2526, %v2704
    %v2833 = vmul.f32 %v2528, %v2705
    %v2834 = vmul.f32 %v2530, %v2706
    %v2835 = vmul.f32 %v2532, %v2707
    %v2836 = vmul.f32 %v2534, %v2708
    %v2837 = vmul.f32 %v2536, %v2709
    %v2838 = vmul.f32 %v2538, %v2710
    %v2839 = vmul.f32 %v2540, %v2711
    %v2840 = vmul.f32 %v2542, %v2712
    %v2841 = vmul.f32 %v2544, %v2713
    %v2842 = vmul.f32 %v2546, %v2714
    %v2843 = vmul.f32 %v2548, %v2715
    %v2844 = vmul.f32 %v2550, %v2716
    %v2845 = vmul.f32 %v2552, %v2717
    %v2846 = vmul.f32 %v2554, %v2718
    %v2847 = vmul.f32 %v2556, %v2719
    %v2848 = vmul.f32 %v2558, %v2720
    %v2849 = vmul.f32 %v2560, %v2721
    %v2850 = vmul.f32 %v2562, %v2722
    %v2851 = vmul.f32 %v2564, %v2723
    %v2852 = vmul.f32 %v2566, %v2724
    %v2853 = vmul.f32 %v2568, %v2725
    %v2854 = vmul.f32 %v2570, %v2726
    %v2855 = vmul.f32 %v2572, %v2727
    %v2856 = vmul.f32 %v2574, %v2728
    %v2857 = vmul.f32 %v2576, %v2729
    %v2858 = vmul.f32 %v2578, %v2730
    %v2859 = vmul.f32 %v2580, %v2731
    %v2860 = vmul.f32 %v2582, %v2732
    %v2861 = vmul.f32 %v2584, %v2733
    %v2862 = vmul.f32 %v2586, %v2734
    %v2863 = vmul.f32 %v2588, %v2735
    %v2864 = vmul.f32 %v2590, %v2736
    %v2865 = vmul.f32 %v2592, %v2737
    %v2866 = vmul.f32 %v2594, %v2738
    %v2867 = vmul.f32 %v2596, %v2739
    %v2868 = vmul.f32 %v2598, %v2740
    %v2869 = vmul.f32 %v2600, %v2741
    %v2870 = vmul.f32 %v2602, %v2742
    %v2871 = vmul.f32 %v2604, %v2743
    %v2872 = vmul.f32 %v2606, %v2744
    %v2873 = vmul.f32 %v2608, %v2745
    %v2874 = vmul.f32 %v2610, %v2746
    %v2875 = vmul.f32 %v2612, %v2747
    %v2876 = vmul.f32 %v2614, %v2748
    %v2877 = vmul.f32 %v2616, %v2749
    %v2878 = vmul.f32 %v2618, %v2750
    %v2879 = vmul.f32 %v2620, %v2751
    %v2880 = vmul.f32 %v2622, %v2752
    %v2881 = vmul.f32 %v2624, %v2753
    %v2882 = vmul.f32 %v2626, %v2754
    %v2883 = vsub.f32 2.0, %v2755
    %v2884 = vsub.f32 2.0, %v2756
    %v2885 = vsub.f32 2.0, %v2757
    %v2886 = vsub.f32 2.0, %v2758
    %v2887 = vsub.f32 2.0, %v2759
    %v2888 = vsub.f32 2.0, %v2760
    %v2889 = vsub.f32 2.0, %v2761
    %v2890 = vsub.f32 2.0, %v2762
    %v2891 = vsub.f32 2.0, %v2763
    %v2892 = vsub.f32 2.0, %v2764
    %v2893 = vsub.f32 2.0, %v2765
    %v2894 = vsub.f32 2.0, %v2766
    %v2895 = vsub.f32 2.0, %v2767
    %v2896 = vsub.f32 2.0, %v2768
    %v2897 = vsub.f32 2.0, %v2769
    %v2898 = vsub.f32 2.0, %v2770
    %v2899 = vsub.f32 2.0, %v2771
    %v2900 = vsub.f32 2.0, %v2772
    %v2901 = vsub.f32 2.0, %v2773
    %v2902 = vsub.f32 2.0, %v2774
    %v2903 = vsub.f32 2.0, %v2775
    %v2904 = vsub.f32 2.0, %v2776
    %v2905 = vsub.f32 2.0, %v2777
    %v2906 = vsub.f32 2.0, %v2778
    %v2907 = vsub.f32 2.0, %v2779
    %v2908 = vsub.f32 2.0, %v2780
    %v2909 = vsub.f32 2.0, %v2781
    %v2910 = vsub.f32 2.0, %v2782
    %v2911 = vsub.f32 2.0, %v2783
    %v2912 = vsub.f32 2.0, %v2784
    %v2913 = vsub.f32 2.0, %v2785
    %v2914 = vsub.f32 2.0, %v2786
    %v2915 = vsub.f32 2.0, %v2787
    %v2916 = vsub.f32 2.0, %v2788
    %v2917 = vsub.f32 2.0, %v2789
    %v2918 = vsub.f32 2.0, %v2790
    %v2919 = vsub.f32 2.0, %v2791
    %v2920 = vsub.f32 2.0, %v2792
    %v2921 = vsub.f32 2.0, %v2793
    %v2922 = vsub.f32 2.0, %v2794
    %v2923 = vsub.f32 2.0, %v2795
    %v2924 = vsub.f32 2.0, %v2796
    %v2925 = vsub.f32 2.0, %v2797
    %v2926 = vsub.f32 2.0, %v2798
    %v2927 = vsub.f32 2.0, %v2799
    %v2928 = vsub.f32 2.0, %v2800
    %v2929 = vsub.f32 2.0, %v2801
    %v2930 = vsub.f32 2.0, %v2802
    %v2931 = vsub.f32 2.0, %v2803
    %v2932 = vsub.f32 2.0, %v2804
    %v2933 = vsub.f32 2.0, %v2805
    %v2934 = vsub.f32 2.0, %v2806
    %v2935 = vsub.f32 2.0, %v2807
    %v2936 = vsub.f32 2.0, %v2808
    %v2937 = vsub.f32 2.0, %v2809
    %v2938 = vsub.f32 2.0, %v2810
    %v2939 = vsub.f32 2.0, %v2811
    %v2940 = vsub.f32 2.0, %v2812
    %v2941 = vsub.f32 2.0, %v2813
    %v2942 = vsub.f32 2.0, %v2814
    %v2943 = vsub.f32 2.0, %v2815
    %v2944 = vsub.f32 2.0, %v2816
    %v2945 = vsub.f32 2.0, %v2817
    %v2946 = vsub.f32 2.0, %v2818
    %v2947 = vsub.f32 2.0, %v2819
    %v2948 = vsub.f32 2.0, %v2820
    %v2949 = vsub.f32 2.0, %v2821
    %v2950 = vsub.f32 2.0, %v2822
    %v2951 = vsub.f32 2.0, %v2823
    %v2952 = vsub.f32 2.0, %v2824
    %v2953 = vsub.f32 2.0, %v2825
    %v2954 = vsub.f32 2.0, %v2826
    %v2955 = vsub.f32 2.0, %v2827
    %v2956 = vsub.f32 2.0, %v2828
    %v2957 = vsub.f32 2.0, %v2829
    %v2958 = vsub.f32 2.0, %v2830
    %v2959 = vsub.f32 2.0, %v2831
    %v2960 = vsub.f32 2.0, %v2832
    %v2961 = vsub.f32 2.0, %v2833
    %v2962 = vsub.f32 2.0, %v2834
    %v2963 = vsub.f32 2.0, %v2835
    %v2964 = vsub.f32 2.0, %v2836
    %v2965 = vsub.f32 2.0, %v2837
    %v2966 = vsub.f32 2.0, %v2838
    %v2967 = vsub.f32 2.0, %v2839
    %v2968 = vsub.f32 2.0, %v2840
    %v2969 = vsub.f32 2.0, %v2841
    %v2970 = vsub.f32 2.0, %v2842
    %v2971 = vsub.f32 2.0, %v2843
    %v2972 = vsub.f32 2.0, %v2844
    %v2973 = vsub.f32 2.0, %v2845
    %v2974 = vsub.f32 2.0, %v2846
    %v2975 = vsub.f32 2.0, %v2847
    %v2976 = vsub.f32 2.0, %v2848
    %v2977 = vsub.f32 2.0, %v2849
    %v2978 = vsub.f32 2.0, %v2850
    %v2979 = vsub.f32 2.0, %v2851
    %v2980 = vsub.f32 2.0, %v2852
    %v2981 = vsub.f32 2.0, %v2853
    %v2982 = vsub.f32 2.0, %v2854
    %v2983 = vsub.f32 2.0, %v2855
    %v2984 = vsub.f32 2.0, %v2856
    %v2985 = vsub.f32 2.0, %v2857
    %v2986 = vsub.f32 2.0, %v2858
    %v2987 = vsub.f32 2.0, %v2859
    %v2988 = vsub.f32 2.0, %v2860
    %v2989 = vsub.f32 2.0, %v2861
    %v2990 = vsub.f32 2.0, %v2862
    %v2991 = vsub.f32 2.0, %v2863
    %v2992 = vsub.f32 2.0, %v2864
    %v2993 = vsub.f32 2.0, %v2865
    %v2994 = vsub.f32 2.0, %v2866
    %v2995 = vsub.f32 2.0, %v2867
    %v2996 = vsub.f32 2.0, %v2868
    %v2997 = vsub.f32 2.0, %v2869
    %v2998 = vsub.f32 2.0, %v2870
    %v2999 = vsub.f32 2.0, %v2871
    %v3000 = vsub.f32 2.0, %v2872
    %v3001 = vsub.f32 2.0, %v2873
    %v3002 = vsub.f32 2.0, %v2874
    %v3003 = vsub.f32 2.0, %v2875
    %v3004 = vsub.f32 2.0, %v2876
    %v3005 = vsub.f32 2.0, %v2877
    %v3006 = vsub.f32 2.0, %v2878
    %v3007 = vsub.f32 2.0, %v2879
    %v3008 = vsub.f32 2.0, %v2880
    %v3009 = vsub.f32 2.0, %v2881
    %v3010 = vsub.f32 2.0, %v2882
    %v3011 = vmul.f32 %v2627, %v2883
    %v3012 = vmul.f32 %v2628, %v2884
    %v3013 = vmul.f32 %v2629, %v2885
    %v3014 = vmul.f32 %v2630, %v2886
    %v3015 = vmul.f32 %v2631, %v2887
    %v3016 = vmul.f32 %v2632, %v2888
    %v3017 = vmul.f32 %v2633, %v2889
    %v3018 = vmul.f32 %v2634, %v2890
    %v3019 = vmul.f32 %v2635, %v2891
    %v3020 = vmul.f32 %v2636, %v2892
    %v3021 = vmul.f32 %v2637, %v2893
    %v3022 = vmul.f32 %v2638, %v2894
    %v3023 = vmul.f32 %v2639, %v2895
    %v3024 = vmul.f32 %v2640, %v2896
    %v3025 = vmul.f32 %v2641, %v2897
    %v3026 = vmul.f32 %v2642, %v2898
    %v3027 = vmul.f32 %v2643, %v2899
    %v3028 = vmul.f32 %v2644, %v2900
    %v3029 = vmul.f32 %v2645, %v2901
    %v3030 = vmul.f32 %v2646, %v2902
    %v3031 = vmul.f32 %v2647, %v2903
    %v3032 = vmul.f32 %v2648, %v2904
    %v3033 = vmul.f32 %v2649, %v2905
    %v3034 = vmul.f32 %v2650, %v2906
    %v3035 = vmul.f32 %v2651, %v2907
    %v3036 = vmul.f32 %v2652, %v2908
    %v3037 = vmul.f32 %v2653, %v2909
    %v3038 = vmul.f32 %v2654, %v2910
    %v3039 = vmul.f32 %v2655, %v2911
    %v3040 = vmul.f32 %v2656, %v2912
    %v3041 = vmul.f32 %v2657, %v2913
    %v3042 = vmul.f32 %v2658, %v2914
    %v3043 = vmul.f32 %v2659, %v2915
    %v3044 = vmul.f32 %v2660, %v2916
    %v3045 = vmul.f32 %v2661, %v2917
    %v3046 = vmul.f32 %v2662, %v2918
    %v3047 = vmul.f32 %v2663, %v2919
    %v3048 = vmul.f32 %v2664, %v2920
    %v3049 = vmul.f32 %v2665, %v2921
    %v3050 = vmul.f32 %v2666, %v2922
    %v3051 = vmul.f32 %v2667, %v2923
    %v3052 = vmul.f32 %v2668, %v2924
    %v3053 = vmul.f32 %v2669, %v2925
    %v3054 = vmul.f32 %v2670, %v2926
    %v3055 = vmul.f32 %v2671, %v2927
    %v3056 = vmul.f32 %v2672, %v2928
    %v3057 = vmul.f32 %v2673, %v2929
    %v3058 = vmul.f32 %v2674, %v2930
    %v3059 = vmul.f32 %v2675, %v2931
    %v3060 = vmul.f32 %v2676, %v2932
    %v3061 = vmul.f32 %v2677, %v2933
    %v3062 = vmul.f32 %v2678, %v2934
    %v3063 = vmul.f32 %v2679, %v2935
    %v3064 = vmul.f32 %v2680, %v2936
    %v3065 = vmul.f32 %v2681, %v2937
    %v3066 = vmul.f32 %v2682, %v2938
    %v3067 = vmul.f32 %v2683, %v2939
    %v3068 = vmul.f32 %v2684, %v2940
    %v3069 = vmul.f32 %v2685, %v2941
    %v3070 = vmul.f32 %v2686, %v2942
    %v3071 = vmul.f32 %v2687, %v2943
    %v3072 = vmul.f32 %v2688, %v2944
    %v3073 = vmul.f32 %v2689, %v2945
    %v3074 = vmul.f32 %v2690, %v2946
    %v3075 = vmul.f32 %v2691, %v2947
    %v3076 = vmul.f32 %v2692, %v2948
    %v3077 = vmul.f32 %v2693, %v2949
    %v3078 = vmul.f32 %v2694, %v2950
    %v3079 = vmul.f32 %v2695, %v2951
    %v3080 = vmul.f32 %v2696, %v2952
    %v3081 = vmul.f32 %v2697, %v2953
    %v3082 = vmul.f32 %v2698, %v2954
    %v3083 = vmul.f32 %v2699, %v2955
    %v3084 = vmul.f32 %v2700, %v2956
    %v3085 = vmul.f32 %v2701, %v2957
    %v3086 = vmul.f32 %v2702, %v2958
    %v3087 = vmul.f32 %v2703, %v2959
    %v3088 = vmul.f32 %v2704, %v2960
    %v3089 = vmul.f32 %v2705, %v2961
    %v3090 = vmul.f32 %v2706, %v2962
    %v3091 = vmul.f32 %v2707, %v2963
    %v3092 = vmul.f32 %v2708, %v2964
    %v3093 = vmul.f32 %v2709, %v2965
    %v3094 = vmul.f32 %v2710, %v2966
    %v3095 = vmul.f32 %v2711, %v2967
    %v3096 = vmul.f32 %v2712, %v2968
    %v3097 = vmul.f32 %v2713, %v2969
    %v3098 = vmul.f32 %v2714, %v2970
    %v3099 = vmul.f32 %v2715, %v2971
    %v3100 = vmul.f32 %v2716, %v2972
    %v3101 = vmul.f32 %v2717, %v2973
    %v3102 = vmul.f32 %v2718, %v2974
    %v3103 = vmul.f32 %v2719, %v2975
    %v3104 = vmul.f32 %v2720, %v2976
    %v3105 = vmul.f32 %v2721, %v2977
    %v3106 = vmul.f32 %v2722, %v2978
    %v3107 = vmul.f32 %v2723, %v2979
    %v3108 = vmul.f32 %v2724, %v2980
    %v3109 = vmul.f32 %v2725, %v2981
    %v3110 = vmul.f32 %v2726, %v2982
    %v3111 = vmul.f32 %v2727, %v2983
    %v3112 = vmul.f32 %v2728, %v2984
    %v3113 = vmul.f32 %v2729, %v2985
    %v3114 = vmul.f32 %v2730, %v2986
    %v3115 = vmul.f32 %v2731, %v2987
    %v3116 = vmul.f32 %v2732, %v2988
    %v3117 = vmul.f32 %v2733, %v2989
    %v3118 = vmul.f32 %v2734, %v2990
    %v3119 = vmul.f32 %v2735, %v2991
    %v3120 = vmul.f32 %v2736, %v2992
    %v3121 = vmul.f32 %v2737, %v2993
    %v3122 = vmul.f32 %v2738, %v2994
    %v3123 = vmul.f32 %v2739, %v2995
    %v3124 = vmul.f32 %v2740, %v2996
    %v3125 = vmul.f32 %v2741, %v2997
    %v3126 = vmul.f32 %v2742, %v2998
    %v3127 = vmul.f32 %v2743, %v2999
    %v3128 = vmul.f32 %v2744, %v3000
    %v3129 = vmul.f32 %v2745, %v3001
    %v3130 = vmul.f32 %v2746, %v3002
    %v3131 = vmul.f32 %v2747, %v3003
    %v3132 = vmul.f32 %v2748, %v3004
    %v3133 = vmul.f32 %v2749, %v3005
    %v3134 = vmul.f32 %v2750, %v3006
    %v3135 = vmul.f32 %v2751, %v3007
    %v3136 = vmul.f32 %v2752, %v3008
    %v3137 = vmul.f32 %v2753, %v3009
    %v3138 = vmul.f32 %v2754, %v3010
    %v3139 = vmul.f32 %v2116, %v3011
    %v3140 = vmul.f32 %v2118, %v3012
    %v3141 = vmul.f32 %v2120, %v3013
    %v3142 = vmul.f32 %v2122, %v3014
    %v3143 = vmul.f32 %v2124, %v3015
    %v3144 = vmul.f32 %v2126, %v3016
    %v3145 = vmul.f32 %v2128, %v3017
    %v3146 = vmul.f32 %v2130, %v3018
    %v3147 = vmul.f32 %v2132, %v3019
    %v3148 = vmul.f32 %v2134, %v3020
    %v3149 = vmul.f32 %v2136, %v3021
    %v3150 = vmul.f32 %v2138, %v3022
    %v3151 = vmul.f32 %v2140, %v3023
    %v3152 = vmul.f32 %v2142, %v3024
    %v3153 = vmul.f32 %v2144, %v3025
    %v3154 = vmul.f32 %v2146, %v3026
    %v3155 = vmul.f32 %v2148, %v3027
    %v3156 = vmul.f32 %v2150, %v3028
    %v3157 = vmul.f32 %v2152, %v3029
    %v3158 = vmul.f32 %v2154, %v3030
    %v3159 = vmul.f32 %v2156, %v3031
    %v3160 = vmul.f32 %v2158, %v3032
    %v3161 = vmul.f32 %v2160, %v3033
    %v3162 = vmul.f32 %v2162, %v3034
    %v3163 = vmul.f32 %v2164, %v3035
    %v3164 = vmul.f32 %v2166, %v3036
    %v3165 = vmul.f32 %v2168, %v3037
    %v3166 = vmul.f32 %v2170, %v3038
    %v3167 = vmul.f32 %v2172, %v3039
    %v3168 = vmul.f32 %v2174, %v3040
    %v3169 = vmul.f32 %v2176, %v3041
    %v3170 = vmul.f32 %v2178, %v3042
    %v3171 = vmul.f32 %v2180, %v3043
    %v3172 = vmul.f32 %v2182, %v3044
    %v3173 = vmul.f32 %v2184, %v3045
    %v3174 = vmul.f32 %v2186, %v3046
    %v3175 = vmul.f32 %v2188, %v3047
    %v3176 = vmul.f32 %v2190, %v3048
    %v3177 = vmul.f32 %v2192, %v3049
    %v3178 = vmul.f32 %v2194, %v3050
    %v3179 = vmul.f32 %v2196, %v3051
    %v3180 = vmul.f32 %v2198, %v3052
    %v3181 = vmul.f32 %v2200, %v3053
    %v3182 = vmul.f32 %v2202, %v3054
    %v3183 = vmul.f32 %v2204, %v3055
    %v3184 = vmul.f32 %v2206, %v3056
    %v3185 = vmul.f32 %v2208, %v3057
    %v3186 = vmul.f32 %v2210, %v3058
    %v3187 = vmul.f32 %v2212, %v3059
    %v3188 = vmul.f32 %v2214, %v3060
    %v3189 = vmul.f32 %v2216, %v3061
    %v3190 = vmul.f32 %v2218, %v3062
    %v3191 = vmul.f32 %v2220, %v3063
    %v3192 = vmul.f32 %v2222, %v3064
    %v3193 = vmul.f32 %v2224, %v3065
    %v3194 = vmul.f32 %v2226, %v3066
    %v3195 = vmul.f32 %v2228, %v3067
    %v3196 = vmul.f32 %v2230, %v3068
    %v3197 = vmul.f32 %v2232, %v3069
    %v3198 = vmul.f32 %v2234, %v3070
    %v3199 = vmul.f32 %v2236, %v3071
    %v3200 = vmul.f32 %v2238, %v3072
    %v3201 = vmul.f32 %v2240, %v3073
    %v3202 = vmul.f32 %v2242, %v3074
    %v3203 = vmul.f32 %v2244, %v3075
    %v3204 = vmul.f32 %v2246, %v3076
    %v3205 = vmul.f32 %v2248, %v3077
    %v3206 = vmul.f32 %v2250, %v3078
    %v3207 = vmul.f32 %v2252, %v3079
    %v3208 = vmul.f32 %v2254, %v3080
    %v3209 = vmul.f32 %v2256, %v3081
    %v3210 = vmul.f32 %v2258, %v3082
    %v3211 = vmul.f32 %v2260, %v3083
    %v3212 = vmul.f32 %v2262, %v3084
    %v3213 = vmul.f32 %v2264, %v3085
    %v3214 = vmul.f32 %v2266, %v3086
    %v3215 = vmul.f32 %v2268, %v3087
    %v3216 = vmul.f32 %v2270, %v3088
    %v3217 = vmul.f32 %v2272, %v3089
    %v3218 = vmul.f32 %v2274, %v3090
    %v3219 = vmul.f32 %v2276, %v3091
    %v3220 = vmul.f32 %v2278, %v3092
    %v3221 = vmul.f32 %v2280, %v3093
    %v3222 = vmul.f32 %v2282, %v3094
    %v3223 = vmul.f32 %v2284, %v3095
    %v3224 = vmul.f32 %v2286, %v3096
    %v3225 = vmul.f32 %v2288, %v3097
    %v3226 = vmul.f32 %v2290, %v3098
    %v3227 = vmul.f32 %v2292, %v3099
    %v3228 = vmul.f32 %v2294, %v3100
    %v3229 = vmul.f32 %v2296, %v3101
    %v3230 = vmul.f32 %v2298, %v3102
    %v3231 = vmul.f32 %v2300, %v3103
    %v3232 = vmul.f32 %v2302, %v3104
    %v3233 = vmul.f32 %v2304, %v3105
    %v3234 = vmul.f32 %v2306, %v3106
    %v3235 = vmul.f32 %v2308, %v3107
    %v3236 = vmul.f32 %v2310, %v3108
    %v3237 = vmul.f32 %v2312, %v3109
    %v3238 = vmul.f32 %v2314, %v3110
    %v3239 = vmul.f32 %v2316, %v3111
    %v3240 = vmul.f32 %v2318, %v3112
    %v3241 = vmul.f32 %v2320, %v3113
    %v3242 = vmul.f32 %v2322, %v3114
    %v3243 = vmul.f32 %v2324, %v3115
    %v3244 = vmul.f32 %v2326, %v3116
    %v3245 = vmul.f32 %v2328, %v3117
    %v3246 = vmul.f32 %v2330, %v3118
    %v3247 = vmul.f32 %v2332, %v3119
    %v3248 = vmul.f32 %v2334, %v3120
    %v3249 = vmul.f32 %v2336, %v3121
    %v3250 = vmul.f32 %v2338, %v3122
    %v3251 = vmul.f32 %v2340, %v3123
    %v3252 = vmul.f32 %v2342, %v3124
    %v3253 = vmul.f32 %v2344, %v3125
    %v3254 = vmul.f32 %v2346, %v3126
    %v3255 = vmul.f32 %v2348, %v3127
    %v3256 = vmul.f32 %v2350, %v3128
    %v3257 = vmul.f32 %v2352, %v3129
    %v3258 = vmul.f32 %v2354, %v3130
    %v3259 = vmul.f32 %v2356, %v3131
    %v3260 = vmul.f32 %v2358, %v3132
    %v3261 = vmul.f32 %v2360, %v3133
    %v3262 = vmul.f32 %v2362, %v3134
    %v3263 = vmul.f32 %v2364, %v3135
    %v3264 = vmul.f32 %v2366, %v3136
    %v3265 = vmul.f32 %v2368, %v3137
    %v3266 = vmul.f32 %v2370, %v3138
    %3267 = vst [vmem:[#allocation9] sm:$0xff] %v3139
    %3268 = vst [vmem:[#allocation9 + $0x8] sm:$0xff] %v3140
    %3269 = vst [vmem:[#allocation9 + $0x10] sm:$0xff] %v3141
    %3270 = vst [vmem:[#allocation9 + $0x18] sm:$0xff] %v3142
    %3271 = vst [vmem:[#allocation9 + $0x20] sm:$0xff] %v3143
    %3272 = vst [vmem:[#allocation9 + $0x28] sm:$0xff] %v3144
    %3273 = vst [vmem:[#allocation9 + $0x30] sm:$0xff] %v3145
    %3274 = vst [vmem:[#allocation9 + $0x38] sm:$0xff] %v3146
    %3275 = vst [vmem:[#allocation9 + $0x40] sm:$0xff] %v3147
    %3276 = vst [vmem:[#allocation9 + $0x48] sm:$0xff] %v3148
    %3277 = vst [vmem:[#allocation9 + $0x50] sm:$0xff] %v3149
    %3278 = vst [vmem:[#allocation9 + $0x58] sm:$0xff] %v3150
    %3279 = vst [vmem:[#allocation9 + $0x60] sm:$0xff] %v3151
    %3280 = vst [vmem:[#allocation9 + $0x68] sm:$0xff] %v3152
    %3281 = vst [vmem:[#allocation9 + $0x70] sm:$0xff] %v3153
    %3282 = vst [vmem:[#allocation9 + $0x78] sm:$0xff] %v3154
    %3283 = vst [vmem:[#allocation9 + $0x80] sm:$0xff] %v3155
    %3284 = vst [vmem:[#allocation9 + $0x88] sm:$0xff] %v3156
    %3285 = vst [vmem:[#allocation9 + $0x90] sm:$0xff] %v3157
    %3286 = vst [vmem:[#allocation9 + $0x98] sm:$0xff] %v3158
    %3287 = vst [vmem:[#allocation9 + $0xa0] sm:$0xff] %v3159
    %3288 = vst [vmem:[#allocation9 + $0xa8] sm:$0xff] %v3160
    %3289 = vst [vmem:[#allocation9 + $0xb0] sm:$0xff] %v3161
    %3290 = vst [vmem:[#allocation9 + $0xb8] sm:$0xff] %v3162
    %3291 = vst [vmem:[#allocation9 + $0xc0] sm:$0xff] %v3163
    %3292 = vst [vmem:[#allocation9 + $0xc8] sm:$0xff] %v3164
    %3293 = vst [vmem:[#allocation9 + $0xd0] sm:$0xff] %v3165
    %3294 = vst [vmem:[#allocation9 + $0xd8] sm:$0xff] %v3166
    %3295 = vst [vmem:[#allocation9 + $0xe0] sm:$0xff] %v3167
    %3296 = vst [vmem:[#allocation9 + $0xe8] sm:$0xff] %v3168
    %3297 = vst [vmem:[#allocation9 + $0xf0] sm:$0xff] %v3169
    %3298 = vst [vmem:[#allocation9 + $0xf8] sm:$0xff] %v3170
    %3299 = vst [vmem:[#allocation9 + $0x100] sm:$0xff] %v3171
    %3300 = vst [vmem:[#allocation9 + $0x108] sm:$0xff] %v3172
    %3301 = vst [vmem:[#allocation9 + $0x110] sm:$0xff] %v3173
    %3302 = vst [vmem:[#allocation9 + $0x118] sm:$0xff] %v3174
    %3303 = vst [vmem:[#allocation9 + $0x120] sm:$0xff] %v3175
    %3304 = vst [vmem:[#allocation9 + $0x128] sm:$0xff] %v3176
    %3305 = vst [vmem:[#allocation9 + $0x130] sm:$0xff] %v3177
    %3306 = vst [vmem:[#allocation9 + $0x138] sm:$0xff] %v3178
    %3307 = vst [vmem:[#allocation9 + $0x140] sm:$0xff] %v3179
    %3308 = vst [vmem:[#allocation9 + $0x148] sm:$0xff] %v3180
    %3309 = vst [vmem:[#allocation9 + $0x150] sm:$0xff] %v3181
    %3310 = vst [vmem:[#allocation9 + $0x158] sm:$0xff] %v3182
    %3311 = vst [vmem:[#allocation9 + $0x160] sm:$0xff] %v3183
    %3312 = vst [vmem:[#allocation9 + $0x168] sm:$0xff] %v3184
    %3313 = vst [vmem:[#allocation9 + $0x170] sm:$0xff] %v3185
    %3314 = vst [vmem:[#allocation9 + $0x178] sm:$0xff] %v3186
    %3315 = vst [vmem:[#allocation9 + $0x180] sm:$0xff] %v3187
    %3316 = vst [vmem:[#allocation9 + $0x188] sm:$0xff] %v3188
    %3317 = vst [vmem:[#allocation9 + $0x190] sm:$0xff] %v3189
    %3318 = vst [vmem:[#allocation9 + $0x198] sm:$0xff] %v3190
    %3319 = vst [vmem:[#allocation9 + $0x1a0] sm:$0xff] %v3191
    %3320 = vst [vmem:[#allocation9 + $0x1a8] sm:$0xff] %v3192
    %3321 = vst [vmem:[#allocation9 + $0x1b0] sm:$0xff] %v3193
    %3322 = vst [vmem:[#allocation9 + $0x1b8] sm:$0xff] %v3194
    %3323 = vst [vmem:[#allocation9 + $0x1c0] sm:$0xff] %v3195
    %3324 = vst [vmem:[#allocation9 + $0x1c8] sm:$0xff] %v3196
    %3325 = vst [vmem:[#allocation9 + $0x1d0] sm:$0xff] %v3197
    %3326 = vst [vmem:[#allocation9 + $0x1d8] sm:$0xff] %v3198
    %3327 = vst [vmem:[#allocation9 + $0x1e0] sm:$0xff] %v3199
    %3328 = vst [vmem:[#allocation9 + $0x1e8] sm:$0xff] %v3200
    %3329 = vst [vmem:[#allocation9 + $0x1f0] sm:$0xff] %v3201
    %3330 = vst [vmem:[#allocation9 + $0x1f8] sm:$0xff] %v3202
    %3331 = vst [vmem:[#allocation9 + $0x200] sm:$0xff] %v3203
    %3332 = vst [vmem:[#allocation9 + $0x208] sm:$0xff] %v3204
    %3333 = vst [vmem:[#allocation9 + $0x210] sm:$0xff] %v3205
    %3334 = vst [vmem:[#allocation9 + $0x218] sm:$0xff] %v3206
    %3335 = vst [vmem:[#allocation9 + $0x220] sm:$0xff] %v3207
    %3336 = vst [vmem:[#allocation9 + $0x228] sm:$0xff] %v3208
    %3337 = vst [vmem:[#allocation9 + $0x230] sm:$0xff] %v3209
    %3338 = vst [vmem:[#allocation9 + $0x238] sm:$0xff] %v3210
    %3339 = vst [vmem:[#allocation9 + $0x240] sm:$0xff] %v3211
    %3340 = vst [vmem:[#allocation9 + $0x248] sm:$0xff] %v3212
    %3341 = vst [vmem:[#allocation9 + $0x250] sm:$0xff] %v3213
    %3342 = vst [vmem:[#allocation9 + $0x258] sm:$0xff] %v3214
    %3343 = vst [vmem:[#allocation9 + $0x260] sm:$0xff] %v3215
    %3344 = vst [vmem:[#allocation9 + $0x268] sm:$0xff] %v3216
    %3345 = vst [vmem:[#allocation9 + $0x270] sm:$0xff] %v3217
    %3346 = vst [vmem:[#allocation9 + $0x278] sm:$0xff] %v3218
    %3347 = vst [vmem:[#allocation9 + $0x280] sm:$0xff] %v3219
    %3348 = vst [vmem:[#allocation9 + $0x288] sm:$0xff] %v3220
    %3349 = vst [vmem:[#allocation9 + $0x290] sm:$0xff] %v3221
    %3350 = vst [vmem:[#allocation9 + $0x298] sm:$0xff] %v3222
    %3351 = vst [vmem:[#allocation9 + $0x2a0] sm:$0xff] %v3223
    %3352 = vst [vmem:[#allocation9 + $0x2a8] sm:$0xff] %v3224
    %3353 = vst [vmem:[#allocation9 + $0x2b0] sm:$0xff] %v3225
    %3354 = vst [vmem:[#allocation9 + $0x2b8] sm:$0xff] %v3226
    %3355 = vst [vmem:[#allocation9 + $0x2c0] sm:$0xff] %v3227
    %3356 = vst [vmem:[#allocation9 + $0x2c8] sm:$0xff] %v3228
    %3357 = vst [vmem:[#allocation9 + $0x2d0] sm:$0xff] %v3229
    %3358 = vst [vmem:[#allocation9 + $0x2d8] sm:$0xff] %v3230
    %3359 = vst [vmem:[#allocation9 + $0x2e0] sm:$0xff] %v3231
    %3360 = vst [vmem:[#allocation9 + $0x2e8] sm:$0xff] %v3232
    %3361 = vst [vmem:[#allocation9 + $0x2f0] sm:$0xff] %v3233
    %3362 = vst [vmem:[#allocation9 + $0x2f8] sm:$0xff] %v3234
    %3363 = vst [vmem:[#allocation9 + $0x300] sm:$0xff] %v3235
    %3364 = vst [vmem:[#allocation9 + $0x308] sm:$0xff] %v3236
    %3365 = vst [vmem:[#allocation9 + $0x310] sm:$0xff] %v3237
    %3366 = vst [vmem:[#allocation9 + $0x318] sm:$0xff] %v3238
    %3367 = vst [vmem:[#allocation9 + $0x320] sm:$0xff] %v3239
    %3368 = vst [vmem:[#allocation9 + $0x328] sm:$0xff] %v3240
    %3369 = vst [vmem:[#allocation9 + $0x330] sm:$0xff] %v3241
    %3370 = vst [vmem:[#allocation9 + $0x338] sm:$0xff] %v3242
    %3371 = vst [vmem:[#allocation9 + $0x340] sm:$0xff] %v3243
    %3372 = vst [vmem:[#allocation9 + $0x348] sm:$0xff] %v3244
    %3373 = vst [vmem:[#allocation9 + $0x350] sm:$0xff] %v3245
    %3374 = vst [vmem:[#allocation9 + $0x358] sm:$0xff] %v3246
    %3375 = vst [vmem:[#allocation9 + $0x360] sm:$0xff] %v3247
    %3376 = vst [vmem:[#allocation9 + $0x368] sm:$0xff] %v3248
    %3377 = vst [vmem:[#allocation9 + $0x370] sm:$0xff] %v3249
    %3378 = vst [vmem:[#allocation9 + $0x378] sm:$0xff] %v3250
    %3379 = vst [vmem:[#allocation9 + $0x380] sm:$0xff] %v3251
    %3380 = vst [vmem:[#allocation9 + $0x388] sm:$0xff] %v3252
    %3381 = vst [vmem:[#allocation9 + $0x390] sm:$0xff] %v3253
    %3382 = vst [vmem:[#allocation9 + $0x398] sm:$0xff] %v3254
    %3383 = vst [vmem:[#allocation9 + $0x3a0] sm:$0xff] %v3255
    %3384 = vst [vmem:[#allocation9 + $0x3a8] sm:$0xff] %v3256
    %3385 = vst [vmem:[#allocation9 + $0x3b0] sm:$0xff] %v3257
    %3386 = vst [vmem:[#allocation9 + $0x3b8] sm:$0xff] %v3258
    %3387 = vst [vmem:[#allocation9 + $0x3c0] sm:$0xff] %v3259
    %3388 = vst [vmem:[#allocation9 + $0x3c8] sm:$0xff] %v3260
    %3389 = vst [vmem:[#allocation9 + $0x3d0] sm:$0xff] %v3261
    %3390 = vst [vmem:[#allocation9 + $0x3d8] sm:$0xff] %v3262
    %3391 = vst [vmem:[#allocation9 + $0x3e0] sm:$0xff] %v3263
    %3392 = vst [vmem:[#allocation9 + $0x3e8] sm:$0xff] %v3264
    %3393 = vst [vmem:[#allocation9 + $0x3f0] sm:$0xff] %v3265
    %3394 = vst [vmem:[#allocation9 + $0x3f8] sm:$0xff] %v3266
    %3395 = vmatprep.subr.mxu0 0.0
    %3396 = vmatpush1.msra.mxu0 %v315
    %3397 = vmatprep.subr.mxu0 0.0
    %3398 = vmatpush1.msra.mxu0 %v316
    %3399 = vmatprep.subr.mxu0 0.0
    %3400 = vmatpush1.msra.mxu0 %v317
    %3401 = vmatprep.subr.mxu0 0.0
    %3402 = vmatpush1.msra.mxu0 %v318
    %3403 = vmatprep.subr.mxu0 0.0
    %3404 = vmatpush1.msra.mxu0 %v319
    %3405 = vmatprep.subr.mxu0 0.0
    %3406 = vmatpush1.msra.mxu0 %v320
    %3407 = vmatprep.subr.mxu0 0.0
    %3408 = vmatpush1.msra.mxu0 %v321
    %3409 = vmatprep.subr.mxu0 0.0
    %3410 = vmatpush1.msra.mxu0 %v322
    %3411 = vmatprep.subr.mxu0 0.0
    %3412 = vmatpush1.msra.mxu0 %v323
    %3413 = vmatprep.subr.mxu0 0.0
    %3414 = vmatpush1.msra.mxu0 %v324
    %3415 = vmatprep.subr.mxu0 0.0
    %3416 = vmatpush1.msra.mxu0 %v325
    %3417 = vmatprep.subr.mxu0 0.0
    %3418 = vmatpush1.msra.mxu0 %v326
    %3419 = vmatprep.subr.mxu0 0.0
    %3420 = vmatpush1.msra.mxu0 %v327
    %3421 = vmatprep.subr.mxu0 0.0
    %3422 = vmatpush1.msra.mxu0 %v328
    %3423 = vmatprep.subr.mxu0 0.0
    %3424 = vmatpush1.msra.mxu0 %v329
    %3425 = vmatprep.subr.mxu0 0.0
    %3426 = vmatpush1.msra.mxu0 %v330
    %3427 = vmatprep.subr.mxu0 0.0
    %3428 = vmatpush1.msra.mxu0 0.0
    %3429 = vmatprep.subr.mxu0 0.0
    %3430 = vmatpush1.msra.mxu0 0.0
    %3431 = vmatprep.subr.mxu0 0.0
    %3432 = vmatpush1.msra.mxu0 0.0
    %3433 = vmatprep.subr.mxu0 0.0
    %3434 = vmatpush1.msra.mxu0 0.0
    %3435 = vmatprep.subr.mxu0 0.0
    %3436 = vmatpush1.msra.mxu0 0.0
    %3437 = vmatprep.subr.mxu0 0.0
    %3438 = vmatpush1.msra.mxu0 0.0
    %3439 = vmatprep.subr.mxu0 0.0
    %3440 = vmatpush1.msra.mxu0 0.0
    %3441 = vmatprep.subr.mxu0 0.0
    %3442 = vmatpush1.msra.mxu0 0.0
    %3443 = vmatprep.subr.mxu0 0.0
    %3444 = vmatpush1.msra.mxu0 0.0
    %3445 = vmatprep.subr.mxu0 0.0
    %3446 = vmatpush1.msra.mxu0 0.0
    %3447 = vmatprep.subr.mxu0 0.0
    %3448 = vmatpush1.msra.mxu0 0.0
    %3449 = vmatprep.subr.mxu0 0.0
    %3450 = vmatpush1.msra.mxu0 0.0
    %3451 = vmatprep.subr.mxu0 0.0
    %3452 = vmatpush1.msra.mxu0 0.0
    %3453 = vmatprep.subr.mxu0 0.0
    %3454 = vmatpush1.msra.mxu0 0.0
    %3455 = vmatprep.subr.mxu0 0.0
    %3456 = vmatpush1.msra.mxu0 0.0
    %3457 = vmatprep.subr.mxu0 0.0
    %3458 = vmatpush1.msra.mxu0 0.0
    %3459 = vmatprep.mubr.f32.mxu0 0.0
    %3460 = vmatmul.mubr.f32.gmra.mrb[0].mxu0 %v3139
    %v3461 = vpop.f32.mrb[0].mxu0
    %v3462 = vadd.f32 0.0, %v3461
    %v3463 = vpop.f32.mrb[0].mxu0
    %3464 = vmatprep.mubr.f32.mxu0 0.0
    %3465 = vmatmul.mubr.f32.gmra.mrb[0].mxu0 %v3140
    %v3466 = vpop.f32.mrb[0].mxu0
    %v3467 = vadd.f32 0.0, %v3466
    %v3468 = vpop.f32.mrb[0].mxu0
    %3469 = vmatprep.mubr.f32.mxu0 0.0
    %3470 = vmatmul.mubr.f32.gmra.mrb[0].mxu0 %v3141
    %v3471 = vpop.f32.mrb[0].mxu0
    %v3472 = vadd.f32 0.0, %v3471
    %v3473 = vpop.f32.mrb[0].mxu0
    %3474 = vmatprep.mubr.f32.mxu0 0.0
    %3475 = vmatmul.mubr.f32.gmra.mrb[0].mxu0 %v3142
    %v3476 = vpop.f32.mrb[0].mxu0
    %v3477 = vadd.f32 0.0, %v3476
    %v3478 = vpop.f32.mrb[0].mxu0
    %3479 = vmatprep.mubr.f32.mxu0 0.0
    %3480 = vmatmul.mubr.f32.gmra.mrb[0].mxu0 %v3143
    %v3481 = vpop.f32.mrb[0].mxu0
    %v3482 = vadd.f32 0.0, %v3481
    %v3483 = vpop.f32.mrb[0].mxu0
    %3484 = vmatprep.mubr.f32.mxu0 0.0
    %3485 = vmatmul.mubr.f32.gmra.mrb[0].mxu0 %v3144
    %v3486 = vpop.f32.mrb[0].mxu0
    %v3487 = vadd.f32 0.0, %v3486
    %v3488 = vpop.f32.mrb[0].mxu0
    %3489 = vmatprep.mubr.f32.mxu0 0.0
    %3490 = vmatmul.mubr.f32.gmra.mrb[0].mxu0 %v3145
    %v3491 = vpop.f32.mrb[0].mxu0
    %v3492 = vadd.f32 0.0, %v3491
    %v3493 = vpop.f32.mrb[0].mxu0
    %3494 = vmatprep.mubr.f32.mxu0 0.0
    %3495 = vmatmul.mubr.f32.gmra.mrb[0].mxu0 %v3146
    %v3496 = vpop.f32.mrb[0].mxu0
    %v3497 = vadd.f32 0.0, %v3496
    %v3498 = vpop.f32.mrb[0].mxu0
    %3499 = vmatprep.mubr.f32.mxu0 0.0
    %3500 = vmatmul.mubr.f32.gmra.mrb[0].mxu0 %v3147
    %v3501 = vpop.f32.mrb[0].mxu0
    %v3502 = vadd.f32 0.0, %v3501
    %v3503 = vpop.f32.mrb[0].mxu0
    %3504 = vmatprep.mubr.f32.mxu0 0.0
    %3505 = vmatmul.mubr.f32.gmra.mrb[0].mxu0 %v3148
    %v3506 = vpop.f32.mrb[0].mxu0
    %v3507 = vadd.f32 0.0, %v3506
    %v3508 = vpop.f32.mrb[0].mxu0
    %3509 = vmatprep.mubr.f32.mxu0 0.0
    %3510 = vmatmul.mubr.f32.gmra.mrb[0].mxu0 %v3149
    %v3511 = vpop.f32.mrb[0].mxu0
    %v3512 = vadd.f32 0.0, %v3511
    %v3513 = vpop.f32.mrb[0].mxu0
    %3514 = vmatprep.mubr.f32.mxu0 0.0
    %3515 = vmatmul.mubr.f32.gmra.mrb[0].mxu0 %v3150
    %v3516 = vpop.f32.mrb[0].mxu0
    %v3517 = vadd.f32 0.0, %v3516
    %v3518 = vpop.f32.mrb[0].mxu0
    %3519 = vmatprep.mubr.f32.mxu0 0.0
    %3520 = vmatmul.mubr.f32.gmra.mrb[0].mxu0 %v3151
    %v3521 = vpop.f32.mrb[0].mxu0
    %v3522 = vadd.f32 0.0, %v3521
    %v3523 = vpop.f32.mrb[0].mxu0
    %3524 = vmatprep.mubr.f32.mxu0 0.0
    %3525 = vmatmul.mubr.f32.gmra.mrb[0].mxu0 %v3152
    %v3526 = vpop.f32.mrb[0].mxu0
    %v3527 = vadd.f32 0.0, %v3526
    %v3528 = vpop.f32.mrb[0].mxu0
    %3529 = vmatprep.mubr.f32.mxu0 0.0
    %3530 = vmatmul.mubr.f32.gmra.mrb[0].mxu0 %v3153
    %v3531 = vpop.f32.mrb[0].mxu0
    %v3532 = vadd.f32 0.0, %v3531
    %v3533 = vpop.f32.mrb[0].mxu0
    %3534 = vmatprep.mubr.f32.mxu0 0.0
    %3535 = vmatmul.mubr.f32.gmra.mrb[0].mxu0 %v3154
    %v3536 = vpop.f32.mrb[0].mxu0
    %v3537 = vadd.f32 0.0, %v3536
    %v3538 = vpop.f32.mrb[0].mxu0
    %3539 = vdwg.mxu0
    %3540 = vmatprep.subr.mxu0 0.0
    %3541 = vmatpush1.msra.mxu0 %v331
    %3542 = vmatprep.subr.mxu0 0.0
    %3543 = vmatpush1.msra.mxu0 %v332
    %3544 = vmatprep.subr.mxu0 0.0
    %3545 = vmatpush1.msra.mxu0 %v333
    %3546 = vmatprep.subr.mxu0 0.0
    %3547 = vmatpush1.msra.mxu0 %v334
    %3548 = vmatprep.subr.mxu0 0.0
    %3549 = vmatpush1.msra.mxu0 %v335
    %3550 = vmatprep.subr.mxu0 0.0
    %3551 = vmatpush1.msra.mxu0 %v336
    %3552 = vmatprep.subr.mxu0 0.0
    %3553 = vmatpush1.msra.mxu0 %v337
    %3554 = vmatprep.subr.mxu0 0.0
    %3555 = vmatpush1.msra.mxu0 %v338
    %3556 = vmatprep.subr.mxu0 0.0
    %3557 = vmatpush1.msra.mxu0 %v339
    %3558 = vmatprep.subr.mxu0 0.0
    %3559 = vmatpush1.msra.mxu0 %v340
    %3560 = vmatprep.subr.mxu0 0.0
    %3561 = vmatpush1.msra.mxu0 %v341
    %3562 = vmatprep.subr.mxu0 0.0
    %3563 = vmatpush1.msra.mxu0 %v342
    %3564 = vmatprep.subr.mxu0 0.0
    %3565 = vmatpush1.msra.mxu0 %v343
    %3566 = vmatprep.subr.mxu0 0.0
    %3567 = vmatpush1.msra.mxu0 %v344
    %3568 = vmatprep.subr.mxu0 0.0
    %3569 = vmatpush1.msra.mxu0 %v345
    %3570 = vmatprep.subr.mxu0 0.0
    %3571 = vmatpush1.msra.mxu0 %v346
    %3572 = vmatprep.subr.mxu0 0.0
    %3573 = vmatpush1.msra.mxu0 0.0
    %3574 = vmatprep.subr.mxu0 0.0
    %3575 = vmatpush1.msra.mxu0 0.0
    %3576 = vmatprep.subr.mxu0 0.0
    %3577 = vmatpush1.msra.mxu0 0.0
    %3578 = vmatprep.subr.mxu0 0.0
    %3579 = vmatpush1.msra.mxu0 0.0
    %3580 = vmatprep.subr.mxu0 0.0
    %3581 = vmatpush1.msra.mxu0 0.0
    %3582 = vmatprep.subr.mxu0 0.0
    %3583 = vmatpush1.msra.mxu0 0.0
    %3584 = vmatprep.subr.mxu0 0.0
    %3585 = vmatpush1.msra.mxu0 0.0
    %3586 = vmatprep.subr.mxu0 0.0
    %3587 = vmatpush1.msra.mxu0 0.0
    %3588 = vmatprep.subr.mxu0 0.0
    %3589 = vmatpush1.msra.mxu0 0.0
    %3590 = vmatprep.subr.mxu0 0.0
    %3591 = vmatpush1.msra.mxu0 0.0
    %3592 = vmatprep.subr.mxu0 0.0
    %3593 = vmatpush1.msra.mxu0 0.0
    %3594 = vmatprep.subr.mxu0 0.0
    %3595 = vmatpush1.msra.mxu0 0.0
    %3596 = vmatprep.subr.mxu0 0.0
    %3597 = vmatpush1.msra.mxu0 0.0
    %3598 = vmatprep.subr.mxu0 0.0
    %3599 = vmatpush1.msra.mxu0 0.0
    %3600 = vmatprep.subr.mxu0 0.0
    %3601 = vmatpush1.msra.mxu0 0.0
    %3602 = vmatprep.subr.mxu0 0.0
    %3603 = vmatpush1.msra.mxu0 0.0
    %3604 = vmatprep.mubr.f32.mxu0 0.0
    %3605 = vmatmul.mubr.f32.gmra.mrb[0].mxu0 %v3155
    %v3606 = vpop.f32.mrb[0].mxu0
    %v3607 = vadd.f32 0.0, %v3606
    %v3608 = vpop.f32.mrb[0].mxu0
    %3609 = vmatprep.mubr.f32.mxu0 0.0
    %3610 = vmatmul.mubr.f32.gmra.mrb[0].mxu0 %v3156
    %v3611 = vpop.f32.mrb[0].mxu0
    %v3612 = vadd.f32 0.0, %v3611
    %v3613 = vpop.f32.mrb[0].mxu0
    %3614 = vmatprep.mubr.f32.mxu0 0.0
    %3615 = vmatmul.mubr.f32.gmra.mrb[0].mxu0 %v3157
    %v3616 = vpop.f32.mrb[0].mxu0
    %v3617 = vadd.f32 0.0, %v3616
    %v3618 = vpop.f32.mrb[0].mxu0
    %3619 = vmatprep.mubr.f32.mxu0 0.0
    %3620 = vmatmul.mubr.f32.gmra.mrb[0].mxu0 %v3158
    %v3621 = vpop.f32.mrb[0].mxu0
    %v3622 = vadd.f32 0.0, %v3621
    %v3623 = vpop.f32.mrb[0].mxu0
    %3624 = vmatprep.mubr.f32.mxu0 0.0
    %3625 = vmatmul.mubr.f32.gmra.mrb[0].mxu0 %v3159
    %v3626 = vpop.f32.mrb[0].mxu0
    %v3627 = vadd.f32 0.0, %v3626
    %v3628 = vpop.f32.mrb[0].mxu0
    %3629 = vmatprep.mubr.f32.mxu0 0.0
    %3630 = vmatmul.mubr.f32.gmra.mrb[0].mxu0 %v3160
    %v3631 = vpop.f32.mrb[0].mxu0
    %v3632 = vadd.f32 0.0, %v3631
    %v3633 = vpop.f32.mrb[0].mxu0
    %3634 = vmatprep.mubr.f32.mxu0 0.0
    %3635 = vmatmul.mubr.f32.gmra.mrb[0].mxu0 %v3161
    %v3636 = vpop.f32.mrb[0].mxu0
    %v3637 = vadd.f32 0.0, %v3636
    %v3638 = vpop.f32.mrb[0].mxu0
    %3639 = vmatprep.mubr.f32.mxu0 0.0
    %3640 = vmatmul.mubr.f32.gmra.mrb[0].mxu0 %v3162
    %v3641 = vpop.f32.mrb[0].mxu0
    %v3642 = vadd.f32 0.0, %v3641
    %v3643 = vpop.f32.mrb[0].mxu0
    %3644 = vmatprep.mubr.f32.mxu0 0.0
    %3645 = vmatmul.mubr.f32.gmra.mrb[0].mxu0 %v3163
    %v3646 = vpop.f32.mrb[0].mxu0
    %v3647 = vadd.f32 0.0, %v3646
    %v3648 = vpop.f32.mrb[0].mxu0
    %3649 = vmatprep.mubr.f32.mxu0 0.0
    %3650 = vmatmul.mubr.f32.gmra.mrb[0].mxu0 %v3164
    %v3651 = vpop.f32.mrb[0].mxu0
    %v3652 = vadd.f32 0.0, %v3651
    %v3653 = vpop.f32.mrb[0].mxu0
    %3654 = vmatprep.mubr.f32.mxu0 0.0
    %3655 = vmatmul.mubr.f32.gmra.mrb[0].mxu0 %v3165
    %v3656 = vpop.f32.mrb[0].mxu0
    %v3657 = vadd.f32 0.0, %v3656
    %v3658 = vpop.f32.mrb[0].mxu0
    %3659 = vmatprep.mubr.f32.mxu0 0.0
    %3660 = vmatmul.mubr.f32.gmra.mrb[0].mxu0 %v3166
    %v3661 = vpop.f32.mrb[0].mxu0
    %v3662 = vadd.f32 0.0, %v3661
    %v3663 = vpop.f32.mrb[0].mxu0
    %3664 = vmatprep.mubr.f32.mxu0 0.0
    %3665 = vmatmul.mubr.f32.gmra.mrb[0].mxu0 %v3167
    %v3666 = vpop.f32.mrb[0].mxu0
    %v3667 = vadd.f32 0.0, %v3666
    %v3668 = vpop.f32.mrb[0].mxu0
    %3669 = vmatprep.mubr.f32.mxu0 0.0
    %3670 = vmatmul.mubr.f32.gmra.mrb[0].mxu0 %v3168
    %v3671 = vpop.f32.mrb[0].mxu0
    %v3672 = vadd.f32 0.0, %v3671
    %v3673 = vpop.f32.mrb[0].mxu0
    %3674 = vmatprep.mubr.f32.mxu0 0.0
    %3675 = vmatmul.mubr.f32.gmra.mrb[0].mxu0 %v3169
    %v3676 = vpop.f32.mrb[0].mxu0
    %v3677 = vadd.f32 0.0, %v3676
    %v3678 = vpop.f32.mrb[0].mxu0
    %3679 = vmatprep.mubr.f32.mxu0 0.0
    %3680 = vmatmul.mubr.f32.gmra.mrb[0].mxu0 %v3170
    %v3681 = vpop.f32.mrb[0].mxu0
    %v3682 = vadd.f32 0.0, %v3681
    %v3683 = vpop.f32.mrb[0].mxu0
    %3684 = vdwg.mxu0
    %3685 = vmatprep.subr.mxu0 0.0
    %3686 = vmatpush1.msra.mxu0 %v347
    %3687 = vmatprep.subr.mxu0 0.0
    %3688 = vmatpush1.msra.mxu0 %v348
    %3689 = vmatprep.subr.mxu0 0.0
    %3690 = vmatpush1.msra.mxu0 %v349
    %3691 = vmatprep.subr.mxu0 0.0
    %3692 = vmatpush1.msra.mxu0 %v350
    %3693 = vmatprep.subr.mxu0 0.0
    %3694 = vmatpush1.msra.mxu0 %v351
    %3695 = vmatprep.subr.mxu0 0.0
    %3696 = vmatpush1.msra.mxu0 %v352
    %3697 = vmatprep.subr.mxu0 0.0
    %3698 = vmatpush1.msra.mxu0 %v353
    %3699 = vmatprep.subr.mxu0 0.0
    %3700 = vmatpush1.msra.mxu0 %v354
    %3701 = vmatprep.subr.mxu0 0.0
    %3702 = vmatpush1.msra.mxu0 %v355
    %3703 = vmatprep.subr.mxu0 0.0
    %3704 = vmatpush1.msra.mxu0 %v356
    %3705 = vmatprep.subr.mxu0 0.0
    %3706 = vmatpush1.msra.mxu0 %v357
    %3707 = vmatprep.subr.mxu0 0.0
    %3708 = vmatpush1.msra.mxu0 %v358
    %3709 = vmatprep.subr.mxu0 0.0
    %3710 = vmatpush1.msra.mxu0 %v359
    %3711 = vmatprep.subr.mxu0 0.0
    %3712 = vmatpush1.msra.mxu0 %v360
    %3713 = vmatprep.subr.mxu0 0.0
    %3714 = vmatpush1.msra.mxu0 %v361
    %3715 = vmatprep.subr.mxu0 0.0
    %3716 = vmatpush1.msra.mxu0 %v362
    %3717 = vmatprep.subr.mxu0 0.0
    %3718 = vmatpush1.msra.mxu0 0.0
    %3719 = vmatprep.subr.mxu0 0.0
    %3720 = vmatpush1.msra.mxu0 0.0
    %3721 = vmatprep.subr.mxu0 0.0
    %3722 = vmatpush1.msra.mxu0 0.0
    %3723 = vmatprep.subr.mxu0 0.0
    %3724 = vmatpush1.msra.mxu0 0.0
    %3725 = vmatprep.subr.mxu0 0.0
    %3726 = vmatpush1.msra.mxu0 0.0
    %3727 = vmatprep.subr.mxu0 0.0
    %3728 = vmatpush1.msra.mxu0 0.0
    %3729 = vmatprep.subr.mxu0 0.0
    %3730 = vmatpush1.msra.mxu0 0.0
    %3731 = vmatprep.subr.mxu0 0.0
    %3732 = vmatpush1.msra.mxu0 0.0
    %3733 = vmatprep.subr.mxu0 0.0
    %3734 = vmatpush1.msra.mxu0 0.0
    %3735 = vmatprep.subr.mxu0 0.0
    %3736 = vmatpush1.msra.mxu0 0.0
    %3737 = vmatprep.subr.mxu0 0.0
    %3738 = vmatpush1.msra.mxu0 0.0
    %3739 = vmatprep.subr.mxu0 0.0
    %3740 = vmatpush1.msra.mxu0 0.0
    %3741 = vmatprep.subr.mxu0 0.0
    %3742 = vmatpush1.msra.mxu0 0.0
    %3743 = vmatprep.subr.mxu0 0.0
    %3744 = vmatpush1.msra.mxu0 0.0
    %3745 = vmatprep.subr.mxu0 0.0
    %3746 = vmatpush1.msra.mxu0 0.0
    %3747 = vmatprep.subr.mxu0 0.0
    %3748 = vmatpush1.msra.mxu0 0.0
    %3749 = vmatprep.mubr.f32.mxu0 0.0
    %3750 = vmatmul.mubr.f32.gmra.mrb[0].mxu0 %v3171
    %v3751 = vpop.f32.mrb[0].mxu0
    %v3752 = vadd.f32 0.0, %v3751
    %v3753 = vpop.f32.mrb[0].mxu0
    %3754 = vmatprep.mubr.f32.mxu0 0.0
    %3755 = vmatmul.mubr.f32.gmra.mrb[0].mxu0 %v3172
    %v3756 = vpop.f32.mrb[0].mxu0
    %v3757 = vadd.f32 0.0, %v3756
    %v3758 = vpop.f32.mrb[0].mxu0
    %3759 = vmatprep.mubr.f32.mxu0 0.0
    %3760 = vmatmul.mubr.f32.gmra.mrb[0].mxu0 %v3173
    %v3761 = vpop.f32.mrb[0].mxu0
    %v3762 = vadd.f32 0.0, %v3761
    %v3763 = vpop.f32.mrb[0].mxu0
    %3764 = vmatprep.mubr.f32.mxu0 0.0
    %3765 = vmatmul.mubr.f32.gmra.mrb[0].mxu0 %v3174
    %v3766 = vpop.f32.mrb[0].mxu0
    %v3767 = vadd.f32 0.0, %v3766
    %v3768 = vpop.f32.mrb[0].mxu0
    %3769 = vmatprep.mubr.f32.mxu0 0.0
    %3770 = vmatmul.mubr.f32.gmra.mrb[0].mxu0 %v3175
    %v3771 = vpop.f32.mrb[0].mxu0
    %v3772 = vadd.f32 0.0, %v3771
    %v3773 = vpop.f32.mrb[0].mxu0
    %3774 = vmatprep.mubr.f32.mxu0 0.0
    %3775 = vmatmul.mubr.f32.gmra.mrb[0].mxu0 %v3176
    %v3776 = vpop.f32.mrb[0].mxu0
    %v3777 = vadd.f32 0.0, %v3776
    %v3778 = vpop.f32.mrb[0].mxu0
    %3779 = vmatprep.mubr.f32.mxu0 0.0
    %3780 = vmatmul.mubr.f32.gmra.mrb[0].mxu0 %v3177
    %v3781 = vpop.f32.mrb[0].mxu0
    %v3782 = vadd.f32 0.0, %v3781
    %v3783 = vpop.f32.mrb[0].mxu0
    %3784 = vmatprep.mubr.f32.mxu0 0.0
    %3785 = vmatmul.mubr.f32.gmra.mrb[0].mxu0 %v3178
    %v3786 = vpop.f32.mrb[0].mxu0
    %v3787 = vadd.f32 0.0, %v3786
    %v3788 = vpop.f32.mrb[0].mxu0
    %3789 = vmatprep.mubr.f32.mxu0 0.0
    %3790 = vmatmul.mubr.f32.gmra.mrb[0].mxu0 %v3179
    %v3791 = vpop.f32.mrb[0].mxu0
    %v3792 = vadd.f32 0.0, %v3791
    %v3793 = vpop.f32.mrb[0].mxu0
    %3794 = vmatprep.mubr.f32.mxu0 0.0
    %3795 = vmatmul.mubr.f32.gmra.mrb[0].mxu0 %v3180
    %v3796 = vpop.f32.mrb[0].mxu0
    %v3797 = vadd.f32 0.0, %v3796
    %v3798 = vpop.f32.mrb[0].mxu0
    %3799 = vmatprep.mubr.f32.mxu0 0.0
    %3800 = vmatmul.mubr.f32.gmra.mrb[0].mxu0 %v3181
    %v3801 = vpop.f32.mrb[0].mxu0
    %v3802 = vadd.f32 0.0, %v3801
    %v3803 = vpop.f32.mrb[0].mxu0
    %3804 = vmatprep.mubr.f32.mxu0 0.0
    %3805 = vmatmul.mubr.f32.gmra.mrb[0].mxu0 %v3182
    %v3806 = vpop.f32.mrb[0].mxu0
    %v3807 = vadd.f32 0.0, %v3806
    %v3808 = vpop.f32.mrb[0].mxu0
    %3809 = vmatprep.mubr.f32.mxu0 0.0
    %3810 = vmatmul.mubr.f32.gmra.mrb[0].mxu0 %v3183
    %v3811 = vpop.f32.mrb[0].mxu0
    %v3812 = vadd.f32 0.0, %v3811
    %v3813 = vpop.f32.mrb[0].mxu0
    %3814 = vmatprep.mubr.f32.mxu0 0.0
    %3815 = vmatmul.mubr.f32.gmra.mrb[0].mxu0 %v3184
    %v3816 = vpop.f32.mrb[0].mxu0
    %v3817 = vadd.f32 0.0, %v3816
    %v3818 = vpop.f32.mrb[0].mxu0
    %3819 = vmatprep.mubr.f32.mxu0 0.0
    %3820 = vmatmul.mubr.f32.gmra.mrb[0].mxu0 %v3185
    %v3821 = vpop.f32.mrb[0].mxu0
    %v3822 = vadd.f32 0.0, %v3821
    %v3823 = vpop.f32.mrb[0].mxu0
    %3824 = vmatprep.mubr.f32.mxu0 0.0
    %3825 = vmatmul.mubr.f32.gmra.mrb[0].mxu0 %v3186
    %v3826 = vpop.f32.mrb[0].mxu0
    %v3827 = vadd.f32 0.0, %v3826
    %v3828 = vpop.f32.mrb[0].mxu0
    %3829 = vdwg.mxu0
    %3830 = vmatprep.subr.mxu0 0.0
    %3831 = vmatpush1.msra.mxu0 %v363
    %3832 = vmatprep.subr.mxu0 0.0
    %3833 = vmatpush1.msra.mxu0 %v364
    %3834 = vmatprep.subr.mxu0 0.0
    %3835 = vmatpush1.msra.mxu0 %v365
    %3836 = vmatprep.subr.mxu0 0.0
    %3837 = vmatpush1.msra.mxu0 %v366
    %3838 = vmatprep.subr.mxu0 0.0
    %3839 = vmatpush1.msra.mxu0 %v367
    %3840 = vmatprep.subr.mxu0 0.0
    %3841 = vmatpush1.msra.mxu0 %v368
    %3842 = vmatprep.subr.mxu0 0.0
    %3843 = vmatpush1.msra.mxu0 %v369
    %3844 = vmatprep.subr.mxu0 0.0
    %3845 = vmatpush1.msra.mxu0 %v370
    %3846 = vmatprep.subr.mxu0 0.0
    %3847 = vmatpush1.msra.mxu0 %v371
    %3848 = vmatprep.subr.mxu0 0.0
    %3849 = vmatpush1.msra.mxu0 %v372
    %3850 = vmatprep.subr.mxu0 0.0
    %3851 = vmatpush1.msra.mxu0 %v373
    %3852 = vmatprep.subr.mxu0 0.0
    %3853 = vmatpush1.msra.mxu0 %v374
    %3854 = vmatprep.subr.mxu0 0.0
    %3855 = vmatpush1.msra.mxu0 %v375
    %3856 = vmatprep.subr.mxu0 0.0
    %3857 = vmatpush1.msra.mxu0 %v376
    %3858 = vmatprep.subr.mxu0 0.0
    %3859 = vmatpush1.msra.mxu0 %v377
    %3860 = vmatprep.subr.mxu0 0.0
    %3861 = vmatpush1.msra.mxu0 %v378
    %3862 = vmatprep.subr.mxu0 0.0
    %3863 = vmatpush1.msra.mxu0 0.0
    %3864 = vmatprep.subr.mxu0 0.0
    %3865 = vmatpush1.msra.mxu0 0.0
    %3866 = vmatprep.subr.mxu0 0.0
    %3867 = vmatpush1.msra.mxu0 0.0
    %3868 = vmatprep.subr.mxu0 0.0
    %3869 = vmatpush1.msra.mxu0 0.0
    %3870 = vmatprep.subr.mxu0 0.0
    %3871 = vmatpush1.msra.mxu0 0.0
    %3872 = vmatprep.subr.mxu0 0.0
    %3873 = vmatpush1.msra.mxu0 0.0
    %3874 = vmatprep.subr.mxu0 0.0
    %3875 = vmatpush1.msra.mxu0 0.0
    %3876 = vmatprep.subr.mxu0 0.0
    %3877 = vmatpush1.msra.mxu0 0.0
    %3878 = vmatprep.subr.mxu0 0.0
    %3879 = vmatpush1.msra.mxu0 0.0
    %3880 = vmatprep.subr.mxu0 0.0
    %3881 = vmatpush1.msra.mxu0 0.0
    %3882 = vmatprep.subr.mxu0 0.0
    %3883 = vmatpush1.msra.mxu0 0.0
    %3884 = vmatprep.subr.mxu0 0.0
    %3885 = vmatpush1.msra.mxu0 0.0
    %3886 = vmatprep.subr.mxu0 0.0
    %3887 = vmatpush1.msra.mxu0 0.0
    %3888 = vmatprep.subr.mxu0 0.0
    %3889 = vmatpush1.msra.mxu0 0.0
    %3890 = vmatprep.subr.mxu0 0.0
    %3891 = vmatpush1.msra.mxu0 0.0
    %3892 = vmatprep.subr.mxu0 0.0
    %3893 = vmatpush1.msra.mxu0 0.0
    %3894 = vmatprep.mubr.f32.mxu0 0.0
    %3895 = vmatmul.mubr.f32.gmra.mrb[0].mxu0 %v3187
    %v3896 = vpop.f32.mrb[0].mxu0
    %v3897 = vadd.f32 0.0, %v3896
    %v3898 = vpop.f32.mrb[0].mxu0
    %3899 = vmatprep.mubr.f32.mxu0 0.0
    %3900 = vmatmul.mubr.f32.gmra.mrb[0].mxu0 %v3188
    %v3901 = vpop.f32.mrb[0].mxu0
    %v3902 = vadd.f32 0.0, %v3901
    %v3903 = vpop.f32.mrb[0].mxu0
    %3904 = vmatprep.mubr.f32.mxu0 0.0
    %3905 = vmatmul.mubr.f32.gmra.mrb[0].mxu0 %v3189
    %v3906 = vpop.f32.mrb[0].mxu0
    %v3907 = vadd.f32 0.0, %v3906
    %v3908 = vpop.f32.mrb[0].mxu0
    %3909 = vmatprep.mubr.f32.mxu0 0.0
    %3910 = vmatmul.mubr.f32.gmra.mrb[0].mxu0 %v3190
    %v3911 = vpop.f32.mrb[0].mxu0
    %v3912 = vadd.f32 0.0, %v3911
    %v3913 = vpop.f32.mrb[0].mxu0
    %3914 = vmatprep.mubr.f32.mxu0 0.0
    %3915 = vmatmul.mubr.f32.gmra.mrb[0].mxu0 %v3191
    %v3916 = vpop.f32.mrb[0].mxu0
    %v3917 = vadd.f32 0.0, %v3916
    %v3918 = vpop.f32.mrb[0].mxu0
    %3919 = vmatprep.mubr.f32.mxu0 0.0
    %3920 = vmatmul.mubr.f32.gmra.mrb[0].mxu0 %v3192
    %v3921 = vpop.f32.mrb[0].mxu0
    %v3922 = vadd.f32 0.0, %v3921
    %v3923 = vpop.f32.mrb[0].mxu0
    %3924 = vmatprep.mubr.f32.mxu0 0.0
    %3925 = vmatmul.mubr.f32.gmra.mrb[0].mxu0 %v3193
    %v3926 = vpop.f32.mrb[0].mxu0
    %v3927 = vadd.f32 0.0, %v3926
    %v3928 = vpop.f32.mrb[0].mxu0
    %3929 = vmatprep.mubr.f32.mxu0 0.0
    %3930 = vmatmul.mubr.f32.gmra.mrb[0].mxu0 %v3194
    %v3931 = vpop.f32.mrb[0].mxu0
    %v3932 = vadd.f32 0.0, %v3931
    %v3933 = vpop.f32.mrb[0].mxu0
    %3934 = vmatprep.mubr.f32.mxu0 0.0
    %3935 = vmatmul.mubr.f32.gmra.mrb[0].mxu0 %v3195
    %v3936 = vpop.f32.mrb[0].mxu0
    %v3937 = vadd.f32 0.0, %v3936
    %v3938 = vpop.f32.mrb[0].mxu0
    %3939 = vmatprep.mubr.f32.mxu0 0.0
    %3940 = vmatmul.mubr.f32.gmra.mrb[0].mxu0 %v3196
    %v3941 = vpop.f32.mrb[0].mxu0
    %v3942 = vadd.f32 0.0, %v3941
    %v3943 = vpop.f32.mrb[0].mxu0
    %3944 = vmatprep.mubr.f32.mxu0 0.0
    %3945 = vmatmul.mubr.f32.gmra.mrb[0].mxu0 %v3197
    %v3946 = vpop.f32.mrb[0].mxu0
    %v3947 = vadd.f32 0.0, %v3946
    %v3948 = vpop.f32.mrb[0].mxu0
    %3949 = vmatprep.mubr.f32.mxu0 0.0
    %3950 = vmatmul.mubr.f32.gmra.mrb[0].mxu0 %v3198
    %v3951 = vpop.f32.mrb[0].mxu0
    %v3952 = vadd.f32 0.0, %v3951
    %v3953 = vpop.f32.mrb[0].mxu0
    %3954 = vmatprep.mubr.f32.mxu0 0.0
    %3955 = vmatmul.mubr.f32.gmra.mrb[0].mxu0 %v3199
    %v3956 = vpop.f32.mrb[0].mxu0
    %v3957 = vadd.f32 0.0, %v3956
    %v3958 = vpop.f32.mrb[0].mxu0
    %3959 = vmatprep.mubr.f32.mxu0 0.0
    %3960 = vmatmul.mubr.f32.gmra.mrb[0].mxu0 %v3200
    %v3961 = vpop.f32.mrb[0].mxu0
    %v3962 = vadd.f32 0.0, %v3961
    %v3963 = vpop.f32.mrb[0].mxu0
    %3964 = vmatprep.mubr.f32.mxu0 0.0
    %3965 = vmatmul.mubr.f32.gmra.mrb[0].mxu0 %v3201
    %v3966 = vpop.f32.mrb[0].mxu0
    %v3967 = vadd.f32 0.0, %v3966
    %v3968 = vpop.f32.mrb[0].mxu0
    %3969 = vmatprep.mubr.f32.mxu0 0.0
    %3970 = vmatmul.mubr.f32.gmra.mrb[0].mxu0 %v3202
    %v3971 = vpop.f32.mrb[0].mxu0
    %v3972 = vadd.f32 0.0, %v3971
    %v3973 = vpop.f32.mrb[0].mxu0
    %3974 = vdwg.mxu0
    %3975 = vmatprep.subr.mxu0 0.0
    %3976 = vmatpush1.msra.mxu0 %v379
    %3977 = vmatprep.subr.mxu0 0.0
    %3978 = vmatpush1.msra.mxu0 %v380
    %3979 = vmatprep.subr.mxu0 0.0
    %3980 = vmatpush1.msra.mxu0 %v381
    %3981 = vmatprep.subr.mxu0 0.0
    %3982 = vmatpush1.msra.mxu0 %v382
    %3983 = vmatprep.subr.mxu0 0.0
    %3984 = vmatpush1.msra.mxu0 %v383
    %3985 = vmatprep.subr.mxu0 0.0
    %3986 = vmatpush1.msra.mxu0 %v384
    %3987 = vmatprep.subr.mxu0 0.0
    %3988 = vmatpush1.msra.mxu0 %v385
    %3989 = vmatprep.subr.mxu0 0.0
    %3990 = vmatpush1.msra.mxu0 %v386
    %3991 = vmatprep.subr.mxu0 0.0
    %3992 = vmatpush1.msra.mxu0 %v387
    %3993 = vmatprep.subr.mxu0 0.0
    %3994 = vmatpush1.msra.mxu0 %v388
    %3995 = vmatprep.subr.mxu0 0.0
    %3996 = vmatpush1.msra.mxu0 %v389
    %3997 = vmatprep.subr.mxu0 0.0
    %3998 = vmatpush1.msra.mxu0 %v390
    %3999 = vmatprep.subr.mxu0 0.0
    %4000 = vmatpush1.msra.mxu0 %v391
    %4001 = vmatprep.subr.mxu0 0.0
    %4002 = vmatpush1.msra.mxu0 %v392
    %4003 = vmatprep.subr.mxu0 0.0
    %4004 = vmatpush1.msra.mxu0 %v393
    %4005 = vmatprep.subr.mxu0 0.0
    %4006 = vmatpush1.msra.mxu0 %v394
    %4007 = vmatprep.subr.mxu0 0.0
    %4008 = vmatpush1.msra.mxu0 0.0
    %4009 = vmatprep.subr.mxu0 0.0
    %4010 = vmatpush1.msra.mxu0 0.0
    %4011 = vmatprep.subr.mxu0 0.0
    %4012 = vmatpush1.msra.mxu0 0.0
    %4013 = vmatprep.subr.mxu0 0.0
    %4014 = vmatpush1.msra.mxu0 0.0
    %4015 = vmatprep.subr.mxu0 0.0
    %4016 = vmatpush1.msra.mxu0 0.0
    %4017 = vmatprep.subr.mxu0 0.0
    %4018 = vmatpush1.msra.mxu0 0.0
    %4019 = vmatprep.subr.mxu0 0.0
    %4020 = vmatpush1.msra.mxu0 0.0
    %4021 = vmatprep.subr.mxu0 0.0
    %4022 = vmatpush1.msra.mxu0 0.0
    %4023 = vmatprep.subr.mxu0 0.0
    %4024 = vmatpush1.msra.mxu0 0.0
    %4025 = vmatprep.subr.mxu0 0.0
    %4026 = vmatpush1.msra.mxu0 0.0
    %4027 = vmatprep.subr.mxu0 0.0
    %4028 = vmatpush1.msra.mxu0 0.0
    %4029 = vmatprep.subr.mxu0 0.0
    %4030 = vmatpush1.msra.mxu0 0.0
    %4031 = vmatprep.subr.mxu0 0.0
    %4032 = vmatpush1.msra.mxu0 0.0
    %4033 = vmatprep.subr.mxu0 0.0
    %4034 = vmatpush1.msra.mxu0 0.0
    %4035 = vmatprep.subr.mxu0 0.0
    %4036 = vmatpush1.msra.mxu0 0.0
    %4037 = vmatprep.subr.mxu0 0.0
    %4038 = vmatpush1.msra.mxu0 0.0
    %4039 = vmatprep.mubr.f32.mxu0 0.0
    %4040 = vmatmul.mubr.f32.gmra.mrb[0].mxu0 %v3203
    %v4041 = vpop.f32.mrb[0].mxu0
    %v4042 = vadd.f32 0.0, %v4041
    %v4043 = vpop.f32.mrb[0].mxu0
    %4044 = vmatprep.mubr.f32.mxu0 0.0
    %4045 = vmatmul.mubr.f32.gmra.mrb[0].mxu0 %v3204
    %v4046 = vpop.f32.mrb[0].mxu0
    %v4047 = vadd.f32 0.0, %v4046
    %v4048 = vpop.f32.mrb[0].mxu0
    %4049 = vmatprep.mubr.f32.mxu0 0.0
    %4050 = vmatmul.mubr.f32.gmra.mrb[0].mxu0 %v3205
    %v4051 = vpop.f32.mrb[0].mxu0
    %v4052 = vadd.f32 0.0, %v4051
    %v4053 = vpop.f32.mrb[0].mxu0
    %4054 = vmatprep.mubr.f32.mxu0 0.0
    %4055 = vmatmul.mubr.f32.gmra.mrb[0].mxu0 %v3206
    %v4056 = vpop.f32.mrb[0].mxu0
    %v4057 = vadd.f32 0.0, %v4056
    %v4058 = vpop.f32.mrb[0].mxu0
    %4059 = vmatprep.mubr.f32.mxu0 0.0
    %4060 = vmatmul.mubr.f32.gmra.mrb[0].mxu0 %v3207
    %v4061 = vpop.f32.mrb[0].mxu0
    %v4062 = vadd.f32 0.0, %v4061
    %v4063 = vpop.f32.mrb[0].mxu0
    %4064 = vmatprep.mubr.f32.mxu0 0.0
    %4065 = vmatmul.mubr.f32.gmra.mrb[0].mxu0 %v3208
    %v4066 = vpop.f32.mrb[0].mxu0
    %v4067 = vadd.f32 0.0, %v4066
    %v4068 = vpop.f32.mrb[0].mxu0
    %4069 = vmatprep.mubr.f32.mxu0 0.0
    %4070 = vmatmul.mubr.f32.gmra.mrb[0].mxu0 %v3209
    %v4071 = vpop.f32.mrb[0].mxu0
    %v4072 = vadd.f32 0.0, %v4071
    %v4073 = vpop.f32.mrb[0].mxu0
    %4074 = vmatprep.mubr.f32.mxu0 0.0
    %4075 = vmatmul.mubr.f32.gmra.mrb[0].mxu0 %v3210
    %v4076 = vpop.f32.mrb[0].mxu0
    %v4077 = vadd.f32 0.0, %v4076
    %v4078 = vpop.f32.mrb[0].mxu0
    %4079 = vmatprep.mubr.f32.mxu0 0.0
    %4080 = vmatmul.mubr.f32.gmra.mrb[0].mxu0 %v3211
    %v4081 = vpop.f32.mrb[0].mxu0
    %v4082 = vadd.f32 0.0, %v4081
    %v4083 = vpop.f32.mrb[0].mxu0
    %4084 = vmatprep.mubr.f32.mxu0 0.0
    %4085 = vmatmul.mubr.f32.gmra.mrb[0].mxu0 %v3212
    %v4086 = vpop.f32.mrb[0].mxu0
    %v4087 = vadd.f32 0.0, %v4086
    %v4088 = vpop.f32.mrb[0].mxu0
    %4089 = vmatprep.mubr.f32.mxu0 0.0
    %4090 = vmatmul.mubr.f32.gmra.mrb[0].mxu0 %v3213
    %v4091 = vpop.f32.mrb[0].mxu0
    %v4092 = vadd.f32 0.0, %v4091
    %v4093 = vpop.f32.mrb[0].mxu0
    %4094 = vmatprep.mubr.f32.mxu0 0.0
    %4095 = vmatmul.mubr.f32.gmra.mrb[0].mxu0 %v3214
    %v4096 = vpop.f32.mrb[0].mxu0
    %v4097 = vadd.f32 0.0, %v4096
    %v4098 = vpop.f32.mrb[0].mxu0
    %4099 = vmatprep.mubr.f32.mxu0 0.0
    %4100 = vmatmul.mubr.f32.gmra.mrb[0].mxu0 %v3215
    %v4101 = vpop.f32.mrb[0].mxu0
    %v4102 = vadd.f32 0.0, %v4101
    %v4103 = vpop.f32.mrb[0].mxu0
    %4104 = vmatprep.mubr.f32.mxu0 0.0
    %4105 = vmatmul.mubr.f32.gmra.mrb[0].mxu0 %v3216
    %v4106 = vpop.f32.mrb[0].mxu0
    %v4107 = vadd.f32 0.0, %v4106
    %v4108 = vpop.f32.mrb[0].mxu0
    %4109 = vmatprep.mubr.f32.mxu0 0.0
    %4110 = vmatmul.mubr.f32.gmra.mrb[0].mxu0 %v3217
    %v4111 = vpop.f32.mrb[0].mxu0
    %v4112 = vadd.f32 0.0, %v4111
    %v4113 = vpop.f32.mrb[0].mxu0
    %4114 = vmatprep.mubr.f32.mxu0 0.0
    %4115 = vmatmul.mubr.f32.gmra.mrb[0].mxu0 %v3218
    %v4116 = vpop.f32.mrb[0].mxu0
    %v4117 = vadd.f32 0.0, %v4116
    %v4118 = vpop.f32.mrb[0].mxu0
    %4119 = vdwg.mxu0
    %4120 = vmatprep.subr.mxu0 0.0
    %4121 = vmatpush1.msra.mxu0 %v395
    %4122 = vmatprep.subr.mxu0 0.0
    %4123 = vmatpush1.msra.mxu0 %v396
    %4124 = vmatprep.subr.mxu0 0.0
    %4125 = vmatpush1.msra.mxu0 %v397
    %4126 = vmatprep.subr.mxu0 0.0
    %4127 = vmatpush1.msra.mxu0 %v398
    %4128 = vmatprep.subr.mxu0 0.0
    %4129 = vmatpush1.msra.mxu0 %v399
    %4130 = vmatprep.subr.mxu0 0.0
    %4131 = vmatpush1.msra.mxu0 %v400
    %4132 = vmatprep.subr.mxu0 0.0
    %4133 = vmatpush1.msra.mxu0 %v401
    %4134 = vmatprep.subr.mxu0 0.0
    %4135 = vmatpush1.msra.mxu0 %v402
    %4136 = vmatprep.subr.mxu0 0.0
    %4137 = vmatpush1.msra.mxu0 %v403
    %4138 = vmatprep.subr.mxu0 0.0
    %4139 = vmatpush1.msra.mxu0 %v404
    %4140 = vmatprep.subr.mxu0 0.0
    %4141 = vmatpush1.msra.mxu0 %v405
    %4142 = vmatprep.subr.mxu0 0.0
    %4143 = vmatpush1.msra.mxu0 %v406
    %4144 = vmatprep.subr.mxu0 0.0
    %4145 = vmatpush1.msra.mxu0 %v407
    %4146 = vmatprep.subr.mxu0 0.0
    %4147 = vmatpush1.msra.mxu0 %v408
    %4148 = vmatprep.subr.mxu0 0.0
    %4149 = vmatpush1.msra.mxu0 %v409
    %4150 = vmatprep.subr.mxu0 0.0
    %4151 = vmatpush1.msra.mxu0 %v410
    %4152 = vmatprep.subr.mxu0 0.0
    %4153 = vmatpush1.msra.mxu0 0.0
    %4154 = vmatprep.subr.mxu0 0.0
    %4155 = vmatpush1.msra.mxu0 0.0
    %4156 = vmatprep.subr.mxu0 0.0
    %4157 = vmatpush1.msra.mxu0 0.0
    %4158 = vmatprep.subr.mxu0 0.0
    %4159 = vmatpush1.msra.mxu0 0.0
    %4160 = vmatprep.subr.mxu0 0.0
    %4161 = vmatpush1.msra.mxu0 0.0
    %4162 = vmatprep.subr.mxu0 0.0
    %4163 = vmatpush1.msra.mxu0 0.0
    %4164 = vmatprep.subr.mxu0 0.0
    %4165 = vmatpush1.msra.mxu0 0.0
    %4166 = vmatprep.subr.mxu0 0.0
    %4167 = vmatpush1.msra.mxu0 0.0
    %4168 = vmatprep.subr.mxu0 0.0
    %4169 = vmatpush1.msra.mxu0 0.0
    %4170 = vmatprep.subr.mxu0 0.0
    %4171 = vmatpush1.msra.mxu0 0.0
    %4172 = vmatprep.subr.mxu0 0.0
    %4173 = vmatpush1.msra.mxu0 0.0
    %4174 = vmatprep.subr.mxu0 0.0
    %4175 = vmatpush1.msra.mxu0 0.0
    %4176 = vmatprep.subr.mxu0 0.0
    %4177 = vmatpush1.msra.mxu0 0.0
    %4178 = vmatprep.subr.mxu0 0.0
    %4179 = vmatpush1.msra.mxu0 0.0
    %4180 = vmatprep.subr.mxu0 0.0
    %4181 = vmatpush1.msra.mxu0 0.0
    %4182 = vmatprep.subr.mxu0 0.0
    %4183 = vmatpush1.msra.mxu0 0.0
    %4184 = vmatprep.mubr.f32.mxu0 0.0
    %4185 = vmatmul.mubr.f32.gmra.mrb[0].mxu0 %v3219
    %v4186 = vpop.f32.mrb[0].mxu0
    %v4187 = vadd.f32 0.0, %v4186
    %v4188 = vpop.f32.mrb[0].mxu0
    %4189 = vmatprep.mubr.f32.mxu0 0.0
    %4190 = vmatmul.mubr.f32.gmra.mrb[0].mxu0 %v3220
    %v4191 = vpop.f32.mrb[0].mxu0
    %v4192 = vadd.f32 0.0, %v4191
    %v4193 = vpop.f32.mrb[0].mxu0
    %4194 = vmatprep.mubr.f32.mxu0 0.0
    %4195 = vmatmul.mubr.f32.gmra.mrb[0].mxu0 %v3221
    %v4196 = vpop.f32.mrb[0].mxu0
    %v4197 = vadd.f32 0.0, %v4196
    %v4198 = vpop.f32.mrb[0].mxu0
    %4199 = vmatprep.mubr.f32.mxu0 0.0
    %4200 = vmatmul.mubr.f32.gmra.mrb[0].mxu0 %v3222
    %v4201 = vpop.f32.mrb[0].mxu0
    %v4202 = vadd.f32 0.0, %v4201
    %v4203 = vpop.f32.mrb[0].mxu0
    %4204 = vmatprep.mubr.f32.mxu0 0.0
    %4205 = vmatmul.mubr.f32.gmra.mrb[0].mxu0 %v3223
    %v4206 = vpop.f32.mrb[0].mxu0
    %v4207 = vadd.f32 0.0, %v4206
    %v4208 = vpop.f32.mrb[0].mxu0
    %4209 = vmatprep.mubr.f32.mxu0 0.0
    %4210 = vmatmul.mubr.f32.gmra.mrb[0].mxu0 %v3224
    %v4211 = vpop.f32.mrb[0].mxu0
    %v4212 = vadd.f32 0.0, %v4211
    %v4213 = vpop.f32.mrb[0].mxu0
    %4214 = vmatprep.mubr.f32.mxu0 0.0
    %4215 = vmatmul.mubr.f32.gmra.mrb[0].mxu0 %v3225
    %v4216 = vpop.f32.mrb[0].mxu0
    %v4217 = vadd.f32 0.0, %v4216
    %v4218 = vpop.f32.mrb[0].mxu0
    %4219 = vmatprep.mubr.f32.mxu0 0.0
    %4220 = vmatmul.mubr.f32.gmra.mrb[0].mxu0 %v3226
    %v4221 = vpop.f32.mrb[0].mxu0
    %v4222 = vadd.f32 0.0, %v4221
    %v4223 = vpop.f32.mrb[0].mxu0
    %4224 = vmatprep.mubr.f32.mxu0 0.0
    %4225 = vmatmul.mubr.f32.gmra.mrb[0].mxu0 %v3227
    %v4226 = vpop.f32.mrb[0].mxu0
    %v4227 = vadd.f32 0.0, %v4226
    %v4228 = vpop.f32.mrb[0].mxu0
    %4229 = vmatprep.mubr.f32.mxu0 0.0
    %4230 = vmatmul.mubr.f32.gmra.mrb[0].mxu0 %v3228
    %v4231 = vpop.f32.mrb[0].mxu0
    %v4232 = vadd.f32 0.0, %v4231
    %v4233 = vpop.f32.mrb[0].mxu0
    %4234 = vmatprep.mubr.f32.mxu0 0.0
    %4235 = vmatmul.mubr.f32.gmra.mrb[0].mxu0 %v3229
    %v4236 = vpop.f32.mrb[0].mxu0
    %v4237 = vadd.f32 0.0, %v4236
    %v4238 = vpop.f32.mrb[0].mxu0
    %4239 = vmatprep.mubr.f32.mxu0 0.0
    %4240 = vmatmul.mubr.f32.gmra.mrb[0].mxu0 %v3230
    %v4241 = vpop.f32.mrb[0].mxu0
    %v4242 = vadd.f32 0.0, %v4241
    %v4243 = vpop.f32.mrb[0].mxu0
    %4244 = vmatprep.mubr.f32.mxu0 0.0
    %4245 = vmatmul.mubr.f32.gmra.mrb[0].mxu0 %v3231
    %v4246 = vpop.f32.mrb[0].mxu0
    %v4247 = vadd.f32 0.0, %v4246
    %v4248 = vpop.f32.mrb[0].mxu0
    %4249 = vmatprep.mubr.f32.mxu0 0.0
    %4250 = vmatmul.mubr.f32.gmra.mrb[0].mxu0 %v3232
    %v4251 = vpop.f32.mrb[0].mxu0
    %v4252 = vadd.f32 0.0, %v4251
    %v4253 = vpop.f32.mrb[0].mxu0
    %4254 = vmatprep.mubr.f32.mxu0 0.0
    %4255 = vmatmul.mubr.f32.gmra.mrb[0].mxu0 %v3233
    %v4256 = vpop.f32.mrb[0].mxu0
    %v4257 = vadd.f32 0.0, %v4256
    %v4258 = vpop.f32.mrb[0].mxu0
    %4259 = vmatprep.mubr.f32.mxu0 0.0
    %4260 = vmatmul.mubr.f32.gmra.mrb[0].mxu0 %v3234
    %v4261 = vpop.f32.mrb[0].mxu0
    %v4262 = vadd.f32 0.0, %v4261
    %v4263 = vpop.f32.mrb[0].mxu0
    %4264 = vdwg.mxu0
    %4265 = vmatprep.subr.mxu0 0.0
    %4266 = vmatpush1.msra.mxu0 %v411
    %4267 = vmatprep.subr.mxu0 0.0
    %4268 = vmatpush1.msra.mxu0 %v412
    %4269 = vmatprep.subr.mxu0 0.0
    %4270 = vmatpush1.msra.mxu0 %v413
    %4271 = vmatprep.subr.mxu0 0.0
    %4272 = vmatpush1.msra.mxu0 %v414
    %4273 = vmatprep.subr.mxu0 0.0
    %4274 = vmatpush1.msra.mxu0 %v415
    %4275 = vmatprep.subr.mxu0 0.0
    %4276 = vmatpush1.msra.mxu0 %v416
    %4277 = vmatprep.subr.mxu0 0.0
    %4278 = vmatpush1.msra.mxu0 %v417
    %4279 = vmatprep.subr.mxu0 0.0
    %4280 = vmatpush1.msra.mxu0 %v418
    %4281 = vmatprep.subr.mxu0 0.0
    %4282 = vmatpush1.msra.mxu0 %v419
    %4283 = vmatprep.subr.mxu0 0.0
    %4284 = vmatpush1.msra.mxu0 %v420
    %4285 = vmatprep.subr.mxu0 0.0
    %4286 = vmatpush1.msra.mxu0 %v421
    %4287 = vmatprep.subr.mxu0 0.0
    %4288 = vmatpush1.msra.mxu0 %v422
    %4289 = vmatprep.subr.mxu0 0.0
    %4290 = vmatpush1.msra.mxu0 %v423
    %4291 = vmatprep.subr.mxu0 0.0
    %4292 = vmatpush1.msra.mxu0 %v424
    %4293 = vmatprep.subr.mxu0 0.0
    %4294 = vmatpush1.msra.mxu0 %v425
    %4295 = vmatprep.subr.mxu0 0.0
    %4296 = vmatpush1.msra.mxu0 %v426
    %4297 = vmatprep.subr.mxu0 0.0
    %4298 = vmatpush1.msra.mxu0 0.0
    %4299 = vmatprep.subr.mxu0 0.0
    %4300 = vmatpush1.msra.mxu0 0.0
    %4301 = vmatprep.subr.mxu0 0.0
    %4302 = vmatpush1.msra.mxu0 0.0
    %4303 = vmatprep.subr.mxu0 0.0
    %4304 = vmatpush1.msra.mxu0 0.0
    %4305 = vmatprep.subr.mxu0 0.0
    %4306 = vmatpush1.msra.mxu0 0.0
    %4307 = vmatprep.subr.mxu0 0.0
    %4308 = vmatpush1.msra.mxu0 0.0
    %4309 = vmatprep.subr.mxu0 0.0
    %4310 = vmatpush1.msra.mxu0 0.0
    %4311 = vmatprep.subr.mxu0 0.0
    %4312 = vmatpush1.msra.mxu0 0.0
    %4313 = vmatprep.subr.mxu0 0.0
    %4314 = vmatpush1.msra.mxu0 0.0
    %4315 = vmatprep.subr.mxu0 0.0
    %4316 = vmatpush1.msra.mxu0 0.0
    %4317 = vmatprep.subr.mxu0 0.0
    %4318 = vmatpush1.msra.mxu0 0.0
    %4319 = vmatprep.subr.mxu0 0.0
    %4320 = vmatpush1.msra.mxu0 0.0
    %4321 = vmatprep.subr.mxu0 0.0
    %4322 = vmatpush1.msra.mxu0 0.0
    %4323 = vmatprep.subr.mxu0 0.0
    %4324 = vmatpush1.msra.mxu0 0.0
    %4325 = vmatprep.subr.mxu0 0.0
    %4326 = vmatpush1.msra.mxu0 0.0
    %4327 = vmatprep.subr.mxu0 0.0
    %4328 = vmatpush1.msra.mxu0 0.0
    %4329 = vmatprep.mubr.f32.mxu0 0.0
    %4330 = vmatmul.mubr.f32.gmra.mrb[0].mxu0 %v3235
    %v4331 = vpop.f32.mrb[0].mxu0
    %v4332 = vadd.f32 0.0, %v4331
    %v4333 = vpop.f32.mrb[0].mxu0
    %4334 = vmatprep.mubr.f32.mxu0 0.0
    %4335 = vmatmul.mubr.f32.gmra.mrb[0].mxu0 %v3236
    %v4336 = vpop.f32.mrb[0].mxu0
    %v4337 = vadd.f32 0.0, %v4336
    %v4338 = vpop.f32.mrb[0].mxu0
    %4339 = vmatprep.mubr.f32.mxu0 0.0
    %4340 = vmatmul.mubr.f32.gmra.mrb[0].mxu0 %v3237
    %v4341 = vpop.f32.mrb[0].mxu0
    %v4342 = vadd.f32 0.0, %v4341
    %v4343 = vpop.f32.mrb[0].mxu0
    %4344 = vmatprep.mubr.f32.mxu0 0.0
    %4345 = vmatmul.mubr.f32.gmra.mrb[0].mxu0 %v3238
    %v4346 = vpop.f32.mrb[0].mxu0
    %v4347 = vadd.f32 0.0, %v4346
    %v4348 = vpop.f32.mrb[0].mxu0
    %4349 = vmatprep.mubr.f32.mxu0 0.0
    %4350 = vmatmul.mubr.f32.gmra.mrb[0].mxu0 %v3239
    %v4351 = vpop.f32.mrb[0].mxu0
    %v4352 = vadd.f32 0.0, %v4351
    %v4353 = vpop.f32.mrb[0].mxu0
    %4354 = vmatprep.mubr.f32.mxu0 0.0
    %4355 = vmatmul.mubr.f32.gmra.mrb[0].mxu0 %v3240
    %v4356 = vpop.f32.mrb[0].mxu0
    %v4357 = vadd.f32 0.0, %v4356
    %v4358 = vpop.f32.mrb[0].mxu0
    %4359 = vmatprep.mubr.f32.mxu0 0.0
    %4360 = vmatmul.mubr.f32.gmra.mrb[0].mxu0 %v3241
    %v4361 = vpop.f32.mrb[0].mxu0
    %v4362 = vadd.f32 0.0, %v4361
    %v4363 = vpop.f32.mrb[0].mxu0
    %4364 = vmatprep.mubr.f32.mxu0 0.0
    %4365 = vmatmul.mubr.f32.gmra.mrb[0].mxu0 %v3242
    %v4366 = vpop.f32.mrb[0].mxu0
    %v4367 = vadd.f32 0.0, %v4366
    %v4368 = vpop.f32.mrb[0].mxu0
    %4369 = vmatprep.mubr.f32.mxu0 0.0
    %4370 = vmatmul.mubr.f32.gmra.mrb[0].mxu0 %v3243
    %v4371 = vpop.f32.mrb[0].mxu0
    %v4372 = vadd.f32 0.0, %v4371
    %v4373 = vpop.f32.mrb[0].mxu0
    %4374 = vmatprep.mubr.f32.mxu0 0.0
    %4375 = vmatmul.mubr.f32.gmra.mrb[0].mxu0 %v3244
    %v4376 = vpop.f32.mrb[0].mxu0
    %v4377 = vadd.f32 0.0, %v4376
    %v4378 = vpop.f32.mrb[0].mxu0
    %4379 = vmatprep.mubr.f32.mxu0 0.0
    %4380 = vmatmul.mubr.f32.gmra.mrb[0].mxu0 %v3245
    %v4381 = vpop.f32.mrb[0].mxu0
    %v4382 = vadd.f32 0.0, %v4381
    %v4383 = vpop.f32.mrb[0].mxu0
    %4384 = vmatprep.mubr.f32.mxu0 0.0
    %4385 = vmatmul.mubr.f32.gmra.mrb[0].mxu0 %v3246
    %v4386 = vpop.f32.mrb[0].mxu0
    %v4387 = vadd.f32 0.0, %v4386
    %v4388 = vpop.f32.mrb[0].mxu0
    %4389 = vmatprep.mubr.f32.mxu0 0.0
    %4390 = vmatmul.mubr.f32.gmra.mrb[0].mxu0 %v3247
    %v4391 = vpop.f32.mrb[0].mxu0
    %v4392 = vadd.f32 0.0, %v4391
    %v4393 = vpop.f32.mrb[0].mxu0
    %4394 = vmatprep.mubr.f32.mxu0 0.0
    %4395 = vmatmul.mubr.f32.gmra.mrb[0].mxu0 %v3248
    %v4396 = vpop.f32.mrb[0].mxu0
    %v4397 = vadd.f32 0.0, %v4396
    %v4398 = vpop.f32.mrb[0].mxu0
    %4399 = vmatprep.mubr.f32.mxu0 0.0
    %4400 = vmatmul.mubr.f32.gmra.mrb[0].mxu0 %v3249
    %v4401 = vpop.f32.mrb[0].mxu0
    %v4402 = vadd.f32 0.0, %v4401
    %v4403 = vpop.f32.mrb[0].mxu0
    %4404 = vmatprep.mubr.f32.mxu0 0.0
    %4405 = vmatmul.mubr.f32.gmra.mrb[0].mxu0 %v3250
    %v4406 = vpop.f32.mrb[0].mxu0
    %v4407 = vadd.f32 0.0, %v4406
    %v4408 = vpop.f32.mrb[0].mxu0
    %4409 = vdwg.mxu0
    %4410 = vmatprep.subr.mxu0 0.0
    %4411 = vmatpush1.msra.mxu0 %v427
    %4412 = vmatprep.subr.mxu0 0.0
    %4413 = vmatpush1.msra.mxu0 %v428
    %4414 = vmatprep.subr.mxu0 0.0
    %4415 = vmatpush1.msra.mxu0 %v429
    %4416 = vmatprep.subr.mxu0 0.0
    %4417 = vmatpush1.msra.mxu0 %v430
    %4418 = vmatprep.subr.mxu0 0.0
    %4419 = vmatpush1.msra.mxu0 %v431
    %4420 = vmatprep.subr.mxu0 0.0
    %4421 = vmatpush1.msra.mxu0 %v432
    %4422 = vmatprep.subr.mxu0 0.0
    %4423 = vmatpush1.msra.mxu0 %v433
    %4424 = vmatprep.subr.mxu0 0.0
    %4425 = vmatpush1.msra.mxu0 %v434
    %4426 = vmatprep.subr.mxu0 0.0
    %4427 = vmatpush1.msra.mxu0 %v435
    %4428 = vmatprep.subr.mxu0 0.0
    %4429 = vmatpush1.msra.mxu0 %v436
    %4430 = vmatprep.subr.mxu0 0.0
    %4431 = vmatpush1.msra.mxu0 %v437
    %4432 = vmatprep.subr.mxu0 0.0
    %4433 = vmatpush1.msra.mxu0 %v438
    %4434 = vmatprep.subr.mxu0 0.0
    %4435 = vmatpush1.msra.mxu0 %v439
    %4436 = vmatprep.subr.mxu0 0.0
    %4437 = vmatpush1.msra.mxu0 %v440
    %4438 = vmatprep.subr.mxu0 0.0
    %4439 = vmatpush1.msra.mxu0 %v441
    %4440 = vmatprep.subr.mxu0 0.0
    %4441 = vmatpush1.msra.mxu0 %v442
    %4442 = vmatprep.subr.mxu0 0.0
    %4443 = vmatpush1.msra.mxu0 0.0
    %4444 = vmatprep.subr.mxu0 0.0
    %4445 = vmatpush1.msra.mxu0 0.0
    %4446 = vmatprep.subr.mxu0 0.0
    %4447 = vmatpush1.msra.mxu0 0.0
    %4448 = vmatprep.subr.mxu0 0.0
    %4449 = vmatpush1.msra.mxu0 0.0
    %4450 = vmatprep.subr.mxu0 0.0
    %4451 = vmatpush1.msra.mxu0 0.0
    %4452 = vmatprep.subr.mxu0 0.0
    %4453 = vmatpush1.msra.mxu0 0.0
    %4454 = vmatprep.subr.mxu0 0.0
    %4455 = vmatpush1.msra.mxu0 0.0
    %4456 = vmatprep.subr.mxu0 0.0
    %4457 = vmatpush1.msra.mxu0 0.0
    %4458 = vmatprep.subr.mxu0 0.0
    %4459 = vmatpush1.msra.mxu0 0.0
    %4460 = vmatprep.subr.mxu0 0.0
    %4461 = vmatpush1.msra.mxu0 0.0
    %4462 = vmatprep.subr.mxu0 0.0
    %4463 = vmatpush1.msra.mxu0 0.0
    %4464 = vmatprep.subr.mxu0 0.0
    %4465 = vmatpush1.msra.mxu0 0.0
    %4466 = vmatprep.subr.mxu0 0.0
    %4467 = vmatpush1.msra.mxu0 0.0
    %4468 = vmatprep.subr.mxu0 0.0
    %4469 = vmatpush1.msra.mxu0 0.0
    %4470 = vmatprep.subr.mxu0 0.0
    %4471 = vmatpush1.msra.mxu0 0.0
    %4472 = vmatprep.subr.mxu0 0.0
    %4473 = vmatpush1.msra.mxu0 0.0
    %4474 = vmatprep.mubr.f32.mxu0 0.0
    %4475 = vmatmul.mubr.f32.gmra.mrb[0].mxu0 %v3251
    %v4476 = vpop.f32.mrb[0].mxu0
    %v4477 = vadd.f32 0.0, %v4476
    %v4478 = vpop.f32.mrb[0].mxu0
    %4479 = vmatprep.mubr.f32.mxu0 0.0
    %4480 = vmatmul.mubr.f32.gmra.mrb[0].mxu0 %v3252
    %v4481 = vpop.f32.mrb[0].mxu0
    %v4482 = vadd.f32 0.0, %v4481
    %v4483 = vpop.f32.mrb[0].mxu0
    %4484 = vmatprep.mubr.f32.mxu0 0.0
    %4485 = vmatmul.mubr.f32.gmra.mrb[0].mxu0 %v3253
    %v4486 = vpop.f32.mrb[0].mxu0
    %v4487 = vadd.f32 0.0, %v4486
    %v4488 = vpop.f32.mrb[0].mxu0
    %4489 = vmatprep.mubr.f32.mxu0 0.0
    %4490 = vmatmul.mubr.f32.gmra.mrb[0].mxu0 %v3254
    %v4491 = vpop.f32.mrb[0].mxu0
    %v4492 = vadd.f32 0.0, %v4491
    %v4493 = vpop.f32.mrb[0].mxu0
    %4494 = vmatprep.mubr.f32.mxu0 0.0
    %4495 = vmatmul.mubr.f32.gmra.mrb[0].mxu0 %v3255
    %v4496 = vpop.f32.mrb[0].mxu0
    %v4497 = vadd.f32 0.0, %v4496
    %v4498 = vpop.f32.mrb[0].mxu0
    %4499 = vmatprep.mubr.f32.mxu0 0.0
    %4500 = vmatmul.mubr.f32.gmra.mrb[0].mxu0 %v3256
    %v4501 = vpop.f32.mrb[0].mxu0
    %v4502 = vadd.f32 0.0, %v4501
    %v4503 = vpop.f32.mrb[0].mxu0
    %4504 = vmatprep.mubr.f32.mxu0 0.0
    %4505 = vmatmul.mubr.f32.gmra.mrb[0].mxu0 %v3257
    %v4506 = vpop.f32.mrb[0].mxu0
    %v4507 = vadd.f32 0.0, %v4506
    %v4508 = vpop.f32.mrb[0].mxu0
    %4509 = vmatprep.mubr.f32.mxu0 0.0
    %4510 = vmatmul.mubr.f32.gmra.mrb[0].mxu0 %v3258
    %v4511 = vpop.f32.mrb[0].mxu0
    %v4512 = vadd.f32 0.0, %v4511
    %v4513 = vpop.f32.mrb[0].mxu0
    %4514 = vmatprep.mubr.f32.mxu0 0.0
    %4515 = vmatmul.mubr.f32.gmra.mrb[0].mxu0 %v3259
    %v4516 = vpop.f32.mrb[0].mxu0
    %v4517 = vadd.f32 0.0, %v4516
    %v4518 = vpop.f32.mrb[0].mxu0
    %4519 = vmatprep.mubr.f32.mxu0 0.0
    %4520 = vmatmul.mubr.f32.gmra.mrb[0].mxu0 %v3260
    %v4521 = vpop.f32.mrb[0].mxu0
    %v4522 = vadd.f32 0.0, %v4521
    %v4523 = vpop.f32.mrb[0].mxu0
    %4524 = vmatprep.mubr.f32.mxu0 0.0
    %4525 = vmatmul.mubr.f32.gmra.mrb[0].mxu0 %v3261
    %v4526 = vpop.f32.mrb[0].mxu0
    %v4527 = vadd.f32 0.0, %v4526
    %v4528 = vpop.f32.mrb[0].mxu0
    %4529 = vmatprep.mubr.f32.mxu0 0.0
    %4530 = vmatmul.mubr.f32.gmra.mrb[0].mxu0 %v3262
    %v4531 = vpop.f32.mrb[0].mxu0
    %v4532 = vadd.f32 0.0, %v4531
    %v4533 = vpop.f32.mrb[0].mxu0
    %4534 = vmatprep.mubr.f32.mxu0 0.0
    %4535 = vmatmul.mubr.f32.gmra.mrb[0].mxu0 %v3263
    %v4536 = vpop.f32.mrb[0].mxu0
    %v4537 = vadd.f32 0.0, %v4536
    %v4538 = vpop.f32.mrb[0].mxu0
    %4539 = vmatprep.mubr.f32.mxu0 0.0
    %4540 = vmatmul.mubr.f32.gmra.mrb[0].mxu0 %v3264
    %v4541 = vpop.f32.mrb[0].mxu0
    %v4542 = vadd.f32 0.0, %v4541
    %v4543 = vpop.f32.mrb[0].mxu0
    %4544 = vmatprep.mubr.f32.mxu0 0.0
    %4545 = vmatmul.mubr.f32.gmra.mrb[0].mxu0 %v3265
    %v4546 = vpop.f32.mrb[0].mxu0
    %v4547 = vadd.f32 0.0, %v4546
    %v4548 = vpop.f32.mrb[0].mxu0
    %4549 = vmatprep.mubr.f32.mxu0 0.0
    %4550 = vmatmul.mubr.f32.gmra.mrb[0].mxu0 %v3266
    %v4551 = vpop.f32.mrb[0].mxu0
    %v4552 = vadd.f32 0.0, %v4551
    %v4553 = vpop.f32.mrb[0].mxu0
    %4554 = vdwg.mxu0
    %4555 = vst [vmem:[#allocation8] sm:$0xff] %v3462
    %4556 = vst [vmem:[#allocation8 + $0x8] sm:$0xff] %v3467
    %4557 = vst [vmem:[#allocation8 + $0x10] sm:$0xff] %v3472
    %4558 = vst [vmem:[#allocation8 + $0x18] sm:$0xff] %v3477
    %4559 = vst [vmem:[#allocation8 + $0x20] sm:$0xff] %v3482
    %4560 = vst [vmem:[#allocation8 + $0x28] sm:$0xff] %v3487
    %4561 = vst [vmem:[#allocation8 + $0x30] sm:$0xff] %v3492
    %4562 = vst [vmem:[#allocation8 + $0x38] sm:$0xff] %v3497
    %4563 = vst [vmem:[#allocation8 + $0x40] sm:$0xff] %v3502
    %4564 = vst [vmem:[#allocation8 + $0x48] sm:$0xff] %v3507
    %4565 = vst [vmem:[#allocation8 + $0x50] sm:$0xff] %v3512
    %4566 = vst [vmem:[#allocation8 + $0x58] sm:$0xff] %v3517
    %4567 = vst [vmem:[#allocation8 + $0x60] sm:$0xff] %v3522
    %4568 = vst [vmem:[#allocation8 + $0x68] sm:$0xff] %v3527
    %4569 = vst [vmem:[#allocation8 + $0x70] sm:$0xff] %v3532
    %4570 = vst [vmem:[#allocation8 + $0x78] sm:$0xff] %v3537
    %4571 = vst [vmem:[#allocation8 + $0x80] sm:$0xff] %v3607
    %4572 = vst [vmem:[#allocation8 + $0x88] sm:$0xff] %v3612
    %4573 = vst [vmem:[#allocation8 + $0x90] sm:$0xff] %v3617
    %4574 = vst [vmem:[#allocation8 + $0x98] sm:$0xff] %v3622
    %4575 = vst [vmem:[#allocation8 + $0xa0] sm:$0xff] %v3627
    %4576 = vst [vmem:[#allocation8 + $0xa8] sm:$0xff] %v3632
    %4577 = vst [vmem:[#allocation8 + $0xb0] sm:$0xff] %v3637
    %4578 = vst [vmem:[#allocation8 + $0xb8] sm:$0xff] %v3642
    %4579 = vst [vmem:[#allocation8 + $0xc0] sm:$0xff] %v3647
    %4580 = vst [vmem:[#allocation8 + $0xc8] sm:$0xff] %v3652
    %4581 = vst [vmem:[#allocation8 + $0xd0] sm:$0xff] %v3657
    %4582 = vst [vmem:[#allocation8 + $0xd8] sm:$0xff] %v3662
    %4583 = vst [vmem:[#allocation8 + $0xe0] sm:$0xff] %v3667
    %4584 = vst [vmem:[#allocation8 + $0xe8] sm:$0xff] %v3672
    %4585 = vst [vmem:[#allocation8 + $0xf0] sm:$0xff] %v3677
    %4586 = vst [vmem:[#allocation8 + $0xf8] sm:$0xff] %v3682
    %4587 = vst [vmem:[#allocation8 + $0x100] sm:$0xff] %v3752
    %4588 = vst [vmem:[#allocation8 + $0x108] sm:$0xff] %v3757
    %4589 = vst [vmem:[#allocation8 + $0x110] sm:$0xff] %v3762
    %4590 = vst [vmem:[#allocation8 + $0x118] sm:$0xff] %v3767
    %4591 = vst [vmem:[#allocation8 + $0x120] sm:$0xff] %v3772
    %4592 = vst [vmem:[#allocation8 + $0x128] sm:$0xff] %v3777
    %4593 = vst [vmem:[#allocation8 + $0x130] sm:$0xff] %v3782
    %4594 = vst [vmem:[#allocation8 + $0x138] sm:$0xff] %v3787
    %4595 = vst [vmem:[#allocation8 + $0x140] sm:$0xff] %v3792
    %4596 = vst [vmem:[#allocation8 + $0x148] sm:$0xff] %v3797
    %4597 = vst [vmem:[#allocation8 + $0x150] sm:$0xff] %v3802
    %4598 = vst [vmem:[#allocation8 + $0x158] sm:$0xff] %v3807
    %4599 = vst [vmem:[#allocation8 + $0x160] sm:$0xff] %v3812
    %4600 = vst [vmem:[#allocation8 + $0x168] sm:$0xff] %v3817
    %4601 = vst [vmem:[#allocation8 + $0x170] sm:$0xff] %v3822
    %4602 = vst [vmem:[#allocation8 + $0x178] sm:$0xff] %v3827
    %4603 = vst [vmem:[#allocation8 + $0x180] sm:$0xff] %v3897
    %4604 = vst [vmem:[#allocation8 + $0x188] sm:$0xff] %v3902
    %4605 = vst [vmem:[#allocation8 + $0x190] sm:$0xff] %v3907
    %4606 = vst [vmem:[#allocation8 + $0x198] sm:$0xff] %v3912
    %4607 = vst [vmem:[#allocation8 + $0x1a0] sm:$0xff] %v3917
    %4608 = vst [vmem:[#allocation8 + $0x1a8] sm:$0xff] %v3922
    %4609 = vst [vmem:[#allocation8 + $0x1b0] sm:$0xff] %v3927
    %4610 = vst [vmem:[#allocation8 + $0x1b8] sm:$0xff] %v3932
    %4611 = vst [vmem:[#allocation8 + $0x1c0] sm:$0xff] %v3937
    %4612 = vst [vmem:[#allocation8 + $0x1c8] sm:$0xff] %v3942
    %4613 = vst [vmem:[#allocation8 + $0x1d0] sm:$0xff] %v3947
    %4614 = vst [vmem:[#allocation8 + $0x1d8] sm:$0xff] %v3952
    %4615 = vst [vmem:[#allocation8 + $0x1e0] sm:$0xff] %v3957
    %4616 = vst [vmem:[#allocation8 + $0x1e8] sm:$0xff] %v3962
    %4617 = vst [vmem:[#allocation8 + $0x1f0] sm:$0xff] %v3967
    %4618 = vst [vmem:[#allocation8 + $0x1f8] sm:$0xff] %v3972
    %4619 = vst [vmem:[#allocation8 + $0x200] sm:$0xff] %v4042
    %4620 = vst [vmem:[#allocation8 + $0x208] sm:$0xff] %v4047
    %4621 = vst [vmem:[#allocation8 + $0x210] sm:$0xff] %v4052
    %4622 = vst [vmem:[#allocation8 + $0x218] sm:$0xff] %v4057
    %4623 = vst [vmem:[#allocation8 + $0x220] sm:$0xff] %v4062
    %4624 = vst [vmem:[#allocation8 + $0x228] sm:$0xff] %v4067
    %4625 = vst [vmem:[#allocation8 + $0x230] sm:$0xff] %v4072
    %4626 = vst [vmem:[#allocation8 + $0x238] sm:$0xff] %v4077
    %4627 = vst [vmem:[#allocation8 + $0x240] sm:$0xff] %v4082
    %4628 = vst [vmem:[#allocation8 + $0x248] sm:$0xff] %v4087
    %4629 = vst [vmem:[#allocation8 + $0x250] sm:$0xff] %v4092
    %4630 = vst [vmem:[#allocation8 + $0x258] sm:$0xff] %v4097
    %4631 = vst [vmem:[#allocation8 + $0x260] sm:$0xff] %v4102
    %4632 = vst [vmem:[#allocation8 + $0x268] sm:$0xff] %v4107
    %4633 = vst [vmem:[#allocation8 + $0x270] sm:$0xff] %v4112
    %4634 = vst [vmem:[#allocation8 + $0x278] sm:$0xff] %v4117
    %4635 = vst [vmem:[#allocation8 + $0x280] sm:$0xff] %v4187
    %4636 = vst [vmem:[#allocation8 + $0x288] sm:$0xff] %v4192
    %4637 = vst [vmem:[#allocation8 + $0x290] sm:$0xff] %v4197
    %4638 = vst [vmem:[#allocation8 + $0x298] sm:$0xff] %v4202
    %4639 = vst [vmem:[#allocation8 + $0x2a0] sm:$0xff] %v4207
    %4640 = vst [vmem:[#allocation8 + $0x2a8] sm:$0xff] %v4212
    %4641 = vst [vmem:[#allocation8 + $0x2b0] sm:$0xff] %v4217
    %4642 = vst [vmem:[#allocation8 + $0x2b8] sm:$0xff] %v4222
    %4643 = vst [vmem:[#allocation8 + $0x2c0] sm:$0xff] %v4227
    %4644 = vst [vmem:[#allocation8 + $0x2c8] sm:$0xff] %v4232
    %4645 = vst [vmem:[#allocation8 + $0x2d0] sm:$0xff] %v4237
    %4646 = vst [vmem:[#allocation8 + $0x2d8] sm:$0xff] %v4242
    %4647 = vst [vmem:[#allocation8 + $0x2e0] sm:$0xff] %v4247
    %4648 = vst [vmem:[#allocation8 + $0x2e8] sm:$0xff] %v4252
    %4649 = vst [vmem:[#allocation8 + $0x2f0] sm:$0xff] %v4257
    %4650 = vst [vmem:[#allocation8 + $0x2f8] sm:$0xff] %v4262
    %4651 = vst [vmem:[#allocation8 + $0x300] sm:$0xff] %v4332
    %4652 = vst [vmem:[#allocation8 + $0x308] sm:$0xff] %v4337
    %4653 = vst [vmem:[#allocation8 + $0x310] sm:$0xff] %v4342
    %4654 = vst [vmem:[#allocation8 + $0x318] sm:$0xff] %v4347
    %4655 = vst [vmem:[#allocation8 + $0x320] sm:$0xff] %v4352
    %4656 = vst [vmem:[#allocation8 + $0x328] sm:$0xff] %v4357
    %4657 = vst [vmem:[#allocation8 + $0x330] sm:$0xff] %v4362
    %4658 = vst [vmem:[#allocation8 + $0x338] sm:$0xff] %v4367
    %4659 = vst [vmem:[#allocation8 + $0x340] sm:$0xff] %v4372
    %4660 = vst [vmem:[#allocation8 + $0x348] sm:$0xff] %v4377
    %4661 = vst [vmem:[#allocation8 + $0x350] sm:$0xff] %v4382
    %4662 = vst [vmem:[#allocation8 + $0x358] sm:$0xff] %v4387
    %4663 = vst [vmem:[#allocation8 + $0x360] sm:$0xff] %v4392
    %4664 = vst [vmem:[#allocation8 + $0x368] sm:$0xff] %v4397
    %4665 = vst [vmem:[#allocation8 + $0x370] sm:$0xff] %v4402
    %4666 = vst [vmem:[#allocation8 + $0x378] sm:$0xff] %v4407
    %4667 = vst [vmem:[#allocation8 + $0x380] sm:$0xff] %v4477
    %4668 = vst [vmem:[#allocation8 + $0x388] sm:$0xff] %v4482
    %4669 = vst [vmem:[#allocation8 + $0x390] sm:$0xff] %v4487
    %4670 = vst [vmem:[#allocation8 + $0x398] sm:$0xff] %v4492
    %4671 = vst [vmem:[#allocation8 + $0x3a0] sm:$0xff] %v4497
    %4672 = vst [vmem:[#allocation8 + $0x3a8] sm:$0xff] %v4502
    %4673 = vst [vmem:[#allocation8 + $0x3b0] sm:$0xff] %v4507
    %4674 = vst [vmem:[#allocation8 + $0x3b8] sm:$0xff] %v4512
    %4675 = vst [vmem:[#allocation8 + $0x3c0] sm:$0xff] %v4517
    %4676 = vst [vmem:[#allocation8 + $0x3c8] sm:$0xff] %v4522
    %4677 = vst [vmem:[#allocation8 + $0x3d0] sm:$0xff] %v4527
    %4678 = vst [vmem:[#allocation8 + $0x3d8] sm:$0xff] %v4532
    %4679 = vst [vmem:[#allocation8 + $0x3e0] sm:$0xff] %v4537
    %4680 = vst [vmem:[#allocation8 + $0x3e8] sm:$0xff] %v4542
    %4681 = vst [vmem:[#allocation8 + $0x3f0] sm:$0xff] %v4547
    %4682 = vst [vmem:[#allocation8 + $0x3f8] sm:$0xff] %v4552
    // Predicated region
    $region26: #{tpu_custom_call.1} parent=1 // pred_check
      _
    $region27: #{tpu_custom_call.1} parent=1 // pred_check_branch
      %4684 = sbr.rel (0) target = $region29
    $region28: #{tpu_custom_call.1} parent=1 // pred_region
      %s4686 = ssub.s32 16384, 16384
      %4687 = vsyncadd [#allocation4], %s4686
      %s4688 = sshll.u32 [#allocation8], 4
      %s4689 = int_to_ptr.vmem [resolvable:$true] %s4688
      %4694 = dma.vmem_to_hbm [thread:$0]  %s4689, 16384, %s3, [#allocation4], 128, 128, 8
    $region29: #{tpu_custom_call.1} parent=1 // pred_fallthru
      _
    // Predicated region
    $region30: #{tpu_custom_call.1} parent=1 // pred_check
      _
    $region31: #{tpu_custom_call.1} parent=1 // pred_check_branch
      %4696 = sbr.rel (0) target = $region33
    $region32: #{tpu_custom_call.1} parent=1 // pred_region
      %s4698 = ssub.s32 16384, 16384
      %4699 = vsyncadd [#allocation10], %s4698
      %s4700 = sshll.u32 [#allocation9], 4
      %s4701 = int_to_ptr.vmem [resolvable:$true] %s4700
      %4706 = dma.vmem_to_hbm [thread:$0]  %s4701, 16384, %s4, [#allocation10], 128, 128, 8
    $region33: #{tpu_custom_call.1} parent=1 // pred_fallthru
      _
    // Predicated region
    $region34: #{tpu_custom_call.1} parent=1 // pred_check
      _
    $region35: #{tpu_custom_call.1} parent=1 // pred_check_branch
      %4708 = sbr.rel (0) target = $region37
    $region36: #{tpu_custom_call.1} parent=1 // pred_region
      %4709 = dma.done [#allocation4], 16384
    $region37: #{tpu_custom_call.1} parent=1 // pred_fallthru
      _
    // Predicated region
    $region38: #{tpu_custom_call.1} parent=1 // pred_check
      _
    $region39: #{tpu_custom_call.1} parent=1 // pred_check_branch
      %4711 = sbr.rel (0) target = $region41
    $region40: #{tpu_custom_call.1} parent=1 // pred_region
      %4712 = dma.done [#allocation10], 16384
    $region41: #{tpu_custom_call.1} parent=1 // pred_fallthru
      _
    %4713 = vsyncpa [#allocation3], 1
    %4714 = vsyncpa [#allocation6], 1
    %4715 = vsyncpa [#allocation4], 1
    %4716 = vsyncpa [#allocation10], 1

</llo_original>
